<compile_context>
chip_gen: v7x
topology: tpu7x:2x2x1
jax: 0.10.0
libtpu: 0.0.40
codegen_flags: <defaults>
</compile_context>

<pallas_src>
import functools

import jax
import jax.numpy as jnp
from jax.experimental import pallas as pl
from jax.experimental.pallas import tpu as pltpu


def _layernorm(v, w, b, eps=1e-5):
    # PyTorch nn.LayerNorm: biased variance over the last dim, f32 throughout.
    mu = jnp.mean(v, axis=-1, keepdims=True)
    var = jnp.mean((v - mu) ** 2, axis=-1, keepdims=True)
    return (v - mu) * jax.lax.rsqrt(var + eps) * w + b


def _transformer_block_kernel(
    x_ref,
    ln1w_ref, ln1b_ref,
    qkvw_ref, qkvb_ref,
    projw_ref, projb_ref,
    ln2w_ref, ln2b_ref,
    fc1w_ref, fc1b_ref,
    fc2w_ref, fc2b_ref,
    out_ref,
    *, num_heads,
):
    bt, n, c = x_ref.shape
    r = bt * n                              # flattened row count fed to the MXU
    hd = c // num_heads
    bf16 = jnp.bfloat16

    # Flatten the batch block to a (R, C) row slab: all dense layers, LN and
    # residuals run on R rows (MXU row fill), only attention re-blocks per
    # sample so tokens never attend across batch elements.
    x = x_ref[...].reshape(r, c)                                        # f32

    # ---------------- attention branch ----------------
    h = _layernorm(x, ln1w_ref[...], ln1b_ref[...])                     # f32
    qkv = jnp.dot(h.astype(bf16), qkvw_ref[...],
                  preferred_element_type=jnp.float32) + qkvb_ref[...]   # (R, 3C) f32
    # 1/sqrt(head_dim) is already folded into the q columns of qkvw/qkvb.

    def heads(t):
        # (R, C) -> (Bt*H, N, hd): lane-aligned C-wide slice, leading-dim-only
        # relayout (minor dim unchanged), heads grouped per batch sample.
        return (t.reshape(bt, n, num_heads, hd)
                 .transpose(0, 2, 1, 3)
                 .reshape(bt * num_heads, n, hd)
                 .astype(bf16))

    q = heads(qkv[:, :c])
    k = heads(qkv[:, c:2 * c])
    v = heads(qkv[:, 2 * c:])

    # One batched dot_general per stage over G = Bt*H heads.
    s = jnp.einsum("gqd,gkd->gqk", q, k,
                   preferred_element_type=jnp.float32)                  # (G, N, N) f32
    # TODO(synk): at real ViT sequence lengths (N=197/577) pad N to a multiple
    # of 128 (with a softmax mask) so the score tile is lane-dense.
    s = s - jnp.max(s, axis=-1, keepdims=True)                          # stable softmax
    p = jnp.exp(s)
    p = p * pl.reciprocal(jnp.sum(p, axis=-1, keepdims=True), approx=True)

    o = jnp.einsum("gqk,gkd->gqd", p.astype(bf16), v,
                   preferred_element_type=jnp.float32)                  # (G, N, hd)

    # Merge heads back into the lane dim (torch head order); the proj matmul
    # then contracts over the full C depth on the (R, C) slab.
    attn = (o.reshape(bt, num_heads, n, hd)
             .transpose(0, 2, 1, 3)
             .reshape(r, c))
    attn = jnp.dot(attn.astype(bf16), projw_ref[...],
                   preferred_element_type=jnp.float32) + projb_ref[...]
    x1 = x + attn                                                       # residual 1 (f32)

    # ---------------- MLP branch ----------------
    h2 = _layernorm(x1, ln2w_ref[...], ln2b_ref[...])
    mid = jnp.dot(h2.astype(bf16), fc1w_ref[...],
                  preferred_element_type=jnp.float32) + fc1b_ref[...]   # (R, 4C)
    # exact (erf-based) GELU in f32, matching PyTorch nn.GELU() default.
    mid = 0.5 * mid * (1.0 + jax.lax.erf(mid * (2.0 ** -0.5)))
    mlp = jnp.dot(mid.astype(bf16), fc2w_ref[...],
                  preferred_element_type=jnp.float32) + fc2b_ref[...]

    out_ref[...] = (x1 + mlp).reshape(bt, n, c)                         # residual 2


def _pick_block_batch(B, N, target_rows=256):
    """Batch-block size Bt.

    Primary goal (review item 1): feed the MXU >= target_rows rows per matmul
    (256 fills the 2x256^2 v6e/v7x MXU; also >= 128 for v5e).  Secondary goal
    (v7x megacore): keep >= 2 parallel grid steps, but only when that does not
    drop the per-step row count below target_rows.
    """
    bt = max(1, min(B, pl.cdiv(target_rows, N)))
    while bt > 1 and B % bt:                 # Bt must divide B
        bt -= 1
    if B >= 2 and B // bt < 2:
        for cand in range(bt - 1, 0, -1):    # split for 2 TCs only if rows stay full
            if B % cand == 0 and cand * N >= target_rows:
                bt = cand
                break
    return bt


def _vmem_cap_bytes():
    # Never request the full physical VMEM (on v7x that is only 64 MiB per
    # TensorCore): leave ~25% for the double-buffered activation blocks and
    # compiler-internal scratch.  Falls back to a v7x-safe 48 MiB cap if the
    # hardware query is unavailable.
    try:
        phys = int(pltpu.get_tpu_info().vmem_capacity_bytes)
    except Exception:
        phys = 64 * 1024 * 1024
    return (phys // 4) * 3


def _vmem_limit_bytes(Bt, N, C, H, num_heads):
    R = Bt * N
    weights = 2 * (C * 3 * C + C * C + C * H + H * C)       # bf16 weights, single copy
    small = 4 * (3 * C + C + H + C + 4 * C)                  # f32 biases + LN params
    acts = 4 * (R * 3 * C                                    # qkv (f32)
                + 2 * num_heads * R * N                      # scores + probs (f32)
                + 3 * R * C                                  # o / merged attn / x1
                + 2 * R * H                                  # fc1 out + GELU
                + 3 * R * C)                                 # h, h2, out
    io = 2 * 2 * R * C * 4                                   # double-buffered x/out blocks
    need = weights + small + 2 * acts + io                   # 2x headroom for relayouts
    # Raise v5e's 16 MiB default scoped limit; stay below 75% of physical VMEM.
    # TODO(synk): at ViT-L/H scale on v7x, tile the MLP hidden dim (extra
    # "arbitrary" grid axis + fc2 f32 accumulator) instead of keeping fc1+fc2
    # fully resident.
    return int(min(_vmem_cap_bytes(), max(32 * 1024 * 1024, need)))


def transformer_block(x, params, *, num_heads):
    """x: (B, N, C) float32. params: dict of already-transposed f32 weights."""
    B, N, C = x.shape
    H = params["fc1_w"].shape[1]
    hd = C // num_heads
    bf16 = jnp.bfloat16

    Bt = _pick_block_batch(B, N)
    grid = (B // Bt,)

    # Fold the 1/sqrt(head_dim) attention scale into the q columns of the qkv
    # projection (host-side, one-time, before the bf16 cast).
    scale = hd ** (-0.5)
    col_scale = jnp.concatenate(
        [jnp.full((C,), scale, jnp.float32), jnp.ones((2 * C,), jnp.float32)])
    qkv_w = (params["qkv_w"] * col_scale[None, :]).astype(bf16)
    qkv_b = params["qkv_b"] * col_scale[None, :]

    # Weights / biases: whole-array VMEM residents.  Because they carry no
    # block_shape/index_map they bypass the BlockSpec pipeline entirely, i.e.
    # a single resident copy (no 2-deep double-buffering of the weights).
    # TODO(synk): for a multi-layer model, prefetch the next layer's weights
    # via a cross-pallas_call DMA future so the HBM->VMEM weight load is hidden.
    wspec = pl.BlockSpec(memory_space=pltpu.MemorySpace.VMEM)

    in_specs = [pl.BlockSpec((Bt, N, C), lambda b: (b, 0, 0))] + [wspec] * 12

    kernel = functools.partial(_transformer_block_kernel, num_heads=num_heads)

    return pl.pallas_call(
        kernel,
        out_shape=jax.ShapeDtypeStruct((B, N, C), x.dtype),
        grid=grid,
        in_specs=in_specs,
        out_specs=pl.BlockSpec((Bt, N, C), lambda b: (b, 0, 0)),
        compiler_params=pltpu.CompilerParams(
            dimension_semantics=("parallel",),
            vmem_limit_bytes=_vmem_limit_bytes(Bt, N, C, H, num_heads)),
    )(
        x,
        params["ln1_w"], params["ln1_b"],
        qkv_w, qkv_b,
        params["proj_w"].astype(bf16), params["proj_b"],
        params["ln2_w"], params["ln2_b"],
        params["fc1_w"].astype(bf16), params["fc1_b"],
        params["fc2_w"].astype(bf16), params["fc2_b"],
    )


# ---------------- pure-JAX f32 reference (mirrors the PyTorch forward) -------
def reference_block(x, params, *, num_heads):
    B, N, C = x.shape
    hd = C // num_heads
    scale = hd ** (-0.5)

    def ln(v, w, b):
        mu = jnp.mean(v, axis=-1, keepdims=True)
        var = jnp.mean((v - mu) ** 2, axis=-1, keepdims=True)
        return (v - mu) / jnp.sqrt(var + 1e-5) * w + b

    h = ln(x, params["ln1_w"], params["ln1_b"])
    qkv = h @ params["qkv_w"] + params["qkv_b"]
    qkv = qkv.reshape(B, N, 3, num_heads, hd).transpose(2, 0, 3, 1, 4)
    q, k, v = qkv[0], qkv[1], qkv[2]
    attn = jax.nn.softmax(jnp.einsum("bhnd,bhmd->bhnm", q, k) * scale, axis=-1)
    o = jnp.einsum("bhnm,bhmd->bhnd", attn, v).transpose(0, 2, 1, 3).reshape(B, N, C)
    o = o @ params["proj_w"] + params["proj_b"]
    x1 = x + o
    h2 = ln(x1, params["ln2_w"], params["ln2_b"])
    mid = h2 @ params["fc1_w"] + params["fc1_b"]
    mid = 0.5 * mid * (1.0 + jax.lax.erf(mid * (2.0 ** -0.5)))
    return x1 + mid @ params["fc2_w"] + params["fc2_b"]


def init_params(key, dim, hidden):
    ks = jax.random.split(key, 12)
    nrm = lambda k, s, sc=0.02: (sc * jax.random.normal(k, s)).astype(jnp.float32)
    return {
        "ln1_w": (1.0 + nrm(ks[0], (1, dim), 0.01)),
        "ln1_b": nrm(ks[1], (1, dim), 0.01),
        # linear weights stored as (in, out) == PyTorch weight.T
        "qkv_w": nrm(ks[2], (dim, 3 * dim)),
        "qkv_b": nrm(ks[3], (1, 3 * dim), 0.01),
        "proj_w": nrm(ks[4], (dim, dim)),
        "proj_b": nrm(ks[5], (1, dim), 0.01),
        "ln2_w": (1.0 + nrm(ks[6], (1, dim), 0.01)),
        "ln2_b": nrm(ks[7], (1, dim), 0.01),
        "fc1_w": nrm(ks[8], (dim, hidden)),
        "fc1_b": nrm(ks[9], (1, hidden), 0.01),
        "fc2_w": nrm(ks[10], (hidden, dim)),
        "fc2_b": nrm(ks[11], (1, dim), 0.01),
    }


if __name__ == "__main__":
    # Small but lane/sublane-aligned shapes: C multiple of 128, N multiple of 8.
    # The batch-block heuristic flattens all B*N rows into one grid step here
    # (32 MXU rows per matmul instead of 16); at realistic B it both fills the
    # MXU (>=256 rows) and leaves >=2 parallel steps for the v7x TensorCores.
    B, N, C, NUM_HEADS = 2, 16, 128, 4
    key = jax.random.PRNGKey(0)
    kx, kp = jax.random.split(key)

    x = jax.random.normal(kx, (B, N, C), dtype=jnp.float32)
    params = init_params(kp, C, 4 * C)

    out = transformer_block(x, params, num_heads=NUM_HEADS)
    out = jax.block_until_ready(out)

    ref = reference_block(x, params, num_heads=NUM_HEADS)
    assert out.shape == (B, N, C)
    # bf16 matmul inputs (f32 accumulate) + approx reciprocal -> slightly looser
    # tolerance vs the pure-f32 reference.
    assert jnp.allclose(out, ref, atol=2e-2, rtol=2e-2), (
        float(jnp.max(jnp.abs(out - ref))))

    print("KERNEL_OK")
</pallas_src>

<mosaic_0001>
module attributes {stable_mosaic.version = 11 : i64} {
  func.func @_transformer_block_kernel(%arg0: i32, %arg1: memref<2x16x128xf32, #tpu.memory_space<vmem>>, %arg2: memref<1x128xf32, #tpu.memory_space<vmem>>, %arg3: memref<1x128xf32, #tpu.memory_space<vmem>>, %arg4: memref<128x384xbf16, #tpu.memory_space<vmem>>, %arg5: memref<1x384xf32, #tpu.memory_space<vmem>>, %arg6: memref<128x128xbf16, #tpu.memory_space<vmem>>, %arg7: memref<1x128xf32, #tpu.memory_space<vmem>>, %arg8: memref<1x128xf32, #tpu.memory_space<vmem>>, %arg9: memref<1x128xf32, #tpu.memory_space<vmem>>, %arg10: memref<128x512xbf16, #tpu.memory_space<vmem>>, %arg11: memref<1x512xf32, #tpu.memory_space<vmem>>, %arg12: memref<512x128xbf16, #tpu.memory_space<vmem>>, %arg13: memref<1x128xf32, #tpu.memory_space<vmem>>, %arg14: memref<2x16x128xf32, #tpu.memory_space<vmem>>) attributes {dimension_semantics = [#tpu.dimension_semantics<parallel>], iteration_bounds = array<i64: 1>, scalar_prefetch = 0 : i64, scratch_operands = 0 : i64, tpu.core_type = #tpu.core_type<tc>, window_params = [{transform_indices = @transform_0, window_bounds = array<i64: 2, 16, 128>}, {pipeline_mode = #tpu.pipeline_mode<synchronous>, transform_indices = @transform_1, window_bounds = array<i64: 1, 128>}, {pipeline_mode = #tpu.pipeline_mode<synchronous>, transform_indices = @transform_2, window_bounds = array<i64: 1, 128>}, {pipeline_mode = #tpu.pipeline_mode<synchronous>, transform_indices = @transform_3, window_bounds = array<i64: 128, 384>}, {pipeline_mode = #tpu.pipeline_mode<synchronous>, transform_indices = @transform_4, window_bounds = array<i64: 1, 384>}, {pipeline_mode = #tpu.pipeline_mode<synchronous>, transform_indices = @transform_5, window_bounds = array<i64: 128, 128>}, {pipeline_mode = #tpu.pipeline_mode<synchronous>, transform_indices = @transform_6, window_bounds = array<i64: 1, 128>}, {pipeline_mode = #tpu.pipeline_mode<synchronous>, transform_indices = @transform_7, window_bounds = array<i64: 1, 128>}, {pipeline_mode = #tpu.pipeline_mode<synchronous>, transform_indices = @transform_8, window_bounds = array<i64: 1, 128>}, {pipeline_mode = #tpu.pipeline_mode<synchronous>, transform_indices = @transform_9, window_bounds = array<i64: 128, 512>}, {pipeline_mode = #tpu.pipeline_mode<synchronous>, transform_indices = @transform_10, window_bounds = array<i64: 1, 512>}, {pipeline_mode = #tpu.pipeline_mode<synchronous>, transform_indices = @transform_11, window_bounds = array<i64: 512, 128>}, {pipeline_mode = #tpu.pipeline_mode<synchronous>, transform_indices = @transform_12, window_bounds = array<i64: 1, 128>}, {transform_indices = @transform_13, window_bounds = array<i64: 2, 16, 128>}]} {
    %c0 = arith.constant 0 : index
    %c0_0 = arith.constant 0 : index
    %c0_1 = arith.constant 0 : index
    %0 = vector.load %arg1[%c0, %c0_0, %c0_1] : memref<2x16x128xf32, #tpu.memory_space<vmem>>, vector<2x16x128xf32>
    %1 = vector.shape_cast %0 : vector<2x16x128xf32> to vector<32x128xf32>
    %c0_2 = arith.constant 0 : index
    %c0_3 = arith.constant 0 : index
    %2 = vector.load %arg2[%c0_2, %c0_3] : memref<1x128xf32, #tpu.memory_space<vmem>>, vector<1x128xf32>
    %c0_4 = arith.constant 0 : index
    %c0_5 = arith.constant 0 : index
    %3 = vector.load %arg3[%c0_4, %c0_5] : memref<1x128xf32, #tpu.memory_space<vmem>>, vector<1x128xf32>
    %cst = arith.constant dense<0.000000e+00> : vector<32xf32>
    %4 = vector.multi_reduction <add>, %1, %cst [1] : vector<32x128xf32> to vector<32xf32>
    %5 = vector.shape_cast %4 : vector<32xf32> to vector<32x1xf32>
    %cst_6 = arith.constant 1.280000e+02 : f32
    %6 = vector.broadcast %cst_6 : f32 to vector<32x1xf32>
    %7 = arith.divf %5, %6 : vector<32x1xf32>
    %8 = vector.broadcast %7 : vector<32x1xf32> to vector<32x128xf32>
    %9 = arith.subf %1, %8 : vector<32x128xf32>
    %10 = arith.mulf %9, %9 : vector<32x128xf32>
    %cst_7 = arith.constant dense<0.000000e+00> : vector<32xf32>
    %11 = vector.multi_reduction <add>, %10, %cst_7 [1] : vector<32x128xf32> to vector<32xf32>
    %12 = vector.shape_cast %11 : vector<32xf32> to vector<32x1xf32>
    %cst_8 = arith.constant 1.280000e+02 : f32
    %13 = vector.broadcast %cst_8 : f32 to vector<32x1xf32>
    %14 = arith.divf %12, %13 : vector<32x1xf32>
    %15 = vector.broadcast %7 : vector<32x1xf32> to vector<32x128xf32>
    %16 = arith.subf %1, %15 : vector<32x128xf32>
    %cst_9 = arith.constant 9.99999974E-6 : f32
    %17 = vector.broadcast %cst_9 : f32 to vector<32x1xf32>
    %18 = arith.addf %14, %17 : vector<32x1xf32>
    %19 = math.rsqrt %18 : vector<32x1xf32>
    %20 = vector.broadcast %19 : vector<32x1xf32> to vector<32x128xf32>
    %21 = arith.mulf %16, %20 : vector<32x128xf32>
    %22 = vector.broadcast %2 : vector<1x128xf32> to vector<32x128xf32>
    %23 = arith.mulf %21, %22 : vector<32x128xf32>
    %24 = vector.broadcast %3 : vector<1x128xf32> to vector<32x128xf32>
    %25 = arith.addf %23, %24 : vector<32x128xf32>
    %26 = arith.truncf %25 : vector<32x128xf32> to vector<32x128xbf16>
    %c0_10 = arith.constant 0 : index
    %c0_11 = arith.constant 0 : index
    %27 = vector.load %arg4[%c0_10, %c0_11] : memref<128x384xbf16, #tpu.memory_space<vmem>>, vector<128x384xbf16>
    %cst_12 = arith.constant dense<0.000000e+00> : vector<32x384xf32>
    %28 = tpu.matmul %26, %27, %cst_12 {dimension_numbers = #tpu.dot_dimension_numbers<[1], [0], [0], [1], [0, 0, 1, 1], [], []>} : vector<32x128xbf16>, vector<128x384xbf16>, vector<32x384xf32> -> vector<32x384xf32>
    %c0_13 = arith.constant 0 : index
    %c0_14 = arith.constant 0 : index
    %29 = vector.load %arg5[%c0_13, %c0_14] : memref<1x384xf32, #tpu.memory_space<vmem>>, vector<1x384xf32>
    %30 = vector.broadcast %29 : vector<1x384xf32> to vector<32x384xf32>
    %31 = arith.addf %28, %30 : vector<32x384xf32>
    %32 = vector.extract_strided_slice %31 {offsets = [0, 0], sizes = [32, 128], strides = [1, 1]} : vector<32x384xf32> to vector<32x128xf32>
    %33 = vector.shape_cast %32 : vector<32x128xf32> to vector<2x16x4x32xf32>
    %34 = tpu.transpose %33, [0, 2, 1, 3] : vector<2x16x4x32xf32> -> vector<2x4x16x32xf32>
    %35 = vector.shape_cast %34 : vector<2x4x16x32xf32> to vector<8x16x32xf32>
    %36 = arith.truncf %35 : vector<8x16x32xf32> to vector<8x16x32xbf16>
    %37 = vector.extract_strided_slice %31 {offsets = [0, 128], sizes = [32, 128], strides = [1, 1]} : vector<32x384xf32> to vector<32x128xf32>
    %38 = vector.shape_cast %37 : vector<32x128xf32> to vector<2x16x4x32xf32>
    %39 = tpu.transpose %38, [0, 2, 1, 3] : vector<2x16x4x32xf32> -> vector<2x4x16x32xf32>
    %40 = vector.shape_cast %39 : vector<2x4x16x32xf32> to vector<8x16x32xf32>
    %41 = arith.truncf %40 : vector<8x16x32xf32> to vector<8x16x32xbf16>
    %42 = vector.extract_strided_slice %31 {offsets = [0, 256], sizes = [32, 128], strides = [1, 1]} : vector<32x384xf32> to vector<32x128xf32>
    %43 = vector.shape_cast %42 : vector<32x128xf32> to vector<2x16x4x32xf32>
    %44 = tpu.transpose %43, [0, 2, 1, 3] : vector<2x16x4x32xf32> -> vector<2x4x16x32xf32>
    %45 = vector.shape_cast %44 : vector<2x4x16x32xf32> to vector<8x16x32xf32>
    %46 = arith.truncf %45 : vector<8x16x32xf32> to vector<8x16x32xbf16>
    "tpu.trace_start"() <{level = 10 : i32, message = "gqd,gkd->gqk"}> : () -> ()
    %cst_15 = arith.constant dense<0.000000e+00> : vector<8x16x16xf32>
    %47 = tpu.matmul %36, %41, %cst_15 {dimension_numbers = #tpu.dot_dimension_numbers<[2], [2], [1], [1], [0, 0, 0, 1, 1, 1], [0], [0]>} : vector<8x16x32xbf16>, vector<8x16x32xbf16>, vector<8x16x16xf32> -> vector<8x16x16xf32>
    "tpu.trace_stop"() : () -> ()
    %cst_16 = arith.constant dense<0xFF800000> : vector<8x16xf32>
    %48 = vector.multi_reduction <maximumf>, %47, %cst_16 [2] : vector<8x16x16xf32> to vector<8x16xf32>
    %49 = vector.shape_cast %48 : vector<8x16xf32> to vector<8x16x1xf32>
    %50 = vector.broadcast %49 : vector<8x16x1xf32> to vector<8x16x16xf32>
    %51 = arith.subf %47, %50 : vector<8x16x16xf32>
    %52 = math.exp %51 : vector<8x16x16xf32>
    %cst_17 = arith.constant dense<0.000000e+00> : vector<8x16xf32>
    %53 = vector.multi_reduction <add>, %52, %cst_17 [2] : vector<8x16x16xf32> to vector<8x16xf32>
    %54 = vector.shape_cast %53 : vector<8x16xf32> to vector<8x16x1xf32>
    %55 = tpu.reciprocal %54 {approx = true} : vector<8x16x1xf32> -> vector<8x16x1xf32>
    %56 = vector.broadcast %55 : vector<8x16x1xf32> to vector<8x16x16xf32>
    %57 = arith.mulf %52, %56 : vector<8x16x16xf32>
    %58 = arith.truncf %57 : vector<8x16x16xf32> to vector<8x16x16xbf16>
    "tpu.trace_start"() <{level = 10 : i32, message = "gqk,gkd->gqd"}> : () -> ()
    %cst_18 = arith.constant dense<0.000000e+00> : vector<8x16x32xf32>
    %59 = tpu.matmul %58, %46, %cst_18 {dimension_numbers = #tpu.dot_dimension_numbers<[2], [1], [1], [2], [0, 0, 0, 1, 1, 2], [0], [0]>} : vector<8x16x16xbf16>, vector<8x16x32xbf16>, vector<8x16x32xf32> -> vector<8x16x32xf32>
    "tpu.trace_stop"() : () -> ()
    %60 = vector.shape_cast %59 : vector<8x16x32xf32> to vector<2x4x16x32xf32>
    %61 = tpu.transpose %60, [0, 2, 1, 3] : vector<2x4x16x32xf32> -> vector<2x16x4x32xf32>
    %62 = vector.shape_cast %61 : vector<2x16x4x32xf32> to vector<32x128xf32>
    %63 = arith.truncf %62 : vector<32x128xf32> to vector<32x128xbf16>
    %c0_19 = arith.constant 0 : index
    %c0_20 = arith.constant 0 : index
    %64 = vector.load %arg6[%c0_19, %c0_20] : memref<128x128xbf16, #tpu.memory_space<vmem>>, vector<128x128xbf16>
    %cst_21 = arith.constant dense<0.000000e+00> : vector<32x128xf32>
    %65 = tpu.matmul %63, %64, %cst_21 {dimension_numbers = #tpu.dot_dimension_numbers<[1], [0], [0], [1], [0, 0, 1, 1], [], []>} : vector<32x128xbf16>, vector<128x128xbf16>, vector<32x128xf32> -> vector<32x128xf32>
    %c0_22 = arith.constant 0 : index
    %c0_23 = arith.constant 0 : index
    %66 = vector.load %arg7[%c0_22, %c0_23] : memref<1x128xf32, #tpu.memory_space<vmem>>, vector<1x128xf32>
    %67 = vector.broadcast %66 : vector<1x128xf32> to vector<32x128xf32>
    %68 = arith.addf %65, %67 : vector<32x128xf32>
    %69 = arith.addf %1, %68 : vector<32x128xf32>
    %c0_24 = arith.constant 0 : index
    %c0_25 = arith.constant 0 : index
    %70 = vector.load %arg8[%c0_24, %c0_25] : memref<1x128xf32, #tpu.memory_space<vmem>>, vector<1x128xf32>
    %c0_26 = arith.constant 0 : index
    %c0_27 = arith.constant 0 : index
    %71 = vector.load %arg9[%c0_26, %c0_27] : memref<1x128xf32, #tpu.memory_space<vmem>>, vector<1x128xf32>
    %cst_28 = arith.constant dense<0.000000e+00> : vector<32xf32>
    %72 = vector.multi_reduction <add>, %69, %cst_28 [1] : vector<32x128xf32> to vector<32xf32>
    %73 = vector.shape_cast %72 : vector<32xf32> to vector<32x1xf32>
    %cst_29 = arith.constant 1.280000e+02 : f32
    %74 = vector.broadcast %cst_29 : f32 to vector<32x1xf32>
    %75 = arith.divf %73, %74 : vector<32x1xf32>
    %76 = vector.broadcast %75 : vector<32x1xf32> to vector<32x128xf32>
    %77 = arith.subf %69, %76 : vector<32x128xf32>
    %78 = arith.mulf %77, %77 : vector<32x128xf32>
    %cst_30 = arith.constant dense<0.000000e+00> : vector<32xf32>
    %79 = vector.multi_reduction <add>, %78, %cst_30 [1] : vector<32x128xf32> to vector<32xf32>
    %80 = vector.shape_cast %79 : vector<32xf32> to vector<32x1xf32>
    %cst_31 = arith.constant 1.280000e+02 : f32
    %81 = vector.broadcast %cst_31 : f32 to vector<32x1xf32>
    %82 = arith.divf %80, %81 : vector<32x1xf32>
    %83 = vector.broadcast %75 : vector<32x1xf32> to vector<32x128xf32>
    %84 = arith.subf %69, %83 : vector<32x128xf32>
    %cst_32 = arith.constant 9.99999974E-6 : f32
    %85 = vector.broadcast %cst_32 : f32 to vector<32x1xf32>
    %86 = arith.addf %82, %85 : vector<32x1xf32>
    %87 = math.rsqrt %86 : vector<32x1xf32>
    %88 = vector.broadcast %87 : vector<32x1xf32> to vector<32x128xf32>
    %89 = arith.mulf %84, %88 : vector<32x128xf32>
    %90 = vector.broadcast %70 : vector<1x128xf32> to vector<32x128xf32>
    %91 = arith.mulf %89, %90 : vector<32x128xf32>
    %92 = vector.broadcast %71 : vector<1x128xf32> to vector<32x128xf32>
    %93 = arith.addf %91, %92 : vector<32x128xf32>
    %94 = arith.truncf %93 : vector<32x128xf32> to vector<32x128xbf16>
    %c0_33 = arith.constant 0 : index
    %c0_34 = arith.constant 0 : index
    %95 = vector.load %arg10[%c0_33, %c0_34] : memref<128x512xbf16, #tpu.memory_space<vmem>>, vector<128x512xbf16>
    %cst_35 = arith.constant dense<0.000000e+00> : vector<32x512xf32>
    %96 = tpu.matmul %94, %95, %cst_35 {dimension_numbers = #tpu.dot_dimension_numbers<[1], [0], [0], [1], [0, 0, 1, 1], [], []>} : vector<32x128xbf16>, vector<128x512xbf16>, vector<32x512xf32> -> vector<32x512xf32>
    %c0_36 = arith.constant 0 : index
    %c0_37 = arith.constant 0 : index
    %97 = vector.load %arg11[%c0_36, %c0_37] : memref<1x512xf32, #tpu.memory_space<vmem>>, vector<1x512xf32>
    %98 = vector.broadcast %97 : vector<1x512xf32> to vector<32x512xf32>
    %99 = arith.addf %96, %98 : vector<32x512xf32>
    %cst_38 = arith.constant 5.000000e-01 : f32
    %100 = vector.broadcast %cst_38 : f32 to vector<32x512xf32>
    %101 = arith.mulf %100, %99 : vector<32x512xf32>
    %cst_39 = arith.constant 0.707106769 : f32
    %102 = vector.broadcast %cst_39 : f32 to vector<32x512xf32>
    %103 = arith.mulf %99, %102 : vector<32x512xf32>
    %104 = math.erf %103 : vector<32x512xf32>
    %cst_40 = arith.constant 1.000000e+00 : f32
    %105 = vector.broadcast %cst_40 : f32 to vector<32x512xf32>
    %106 = arith.addf %105, %104 : vector<32x512xf32>
    %107 = arith.mulf %101, %106 : vector<32x512xf32>
    %108 = arith.truncf %107 : vector<32x512xf32> to vector<32x512xbf16>
    %c0_41 = arith.constant 0 : index
    %c0_42 = arith.constant 0 : index
    %109 = vector.load %arg12[%c0_41, %c0_42] : memref<512x128xbf16, #tpu.memory_space<vmem>>, vector<512x128xbf16>
    %cst_43 = arith.constant dense<0.000000e+00> : vector<32x128xf32>
    %110 = tpu.matmul %108, %109, %cst_43 {dimension_numbers = #tpu.dot_dimension_numbers<[1], [0], [0], [1], [0, 0, 1, 1], [], []>} : vector<32x512xbf16>, vector<512x128xbf16>, vector<32x128xf32> -> vector<32x128xf32>
    %c0_44 = arith.constant 0 : index
    %c0_45 = arith.constant 0 : index
    %111 = vector.load %arg13[%c0_44, %c0_45] : memref<1x128xf32, #tpu.memory_space<vmem>>, vector<1x128xf32>
    %112 = vector.broadcast %111 : vector<1x128xf32> to vector<32x128xf32>
    %113 = arith.addf %110, %112 : vector<32x128xf32>
    %114 = arith.addf %69, %113 : vector<32x128xf32>
    %115 = vector.shape_cast %114 : vector<32x128xf32> to vector<2x16x128xf32>
    %c0_46 = arith.constant 0 : index
    %c0_47 = arith.constant 0 : index
    %c0_48 = arith.constant 0 : index
    %116 = vector.load %arg14[%c0_46, %c0_47, %c0_48] : memref<2x16x128xf32, #tpu.memory_space<vmem>>, vector<2x16x128xf32>
    tpu.vector_store %arg14[%c0_46, %c0_47, %c0_48], %115 {strides = array<i32>} : memref<2x16x128xf32, #tpu.memory_space<vmem>>, vector<2x16x128xf32>,
    return
  }
  func.func @transform_0(%arg0: i32) -> (i32, i32, i32) {
    %c0_i32 = arith.constant 0 : i32
    %c0_i32_0 = arith.constant 0 : i32
    %c0_i32_1 = arith.constant 0 : i32
    return %arg0, %c0_i32, %c0_i32_0 : i32, i32, i32
  }
  func.func @transform_1(%arg0: i32) -> (i32, i32) {
    %c0_i32 = arith.constant 0 : i32
    %c0_i32_0 = arith.constant 0 : i32
    %c0_i32_1 = arith.constant 0 : i32
    return %c0_i32, %c0_i32_0 : i32, i32
  }
  func.func @transform_2(%arg0: i32) -> (i32, i32) {
    %c0_i32 = arith.constant 0 : i32
    %c0_i32_0 = arith.constant 0 : i32
    %c0_i32_1 = arith.constant 0 : i32
    return %c0_i32, %c0_i32_0 : i32, i32
  }
  func.func @transform_3(%arg0: i32) -> (i32, i32) {
    %c0_i32 = arith.constant 0 : i32
    %c0_i32_0 = arith.constant 0 : i32
    %c0_i32_1 = arith.constant 0 : i32
    return %c0_i32, %c0_i32_0 : i32, i32
  }
  func.func @transform_4(%arg0: i32) -> (i32, i32) {
    %c0_i32 = arith.constant 0 : i32
    %c0_i32_0 = arith.constant 0 : i32
    %c0_i32_1 = arith.constant 0 : i32
    return %c0_i32, %c0_i32_0 : i32, i32
  }
  func.func @transform_5(%arg0: i32) -> (i32, i32) {
    %c0_i32 = arith.constant 0 : i32
    %c0_i32_0 = arith.constant 0 : i32
    %c0_i32_1 = arith.constant 0 : i32
    return %c0_i32, %c0_i32_0 : i32, i32
  }
  func.func @transform_6(%arg0: i32) -> (i32, i32) {
    %c0_i32 = arith.constant 0 : i32
    %c0_i32_0 = arith.constant 0 : i32
    %c0_i32_1 = arith.constant 0 : i32
    return %c0_i32, %c0_i32_0 : i32, i32
  }
  func.func @transform_7(%arg0: i32) -> (i32, i32) {
    %c0_i32 = arith.constant 0 : i32
    %c0_i32_0 = arith.constant 0 : i32
    %c0_i32_1 = arith.constant 0 : i32
    return %c0_i32, %c0_i32_0 : i32, i32
  }
  func.func @transform_8(%arg0: i32) -> (i32, i32) {
    %c0_i32 = arith.constant 0 : i32
    %c0_i32_0 = arith.constant 0 : i32
    %c0_i32_1 = arith.constant 0 : i32
    return %c0_i32, %c0_i32_0 : i32, i32
  }
  func.func @transform_9(%arg0: i32) -> (i32, i32) {
    %c0_i32 = arith.constant 0 : i32
    %c0_i32_0 = arith.constant 0 : i32
    %c0_i32_1 = arith.constant 0 : i32
    return %c0_i32, %c0_i32_0 : i32, i32
  }
  func.func @transform_10(%arg0: i32) -> (i32, i32) {
    %c0_i32 = arith.constant 0 : i32
    %c0_i32_0 = arith.constant 0 : i32
    %c0_i32_1 = arith.constant 0 : i32
    return %c0_i32, %c0_i32_0 : i32, i32
  }
  func.func @transform_11(%arg0: i32) -> (i32, i32) {
    %c0_i32 = arith.constant 0 : i32
    %c0_i32_0 = arith.constant 0 : i32
    %c0_i32_1 = arith.constant 0 : i32
    return %c0_i32, %c0_i32_0 : i32, i32
  }
  func.func @transform_12(%arg0: i32) -> (i32, i32) {
    %c0_i32 = arith.constant 0 : i32
    %c0_i32_0 = arith.constant 0 : i32
    %c0_i32_1 = arith.constant 0 : i32
    return %c0_i32, %c0_i32_0 : i32, i32
  }
  func.func @transform_13(%arg0: i32) -> (i32, i32, i32) {
    %c0_i32 = arith.constant 0 : i32
    %c0_i32_0 = arith.constant 0 : i32
    %c0_i32_1 = arith.constant 0 : i32
    return %arg0, %c0_i32, %c0_i32_0 : i32, i32, i32
  }
}

</mosaic_0001>

<llo_original>
// kernel: tpu_custom_call.1
$region0: #{tpu_custom_call.1}
  #allocation0 [shape = 'u32[]', space=smem, size = 0x4, offset = 0x4, fixed_abs, tag = 'smem constant byte address 0x4 - core index']
  #allocation1 [shape = 'u32[144,128]{1,0:T(1,128)}', space=vmem, size = 0x12000, scoped, tag = 'internal scratch']
  %s0 = inlined_call_operand.hbm [shape: f32[2,16,128], index: 0, kind: input, shape index: {}]
  %s1 = inlined_call_operand.hbm [shape: f32[1,128], index: 1, kind: input, shape index: {}]
  %s2 = inlined_call_operand.hbm [shape: f32[1,128], index: 2, kind: input, shape index: {}]
  %s3 = inlined_call_operand.hbm [shape: bf16[128,384], index: 3, kind: input, shape index: {}]
  %s4 = inlined_call_operand.vmem [shape: f32[1,384], index: 4, kind: input, shape index: {}]
  %s5 = inlined_call_operand.hbm [shape: bf16[128,128], index: 5, kind: input, shape index: {}]
  %s6 = inlined_call_operand.vmem [shape: f32[1,128], index: 6, kind: input, shape index: {}]
  %s7 = inlined_call_operand.vmem [shape: f32[1,128], index: 7, kind: input, shape index: {}]
  %s8 = inlined_call_operand.vmem [shape: f32[1,128], index: 8, kind: input, shape index: {}]
  %s9 = inlined_call_operand.hbm [shape: bf16[128,512], index: 9, kind: input, shape index: {}]
  %s10 = inlined_call_operand.vmem [shape: f32[1,512], index: 10, kind: input, shape index: {}]
  %s11 = inlined_call_operand.hbm [shape: bf16[512,128], index: 11, kind: input, shape index: {}]
  %s12 = inlined_call_operand.vmem [shape: f32[1,128], index: 12, kind: input, shape index: {}]
  %s13 = inlined_call_operand.hbm [shape: f32[2,16,128], index: 13, kind: output, shape index: {}]
  %s14 = sld [smem:[#allocation0]]
  $region90: #{tpu_custom_call.1} parent=0
    _
  %s16 = ssub.s32 1, %s14
  %s17 = scalar_select 0, %s16, %s14
  $region1: #{tpu_custom_call.1} parent=0
    #allocation2 [shape = 'u8[16384]{0}', space=vmem, size = 0x4000, scoped, tag = 'input window, operand 0, single buffered']
    #allocation3 [shape = 's32[1]{0}', space=sflag, size = 0x4, scoped, tag = 'scoped memory for tpu_custom_call.1']
    #allocation4 [shape = 's32[1]{0}', space=sflag, size = 0x4, scoped, tag = 'scoped memory for tpu_custom_call.1']
    #allocation5 [shape = 'u8[512]{0}', space=vmem, size = 0x400, scoped, tag = 'input window, operand 1, single buffered']
    #allocation6 [shape = 's32[1]{0}', space=sflag, size = 0x4, scoped, tag = 'scoped memory for tpu_custom_call.1']
    #allocation7 [shape = 'u8[512]{0}', space=vmem, size = 0x400, scoped, tag = 'input window, operand 2, single buffered']
    #allocation8 [shape = 'u8[98304]{0}', space=vmem, size = 0x18000, scoped, tag = 'input window, operand 3, single buffered']
    #allocation9 [shape = 's32[1]{0}', space=sflag, size = 0x4, scoped, tag = 'scoped memory for tpu_custom_call.1']
    #allocation10 [shape = 'u8[32768]{0}', space=vmem, size = 0x8000, scoped, tag = 'input window, operand 5, single buffered']
    #allocation11 [shape = 'u8[131072]{0}', space=vmem, size = 0x20000, scoped, tag = 'input window, operand 9, single buffered']
    #allocation12 [shape = 's32[1]{0}', space=sflag, size = 0x4, scoped, tag = 'scoped memory for tpu_custom_call.1']
    #allocation13 [shape = 'u8[131072]{0}', space=vmem, size = 0x20000, scoped, tag = 'input window, operand 11, single buffered']
    #allocation14 [shape = 'u8[16384]{0}', space=vmem, size = 0x4000, scoped, tag = 'output window, operand 0, single buffered']
    %18 = vsyncpa [#allocation3], 0
    %19 = vsyncpa [#allocation6], 0
    %20 = vsyncpa [#allocation9], 0
    %21 = vsyncpa [#allocation12], 0
    %22 = vsyncpa [#allocation4], 0
    // Predicated region
    $region2: #{tpu_custom_call.1} parent=1 // pred_check
      _
    $region3: #{tpu_custom_call.1} parent=1 // pred_check_branch
      %24 = sbr.rel (0) target = $region5
    $region4: #{tpu_custom_call.1} parent=1 // pred_region
      %s26 = ssub.s32 512, 512
      %27 = vsyncadd [#allocation3], %s26
      %s28 = sshll.u32 [#allocation2], 4
      %s29 = int_to_ptr.vmem [resolvable:$true] %s28
      %34 = dma.hbm_to_vmem [thread:$0]  %s0, 512, %s29, [#allocation3], 128, 128, 8
    $region5: #{tpu_custom_call.1} parent=1 // pred_fallthru
      _
    // Predicated region
    $region6: #{tpu_custom_call.1} parent=1 // pred_check
      _
    $region7: #{tpu_custom_call.1} parent=1 // pred_check_branch
      %36 = sbr.rel (0) target = $region9
    $region8: #{tpu_custom_call.1} parent=1 // pred_region
      %s38 = ssub.s32 16, 16
      %39 = vsyncadd [#allocation6], %s38
      %s41 = sshll.u32 [#allocation5], 4
      %s42 = int_to_ptr.vmem [resolvable:$true] %s41
      %44 = dma.hbm_to_vmem [thread:$0]  %s1, 16, %s42, [#allocation6]
    $region9: #{tpu_custom_call.1} parent=1 // pred_fallthru
      _
    // Predicated region
    $region10: #{tpu_custom_call.1} parent=1 // pred_check
      _
    $region11: #{tpu_custom_call.1} parent=1 // pred_check_branch
      %46 = sbr.rel (0) target = $region13
    $region12: #{tpu_custom_call.1} parent=1 // pred_region
      %s48 = ssub.s32 16, 16
      %49 = vsyncadd [#allocation6], %s48
      %s51 = sshll.u32 [#allocation7], 4
      %s52 = int_to_ptr.vmem [resolvable:$true] %s51
      %54 = dma.hbm_to_vmem [thread:$0]  %s2, 16, %s52, [#allocation6]
    $region13: #{tpu_custom_call.1} parent=1 // pred_fallthru
      _
    // Predicated region
    $region14: #{tpu_custom_call.1} parent=1 // pred_check
      _
    $region15: #{tpu_custom_call.1} parent=1 // pred_check_branch
      %56 = sbr.rel (0) target = $region17
    $region16: #{tpu_custom_call.1} parent=1 // pred_region
      %s58 = ssub.s32 3072, 3072
      %59 = vsyncadd [#allocation9], %s58
      %s60 = sshll.u32 [#allocation8], 4
      %s61 = int_to_ptr.vmem [resolvable:$true] %s60
      %66 = dma.hbm_to_vmem [thread:$0]  %s3, 3072, %s61, [#allocation9], 192, 192, 12
    $region17: #{tpu_custom_call.1} parent=1 // pred_fallthru
      _
    // Predicated region
    $region18: #{tpu_custom_call.1} parent=1 // pred_check
      _
    $region19: #{tpu_custom_call.1} parent=1 // pred_check_branch
      %68 = sbr.rel (0) target = $region21
    $region20: #{tpu_custom_call.1} parent=1 // pred_region
      _
    $region21: #{tpu_custom_call.1} parent=1 // pred_fallthru
      _
    // Predicated region
    $region22: #{tpu_custom_call.1} parent=1 // pred_check
      _
    $region23: #{tpu_custom_call.1} parent=1 // pred_check_branch
      %70 = sbr.rel (0) target = $region25
    $region24: #{tpu_custom_call.1} parent=1 // pred_region
      %s72 = ssub.s32 1024, 1024
      %73 = vsyncadd [#allocation9], %s72
      %s74 = sshll.u32 [#allocation10], 4
      %s75 = int_to_ptr.vmem [resolvable:$true] %s74
      %80 = dma.hbm_to_vmem [thread:$0]  %s5, 1024, %s75, [#allocation9], 64, 64, 4
    $region25: #{tpu_custom_call.1} parent=1 // pred_fallthru
      _
    // Predicated region
    $region26: #{tpu_custom_call.1} parent=1 // pred_check
      _
    $region27: #{tpu_custom_call.1} parent=1 // pred_check_branch
      %82 = sbr.rel (0) target = $region29
    $region28: #{tpu_custom_call.1} parent=1 // pred_region
      _
    $region29: #{tpu_custom_call.1} parent=1 // pred_fallthru
      _
    // Predicated region
    $region30: #{tpu_custom_call.1} parent=1 // pred_check
      _
    $region31: #{tpu_custom_call.1} parent=1 // pred_check_branch
      %84 = sbr.rel (0) target = $region33
    $region32: #{tpu_custom_call.1} parent=1 // pred_region
      _
    $region33: #{tpu_custom_call.1} parent=1 // pred_fallthru
      _
    // Predicated region
    $region34: #{tpu_custom_call.1} parent=1 // pred_check
      _
    $region35: #{tpu_custom_call.1} parent=1 // pred_check_branch
      %86 = sbr.rel (0) target = $region37
    $region36: #{tpu_custom_call.1} parent=1 // pred_region
      _
    $region37: #{tpu_custom_call.1} parent=1 // pred_fallthru
      _
    // Predicated region
    $region38: #{tpu_custom_call.1} parent=1 // pred_check
      _
    $region39: #{tpu_custom_call.1} parent=1 // pred_check_branch
      %88 = sbr.rel (0) target = $region41
    $region40: #{tpu_custom_call.1} parent=1 // pred_region
      %s90 = ssub.s32 4096, 4096
      %91 = vsyncadd [#allocation12], %s90
      %s92 = sshll.u32 [#allocation11], 4
      %s93 = int_to_ptr.vmem [resolvable:$true] %s92
      %98 = dma.hbm_to_vmem [thread:$0]  %s9, 4096, %s93, [#allocation12], 256, 256, 16
    $region41: #{tpu_custom_call.1} parent=1 // pred_fallthru
      _
    // Predicated region
    $region42: #{tpu_custom_call.1} parent=1 // pred_check
      _
    $region43: #{tpu_custom_call.1} parent=1 // pred_check_branch
      %100 = sbr.rel (0) target = $region45
    $region44: #{tpu_custom_call.1} parent=1 // pred_region
      _
    $region45: #{tpu_custom_call.1} parent=1 // pred_fallthru
      _
    // Predicated region
    $region46: #{tpu_custom_call.1} parent=1 // pred_check
      _
    $region47: #{tpu_custom_call.1} parent=1 // pred_check_branch
      %102 = sbr.rel (0) target = $region49
    $region48: #{tpu_custom_call.1} parent=1 // pred_region
      %s104 = ssub.s32 4096, 4096
      %105 = vsyncadd [#allocation12], %s104
      %s106 = sshll.u32 [#allocation13], 4
      %s107 = int_to_ptr.vmem [resolvable:$true] %s106
      %112 = dma.hbm_to_vmem [thread:$0]  %s11, 4096, %s107, [#allocation12], 64, 64, 4
    $region49: #{tpu_custom_call.1} parent=1 // pred_fallthru
      _
    // Predicated region
    $region50: #{tpu_custom_call.1} parent=1 // pred_check
      _
    $region51: #{tpu_custom_call.1} parent=1 // pred_check_branch
      %114 = sbr.rel (0) target = $region53
    $region52: #{tpu_custom_call.1} parent=1 // pred_region
      _
    $region53: #{tpu_custom_call.1} parent=1 // pred_fallthru
      _
    // Predicated region
    $region54: #{tpu_custom_call.1} parent=1 // pred_check
      _
    $region55: #{tpu_custom_call.1} parent=1 // pred_check_branch
      %116 = sbr.rel (0) target = $region57
    $region56: #{tpu_custom_call.1} parent=1 // pred_region
      %117 = dma.done [#allocation3], 512
    $region57: #{tpu_custom_call.1} parent=1 // pred_fallthru
      _
    // Predicated region
    $region58: #{tpu_custom_call.1} parent=1 // pred_check
      _
    $region59: #{tpu_custom_call.1} parent=1 // pred_check_branch
      %119 = sbr.rel (0) target = $region61
    $region60: #{tpu_custom_call.1} parent=1 // pred_region
      %120 = dma.done [#allocation6], 16
    $region61: #{tpu_custom_call.1} parent=1 // pred_fallthru
      _
    // Predicated region
    $region62: #{tpu_custom_call.1} parent=1 // pred_check
      _
    $region63: #{tpu_custom_call.1} parent=1 // pred_check_branch
      %122 = sbr.rel (0) target = $region65
    $region64: #{tpu_custom_call.1} parent=1 // pred_region
      %123 = dma.done [#allocation6], 16
    $region65: #{tpu_custom_call.1} parent=1 // pred_fallthru
      _
    // Predicated region
    $region66: #{tpu_custom_call.1} parent=1 // pred_check
      _
    $region67: #{tpu_custom_call.1} parent=1 // pred_check_branch
      %125 = sbr.rel (0) target = $region69
    $region68: #{tpu_custom_call.1} parent=1 // pred_region
      %126 = dma.done [#allocation9], 3072
    $region69: #{tpu_custom_call.1} parent=1 // pred_fallthru
      _
    // Predicated region
    $region70: #{tpu_custom_call.1} parent=1 // pred_check
      _
    $region71: #{tpu_custom_call.1} parent=1 // pred_check_branch
      %128 = sbr.rel (0) target = $region73
    $region72: #{tpu_custom_call.1} parent=1 // pred_region
      %129 = dma.done [#allocation9], 1024
    $region73: #{tpu_custom_call.1} parent=1 // pred_fallthru
      _
    // Predicated region
    $region74: #{tpu_custom_call.1} parent=1 // pred_check
      _
    $region75: #{tpu_custom_call.1} parent=1 // pred_check_branch
      %131 = sbr.rel (0) target = $region77
    $region76: #{tpu_custom_call.1} parent=1 // pred_region
      %132 = dma.done [#allocation12], 4096
    $region77: #{tpu_custom_call.1} parent=1 // pred_fallthru
      _
    // Predicated region
    $region78: #{tpu_custom_call.1} parent=1 // pred_check
      _
    $region79: #{tpu_custom_call.1} parent=1 // pred_check_branch
      %134 = sbr.rel (0) target = $region81
    $region80: #{tpu_custom_call.1} parent=1 // pred_region
      %135 = dma.done [#allocation12], 4096
    $region81: #{tpu_custom_call.1} parent=1 // pred_fallthru
      _
    %v137 = vld [vmem:[#allocation2] sm:$0xff]
    %v138 = vld [vmem:[#allocation2 + $0x8] sm:$0xff]
    %v139 = vld [vmem:[#allocation2 + $0x10] sm:$0xff]
    %v140 = vld [vmem:[#allocation2 + $0x18] sm:$0xff]
    %v141 = vld [vmem:[#allocation5] sm:$0x1]
    %v142 = vld [vmem:[#allocation7] sm:$0x1]
    %143 = vadd.xlane.f32.xlu0 %v137
    %v144 = vpop.xlane.xlu0 %143
    %145 = vadd.xlane.f32.xlu0 %v138
    %v146 = vpop.xlane.xlu0 %145
    %147 = vadd.xlane.f32.xlu0 %v139
    %v148 = vpop.xlane.xlu0 %147
    %149 = vadd.xlane.f32.xlu0 %v140
    %v150 = vpop.xlane.xlu0 %149
    %v151 = vrcp.pop 128.0
    %v152 = vmul.f32 %v144, %v151
    %v153 = vmul.f32 %v146, %v151
    %v154 = vmul.f32 %v148, %v151
    %v155 = vmul.f32 %v150, %v151
    %v156 = vsub.f32 %v137, %v152
    %v157 = vsub.f32 %v138, %v153
    %v158 = vsub.f32 %v139, %v154
    %v159 = vsub.f32 %v140, %v155
    %v160 = vmul.f32 %v156, %v156
    %v161 = vmul.f32 %v157, %v157
    %v162 = vmul.f32 %v158, %v158
    %v163 = vmul.f32 %v159, %v159
    %164 = vadd.xlane.f32.xlu0 %v160
    %v165 = vpop.xlane.xlu0 %164
    %166 = vadd.xlane.f32.xlu0 %v161
    %v167 = vpop.xlane.xlu0 %166
    %168 = vadd.xlane.f32.xlu0 %v162
    %v169 = vpop.xlane.xlu0 %168
    %170 = vadd.xlane.f32.xlu0 %v163
    %v171 = vpop.xlane.xlu0 %170
    %v172 = vmul.f32 %v165, %v151
    %v173 = vmul.f32 %v167, %v151
    %v174 = vmul.f32 %v169, %v151
    %v175 = vmul.f32 %v171, %v151
    %v176 = vadd.f32 %v172, 1e-05
    %v177 = vadd.f32 %v173, 1e-05
    %v178 = vadd.f32 %v174, 1e-05
    %v179 = vadd.f32 %v175, 1e-05
    %v180 = vrsqrt.pop %v176
    %v181 = vrsqrt.pop %v177
    %v182 = vrsqrt.pop %v178
    %v183 = vrsqrt.pop %v179
    %v184 = vmul.f32 %v156, %v180
    %v185 = vmul.f32 %v157, %v181
    %v186 = vmul.f32 %v158, %v182
    %v187 = vmul.f32 %v159, %v183
    %v189 = vlaneseq
    %v190 = vshrl.u32 %v189, 7
    %v191 = vsub.s32 0, %v190
    %v192 = vrot.slane %v141, %v191
    %v194 = vmul.f32 %v184, %v192
    %v195 = vmul.f32 %v185, %v192
    %v196 = vmul.f32 %v186, %v192
    %v197 = vmul.f32 %v187, %v192
    %v199 = vlaneseq
    %v200 = vshrl.u32 %v199, 7
    %v201 = vsub.s32 0, %v200
    %v202 = vrot.slane %v142, %v201
    %v204 = vadd.f32 %v194, %v202
    %v205 = vadd.f32 %v195, %v202
    %v206 = vadd.f32 %v196, %v202
    %v207 = vadd.f32 %v197, %v202
    %v208 = vpack.c.bf16 %v205, %v204
    %v209 = vpack.c.bf16 %v207, %v206
    %v210 = vld [vmem:[#allocation8] sm:$0xff]
    %v211 = vld [vmem:[#allocation8 + $0x8] sm:$0xf]
    %v212 = vld [vmem:[#allocation8 + $0xc] sm:$0xff]
    %v213 = vld [vmem:[#allocation8 + $0x14] sm:$0xf]
    %v214 = vld [vmem:[#allocation8 + $0x18] sm:$0xff]
    %v215 = vld [vmem:[#allocation8 + $0x20] sm:$0xf]
    %v216 = vld [vmem:[#allocation8 + $0x24] sm:$0xff]
    %v217 = vld [vmem:[#allocation8 + $0x2c] sm:$0xf]
    %v218 = vld [vmem:[#allocation8 + $0x30] sm:$0xff]
    %v219 = vld [vmem:[#allocation8 + $0x38] sm:$0xf]
    %v220 = vld [vmem:[#allocation8 + $0x3c] sm:$0xff]
    %v221 = vld [vmem:[#allocation8 + $0x44] sm:$0xf]
    %v222 = vld [vmem:[#allocation8 + $0x48] sm:$0xff]
    %v223 = vld [vmem:[#allocation8 + $0x50] sm:$0xf]
    %v224 = vld [vmem:[#allocation8 + $0x54] sm:$0xff]
    %v225 = vld [vmem:[#allocation8 + $0x5c] sm:$0xf]
    %v226 = vld [vmem:[#allocation8 + $0x60] sm:$0xff]
    %v227 = vld [vmem:[#allocation8 + $0x68] sm:$0xf]
    %v228 = vld [vmem:[#allocation8 + $0x6c] sm:$0xff]
    %v229 = vld [vmem:[#allocation8 + $0x74] sm:$0xf]
    %v230 = vld [vmem:[#allocation8 + $0x78] sm:$0xff]
    %v231 = vld [vmem:[#allocation8 + $0x80] sm:$0xf]
    %v232 = vld [vmem:[#allocation8 + $0x84] sm:$0xff]
    %v233 = vld [vmem:[#allocation8 + $0x8c] sm:$0xf]
    %v234 = vld [vmem:[#allocation8 + $0x90] sm:$0xff]
    %v235 = vld [vmem:[#allocation8 + $0x98] sm:$0xf]
    %v236 = vld [vmem:[#allocation8 + $0x9c] sm:$0xff]
    %v237 = vld [vmem:[#allocation8 + $0xa4] sm:$0xf]
    %v238 = vld [vmem:[#allocation8 + $0xa8] sm:$0xff]
    %v239 = vld [vmem:[#allocation8 + $0xb0] sm:$0xf]
    %v240 = vld [vmem:[#allocation8 + $0xb4] sm:$0xff]
    %v241 = vld [vmem:[#allocation8 + $0xbc] sm:$0xf]
    %v242 = vld [vmem:[%s4] sm:$0x7]
    %v244 = vlaneseq
    %v245 = vshrl.u32 %v244, 7
    %v246 = vsub.s32 0, %v245
    %v247 = vrot.slane %v242, %v246
    %v248 = vlaneseq
    %v249 = vshrl.u32 %v248, 7
    %v250 = vsub.s32 1, %v249
    %v251 = vrot.slane %v242, %v250
    %v252 = vlaneseq
    %v253 = vshrl.u32 %v252, 7
    %v254 = vsub.s32 2, %v253
    %v255 = vrot.slane %v242, %v254
    %v291 = vunpack.c.l.b16 %v210
    %v292 = vunpack.c.h.b16 %v210
    %v293 = vunpack.c.l.b16 %v211
    %v294 = vunpack.c.l.b16 %v212
    %v295 = vunpack.c.h.b16 %v212
    %v296 = vunpack.c.l.b16 %v213
    %v297 = vunpack.c.l.b16 %v214
    %v298 = vunpack.c.h.b16 %v214
    %v299 = vunpack.c.l.b16 %v215
    %v300 = vunpack.c.l.b16 %v216
    %v301 = vunpack.c.h.b16 %v216
    %v302 = vunpack.c.l.b16 %v217
    %v303 = vunpack.c.l.b16 %v218
    %v304 = vunpack.c.h.b16 %v218
    %v305 = vunpack.c.l.b16 %v219
    %v306 = vunpack.c.l.b16 %v220
    %v307 = vunpack.c.h.b16 %v220
    %v308 = vunpack.c.l.b16 %v221
    %v309 = vunpack.c.l.b16 %v222
    %v310 = vunpack.c.h.b16 %v222
    %v311 = vunpack.c.l.b16 %v223
    %v312 = vunpack.c.l.b16 %v224
    %v313 = vunpack.c.h.b16 %v224
    %v314 = vunpack.c.l.b16 %v225
    %v315 = vunpack.c.l.b16 %v226
    %v316 = vunpack.c.h.b16 %v226
    %v317 = vunpack.c.l.b16 %v227
    %v318 = vunpack.c.l.b16 %v228
    %v319 = vunpack.c.h.b16 %v228
    %v320 = vunpack.c.l.b16 %v229
    %v321 = vunpack.c.l.b16 %v230
    %v322 = vunpack.c.h.b16 %v230
    %v323 = vunpack.c.l.b16 %v231
    %v324 = vunpack.c.l.b16 %v232
    %v325 = vunpack.c.h.b16 %v232
    %v326 = vunpack.c.l.b16 %v233
    %v327 = vunpack.c.l.b16 %v234
    %v328 = vunpack.c.h.b16 %v234
    %v329 = vunpack.c.l.b16 %v235
    %v330 = vunpack.c.l.b16 %v236
    %v331 = vunpack.c.h.b16 %v236
    %v332 = vunpack.c.l.b16 %v237
    %v333 = vunpack.c.l.b16 %v238
    %v334 = vunpack.c.h.b16 %v238
    %v335 = vunpack.c.l.b16 %v239
    %v336 = vunpack.c.l.b16 %v240
    %v337 = vunpack.c.h.b16 %v240
    %v338 = vunpack.c.l.b16 %v241
    %v339 = vpack.c.b16 %v294, %v291
    %v340 = vpack.c.b16 %v295, %v292
    %v341 = vpack.c.b16 %v296, %v293
    %v342 = vpack.c.b16 %v300, %v297
    %v343 = vpack.c.b16 %v301, %v298
    %v344 = vpack.c.b16 %v302, %v299
    %v345 = vpack.c.b16 %v306, %v303
    %v346 = vpack.c.b16 %v307, %v304
    %v347 = vpack.c.b16 %v308, %v305
    %v348 = vpack.c.b16 %v312, %v309
    %v349 = vpack.c.b16 %v313, %v310
    %v350 = vpack.c.b16 %v314, %v311
    %v351 = vpack.c.b16 %v318, %v315
    %v352 = vpack.c.b16 %v319, %v316
    %v353 = vpack.c.b16 %v320, %v317
    %v354 = vpack.c.b16 %v324, %v321
    %v355 = vpack.c.b16 %v325, %v322
    %v356 = vpack.c.b16 %v326, %v323
    %v357 = vpack.c.b16 %v330, %v327
    %v358 = vpack.c.b16 %v331, %v328
    %v359 = vpack.c.b16 %v332, %v329
    %v360 = vpack.c.b16 %v336, %v333
    %v361 = vpack.c.b16 %v337, %v334
    %v362 = vpack.c.b16 %v338, %v335
    %387 = vmatprep.subr.bf16.mxu0 %v340
    %388 = vmatpush1.bf16.msra.mxu0 %v339
    %389 = vmatprep.subr.bf16.mxu0 %v343
    %390 = vmatpush1.bf16.msra.mxu0 %v342
    %391 = vmatprep.subr.bf16.mxu0 %v346
    %392 = vmatpush1.bf16.msra.mxu0 %v345
    %393 = vmatprep.subr.bf16.mxu0 %v349
    %394 = vmatpush1.bf16.msra.mxu0 %v348
    %395 = vmatprep.subr.bf16.mxu0 %v352
    %396 = vmatpush1.bf16.msra.mxu0 %v351
    %397 = vmatprep.subr.bf16.mxu0 %v355
    %398 = vmatpush1.bf16.msra.mxu0 %v354
    %399 = vmatprep.subr.bf16.mxu0 %v358
    %400 = vmatpush1.bf16.msra.mxu0 %v357
    %401 = vmatprep.subr.bf16.mxu0 %v361
    %402 = vmatpush1.bf16.msra.mxu0 %v360
    %403 = vmatprep.subr.bf16.mxu0 0
    %404 = vmatpush1.bf16.msra.mxu0 0
    %405 = vmatprep.subr.bf16.mxu0 0
    %406 = vmatpush1.bf16.msra.mxu0 0
    %407 = vmatprep.subr.bf16.mxu0 0
    %408 = vmatpush1.bf16.msra.mxu0 0
    %409 = vmatprep.subr.bf16.mxu0 0
    %410 = vmatpush1.bf16.msra.mxu0 0
    %411 = vmatprep.subr.bf16.mxu0 0
    %412 = vmatpush1.bf16.msra.mxu0 0
    %413 = vmatprep.subr.bf16.mxu0 0
    %414 = vmatpush1.bf16.msra.mxu0 0
    %415 = vmatprep.subr.bf16.mxu0 0
    %416 = vmatpush1.bf16.msra.mxu0 0
    %417 = vmatprep.subr.bf16.mxu0 0
    %418 = vmatpush1.bf16.msra.mxu0 0
    %419 = vmatprep.mubr.bf16.mxu0 0
    %420 = vmatmul.mubr.bf16.gmra.mrb[0].mxu0 %v208
    %v421 = vpop.f32.mrb[0].mxu0
    %v422 = vadd.f32 %v247, %v421
    %v423 = vpop.f32.mrb[0].mxu0
    %v424 = vadd.f32 %v251, %v423
    %v425 = vpop.f32.mrb[0].mxu0
    %v426 = vadd.f32 %v247, %v425
    %v427 = vpop.f32.mrb[0].mxu0
    %v428 = vadd.f32 %v251, %v427
    %429 = vmatprep.mubr.bf16.mxu0 0
    %430 = vmatmul.mubr.bf16.gmra.mrb[0].mxu0 %v209
    %v431 = vpop.f32.mrb[0].mxu0
    %v432 = vadd.f32 %v247, %v431
    %v433 = vpop.f32.mrb[0].mxu0
    %v434 = vadd.f32 %v251, %v433
    %v435 = vpop.f32.mrb[0].mxu0
    %v436 = vadd.f32 %v247, %v435
    %v437 = vpop.f32.mrb[0].mxu0
    %v438 = vadd.f32 %v251, %v437
    %439 = vdwg.mxu0
    %440 = vmatprep.subr.bf16.mxu0 0
    %441 = vmatpush1.bf16.msra.mxu0 %v341
    %442 = vmatprep.subr.bf16.mxu0 0
    %443 = vmatpush1.bf16.msra.mxu0 %v344
    %444 = vmatprep.subr.bf16.mxu0 0
    %445 = vmatpush1.bf16.msra.mxu0 %v347
    %446 = vmatprep.subr.bf16.mxu0 0
    %447 = vmatpush1.bf16.msra.mxu0 %v350
    %448 = vmatprep.subr.bf16.mxu0 0
    %449 = vmatpush1.bf16.msra.mxu0 %v353
    %450 = vmatprep.subr.bf16.mxu0 0
    %451 = vmatpush1.bf16.msra.mxu0 %v356
    %452 = vmatprep.subr.bf16.mxu0 0
    %453 = vmatpush1.bf16.msra.mxu0 %v359
    %454 = vmatprep.subr.bf16.mxu0 0
    %455 = vmatpush1.bf16.msra.mxu0 %v362
    %456 = vmatprep.subr.bf16.mxu0 0
    %457 = vmatpush1.bf16.msra.mxu0 0
    %458 = vmatprep.subr.bf16.mxu0 0
    %459 = vmatpush1.bf16.msra.mxu0 0
    %460 = vmatprep.subr.bf16.mxu0 0
    %461 = vmatpush1.bf16.msra.mxu0 0
    %462 = vmatprep.subr.bf16.mxu0 0
    %463 = vmatpush1.bf16.msra.mxu0 0
    %464 = vmatprep.subr.bf16.mxu0 0
    %465 = vmatpush1.bf16.msra.mxu0 0
    %466 = vmatprep.subr.bf16.mxu0 0
    %467 = vmatpush1.bf16.msra.mxu0 0
    %468 = vmatprep.subr.bf16.mxu0 0
    %469 = vmatpush1.bf16.msra.mxu0 0
    %470 = vmatprep.subr.bf16.mxu0 0
    %471 = vmatpush1.bf16.msra.mxu0 0
    %472 = vmatprep.mubr.bf16.mxu0 0
    %473 = vmatmul.mubr.bf16.gmra.mrb[0].mxu0 %v208
    %v474 = vpop.f32.mrb[0].mxu0
    %v475 = vadd.f32 %v255, %v474
    %v476 = vpop.f32.mrb[0].mxu0
    %v477 = vpop.f32.mrb[0].mxu0
    %v478 = vadd.f32 %v255, %v477
    %v479 = vpop.f32.mrb[0].mxu0
    %480 = vmatprep.mubr.bf16.mxu0 0
    %481 = vmatmul.mubr.bf16.gmra.mrb[0].mxu0 %v209
    %v482 = vpop.f32.mrb[0].mxu0
    %v483 = vadd.f32 %v255, %v482
    %v484 = vpop.f32.mrb[0].mxu0
    %v485 = vpop.f32.mrb[0].mxu0
    %v486 = vadd.f32 %v255, %v485
    %v487 = vpop.f32.mrb[0].mxu0
    %488 = vdwg.mxu0
    %493 = vrot.lane.b32.xlu0 %v422, 96
    %v494 = vpop.permute.xlu0 %493
    %495 = vrot.lane.b32.xlu0 %v426, 96
    %v496 = vpop.permute.xlu0 %495
    %497 = vrot.lane.b32.xlu0 %v432, 96
    %v498 = vpop.permute.xlu0 %497
    %499 = vrot.lane.b32.xlu0 %v436, 96
    %v500 = vpop.permute.xlu0 %499
    %505 = vrot.lane.b32.xlu0 %v422, 64
    %v506 = vpop.permute.xlu0 %505
    %507 = vrot.lane.b32.xlu0 %v426, 64
    %v508 = vpop.permute.xlu0 %507
    %509 = vrot.lane.b32.xlu0 %v432, 64
    %v510 = vpop.permute.xlu0 %509
    %511 = vrot.lane.b32.xlu0 %v436, 64
    %v512 = vpop.permute.xlu0 %511
    %517 = vrot.lane.b32.xlu0 %v422, 32
    %v518 = vpop.permute.xlu0 %517
    %519 = vrot.lane.b32.xlu0 %v426, 32
    %v520 = vpop.permute.xlu0 %519
    %521 = vrot.lane.b32.xlu0 %v432, 32
    %v522 = vpop.permute.xlu0 %521
    %523 = vrot.lane.b32.xlu0 %v436, 32
    %v524 = vpop.permute.xlu0 %523
    %v529 = vcombine.low %v422, %v506
    %v530 = vcombine.high %v422, %v506
    %v532 = vunpack.c.l.s4 1983009808
    %v533 = vunpack.c.0.s8 %v532
    %v534 = vlaneseq
    %v535 = vshrl.u32 %v534, 7
    %v536 = vsub.s32 %v533, %v535
    %v537 = vrot.slane %v529, %v536
    %v539 = vunpack.c.l.s4 1983009808
    %v540 = vunpack.c.0.s8 %v539
    %v541 = vlaneseq
    %v542 = vshrl.u32 %v541, 7
    %v543 = vsub.s32 %v540, %v542
    %v544 = vrot.slane %v530, %v543
    %v545 = vcombine.low %v494, %v518
    %v546 = vcombine.high %v494, %v518
    %v548 = vunpack.c.l.s4 1983009808
    %v549 = vunpack.c.0.s8 %v548
    %v550 = vlaneseq
    %v551 = vshrl.u32 %v550, 7
    %v552 = vsub.s32 %v549, %v551
    %v553 = vrot.slane %v545, %v552
    %v555 = vunpack.c.l.s4 1983009808
    %v556 = vunpack.c.0.s8 %v555
    %v557 = vlaneseq
    %v558 = vshrl.u32 %v557, 7
    %v559 = vsub.s32 %v556, %v558
    %v560 = vrot.slane %v546, %v559
    %v561 = vcombine.low %v537, %v553
    %v562 = vcombine.high %v537, %v553
    %v564 = vunpack.c.l.s4 1934713408
    %v565 = vunpack.c.0.s8 %v564
    %v566 = vlaneseq
    %v567 = vshrl.u32 %v566, 7
    %v568 = vsub.s32 %v565, %v567
    %v569 = vrot.slane %v561, %v568
    %v571 = vunpack.c.l.s4 1934713408
    %v572 = vunpack.c.0.s8 %v571
    %v573 = vlaneseq
    %v574 = vshrl.u32 %v573, 7
    %v575 = vsub.s32 %v572, %v574
    %v576 = vrot.slane %v562, %v575
    %v577 = vcombine.low %v544, %v560
    %v578 = vcombine.high %v544, %v560
    %v580 = vunpack.c.l.s4 1934713408
    %v581 = vunpack.c.0.s8 %v580
    %v582 = vlaneseq
    %v583 = vshrl.u32 %v582, 7
    %v584 = vsub.s32 %v581, %v583
    %v585 = vrot.slane %v577, %v584
    %v587 = vunpack.c.l.s4 1934713408
    %v588 = vunpack.c.0.s8 %v587
    %v589 = vlaneseq
    %v590 = vshrl.u32 %v589, 7
    %v591 = vsub.s32 %v588, %v590
    %v592 = vrot.slane %v578, %v591
    %v593 = vcombine.high %v569, 0.0
    %v594 = vcombine.high %v576, 0.0
    %v595 = vcombine.high %v585, 0.0
    %v596 = vcombine.high %v592, 0.0
    %v597 = vcombine.low %v426, %v508
    %v598 = vcombine.high %v426, %v508
    %v600 = vunpack.c.l.s4 1983009808
    %v601 = vunpack.c.0.s8 %v600
    %v602 = vlaneseq
    %v603 = vshrl.u32 %v602, 7
    %v604 = vsub.s32 %v601, %v603
    %v605 = vrot.slane %v597, %v604
    %v607 = vunpack.c.l.s4 1983009808
    %v608 = vunpack.c.0.s8 %v607
    %v609 = vlaneseq
    %v610 = vshrl.u32 %v609, 7
    %v611 = vsub.s32 %v608, %v610
    %v612 = vrot.slane %v598, %v611
    %v613 = vcombine.low %v496, %v520
    %v614 = vcombine.high %v496, %v520
    %v616 = vunpack.c.l.s4 1983009808
    %v617 = vunpack.c.0.s8 %v616
    %v618 = vlaneseq
    %v619 = vshrl.u32 %v618, 7
    %v620 = vsub.s32 %v617, %v619
    %v621 = vrot.slane %v613, %v620
    %v623 = vunpack.c.l.s4 1983009808
    %v624 = vunpack.c.0.s8 %v623
    %v625 = vlaneseq
    %v626 = vshrl.u32 %v625, 7
    %v627 = vsub.s32 %v624, %v626
    %v628 = vrot.slane %v614, %v627
    %v629 = vcombine.low %v605, %v621
    %v630 = vcombine.high %v605, %v621
    %v632 = vunpack.c.l.s4 1934713408
    %v633 = vunpack.c.0.s8 %v632
    %v634 = vlaneseq
    %v635 = vshrl.u32 %v634, 7
    %v636 = vsub.s32 %v633, %v635
    %v637 = vrot.slane %v629, %v636
    %v639 = vunpack.c.l.s4 1934713408
    %v640 = vunpack.c.0.s8 %v639
    %v641 = vlaneseq
    %v642 = vshrl.u32 %v641, 7
    %v643 = vsub.s32 %v640, %v642
    %v644 = vrot.slane %v630, %v643
    %v645 = vcombine.low %v612, %v628
    %v646 = vcombine.high %v612, %v628
    %v648 = vunpack.c.l.s4 1934713408
    %v649 = vunpack.c.0.s8 %v648
    %v650 = vlaneseq
    %v651 = vshrl.u32 %v650, 7
    %v652 = vsub.s32 %v649, %v651
    %v653 = vrot.slane %v645, %v652
    %v655 = vunpack.c.l.s4 1934713408
    %v656 = vunpack.c.0.s8 %v655
    %v657 = vlaneseq
    %v658 = vshrl.u32 %v657, 7
    %v659 = vsub.s32 %v656, %v658
    %v660 = vrot.slane %v646, %v659
    %v661 = vcombine.high %v637, 0.0
    %v662 = vcombine.high %v644, 0.0
    %v663 = vcombine.high %v653, 0.0
    %v664 = vcombine.high %v660, 0.0
    %v665 = vcombine.low %v432, %v510
    %v666 = vcombine.high %v432, %v510
    %v668 = vunpack.c.l.s4 1983009808
    %v669 = vunpack.c.0.s8 %v668
    %v670 = vlaneseq
    %v671 = vshrl.u32 %v670, 7
    %v672 = vsub.s32 %v669, %v671
    %v673 = vrot.slane %v665, %v672
    %v675 = vunpack.c.l.s4 1983009808
    %v676 = vunpack.c.0.s8 %v675
    %v677 = vlaneseq
    %v678 = vshrl.u32 %v677, 7
    %v679 = vsub.s32 %v676, %v678
    %v680 = vrot.slane %v666, %v679
    %v681 = vcombine.low %v498, %v522
    %v682 = vcombine.high %v498, %v522
    %v684 = vunpack.c.l.s4 1983009808
    %v685 = vunpack.c.0.s8 %v684
    %v686 = vlaneseq
    %v687 = vshrl.u32 %v686, 7
    %v688 = vsub.s32 %v685, %v687
    %v689 = vrot.slane %v681, %v688
    %v691 = vunpack.c.l.s4 1983009808
    %v692 = vunpack.c.0.s8 %v691
    %v693 = vlaneseq
    %v694 = vshrl.u32 %v693, 7
    %v695 = vsub.s32 %v692, %v694
    %v696 = vrot.slane %v682, %v695
    %v697 = vcombine.low %v673, %v689
    %v698 = vcombine.high %v673, %v689
    %v700 = vunpack.c.l.s4 1934713408
    %v701 = vunpack.c.0.s8 %v700
    %v702 = vlaneseq
    %v703 = vshrl.u32 %v702, 7
    %v704 = vsub.s32 %v701, %v703
    %v705 = vrot.slane %v697, %v704
    %v707 = vunpack.c.l.s4 1934713408
    %v708 = vunpack.c.0.s8 %v707
    %v709 = vlaneseq
    %v710 = vshrl.u32 %v709, 7
    %v711 = vsub.s32 %v708, %v710
    %v712 = vrot.slane %v698, %v711
    %v713 = vcombine.low %v680, %v696
    %v714 = vcombine.high %v680, %v696
    %v716 = vunpack.c.l.s4 1934713408
    %v717 = vunpack.c.0.s8 %v716
    %v718 = vlaneseq
    %v719 = vshrl.u32 %v718, 7
    %v720 = vsub.s32 %v717, %v719
    %v721 = vrot.slane %v713, %v720
    %v723 = vunpack.c.l.s4 1934713408
    %v724 = vunpack.c.0.s8 %v723
    %v725 = vlaneseq
    %v726 = vshrl.u32 %v725, 7
    %v727 = vsub.s32 %v724, %v726
    %v728 = vrot.slane %v714, %v727
    %v729 = vcombine.high %v705, 0.0
    %v730 = vcombine.high %v712, 0.0
    %v731 = vcombine.high %v721, 0.0
    %v732 = vcombine.high %v728, 0.0
    %v733 = vcombine.low %v436, %v512
    %v734 = vcombine.high %v436, %v512
    %v736 = vunpack.c.l.s4 1983009808
    %v737 = vunpack.c.0.s8 %v736
    %v738 = vlaneseq
    %v739 = vshrl.u32 %v738, 7
    %v740 = vsub.s32 %v737, %v739
    %v741 = vrot.slane %v733, %v740
    %v743 = vunpack.c.l.s4 1983009808
    %v744 = vunpack.c.0.s8 %v743
    %v745 = vlaneseq
    %v746 = vshrl.u32 %v745, 7
    %v747 = vsub.s32 %v744, %v746
    %v748 = vrot.slane %v734, %v747
    %v749 = vcombine.low %v500, %v524
    %v750 = vcombine.high %v500, %v524
    %v752 = vunpack.c.l.s4 1983009808
    %v753 = vunpack.c.0.s8 %v752
    %v754 = vlaneseq
    %v755 = vshrl.u32 %v754, 7
    %v756 = vsub.s32 %v753, %v755
    %v757 = vrot.slane %v749, %v756
    %v759 = vunpack.c.l.s4 1983009808
    %v760 = vunpack.c.0.s8 %v759
    %v761 = vlaneseq
    %v762 = vshrl.u32 %v761, 7
    %v763 = vsub.s32 %v760, %v762
    %v764 = vrot.slane %v750, %v763
    %v765 = vcombine.low %v741, %v757
    %v766 = vcombine.high %v741, %v757
    %v768 = vunpack.c.l.s4 1934713408
    %v769 = vunpack.c.0.s8 %v768
    %v770 = vlaneseq
    %v771 = vshrl.u32 %v770, 7
    %v772 = vsub.s32 %v769, %v771
    %v773 = vrot.slane %v765, %v772
    %v775 = vunpack.c.l.s4 1934713408
    %v776 = vunpack.c.0.s8 %v775
    %v777 = vlaneseq
    %v778 = vshrl.u32 %v777, 7
    %v779 = vsub.s32 %v776, %v778
    %v780 = vrot.slane %v766, %v779
    %v781 = vcombine.low %v748, %v764
    %v782 = vcombine.high %v748, %v764
    %v784 = vunpack.c.l.s4 1934713408
    %v785 = vunpack.c.0.s8 %v784
    %v786 = vlaneseq
    %v787 = vshrl.u32 %v786, 7
    %v788 = vsub.s32 %v785, %v787
    %v789 = vrot.slane %v781, %v788
    %v791 = vunpack.c.l.s4 1934713408
    %v792 = vunpack.c.0.s8 %v791
    %v793 = vlaneseq
    %v794 = vshrl.u32 %v793, 7
    %v795 = vsub.s32 %v792, %v794
    %v796 = vrot.slane %v782, %v795
    %v797 = vcombine.high %v773, 0.0
    %v798 = vcombine.high %v780, 0.0
    %v799 = vcombine.high %v789, 0.0
    %v800 = vcombine.high %v796, 0.0
    %v801 = vcombine.low %v569, %v576
    %v803 = vunpack.c.l.s4 1983009808
    %v804 = vunpack.c.0.s8 %v803
    %v805 = vlaneseq
    %v806 = vshrl.u32 %v805, 7
    %v807 = vsub.s32 %v804, %v806
    %v808 = vrot.slane %v801, %v807
    %v809 = vcombine.low %v593, %v594
    %v811 = vunpack.c.l.s4 1983009808
    %v812 = vunpack.c.0.s8 %v811
    %v813 = vlaneseq
    %v814 = vshrl.u32 %v813, 7
    %v815 = vsub.s32 %v812, %v814
    %v816 = vrot.slane %v809, %v815
    %v817 = vcombine.low %v585, %v592
    %v819 = vunpack.c.l.s4 1983009808
    %v820 = vunpack.c.0.s8 %v819
    %v821 = vlaneseq
    %v822 = vshrl.u32 %v821, 7
    %v823 = vsub.s32 %v820, %v822
    %v824 = vrot.slane %v817, %v823
    %v825 = vcombine.low %v595, %v596
    %v827 = vunpack.c.l.s4 1983009808
    %v828 = vunpack.c.0.s8 %v827
    %v829 = vlaneseq
    %v830 = vshrl.u32 %v829, 7
    %v831 = vsub.s32 %v828, %v830
    %v832 = vrot.slane %v825, %v831
    %v833 = vcombine.low %v808, %v816
    %v834 = vcombine.high %v808, %v816
    %v836 = vunpack.c.l.s4 1934713408
    %v837 = vunpack.c.0.s8 %v836
    %v838 = vlaneseq
    %v839 = vshrl.u32 %v838, 7
    %v840 = vsub.s32 %v837, %v839
    %v841 = vrot.slane %v833, %v840
    %v843 = vunpack.c.l.s4 1934713408
    %v844 = vunpack.c.0.s8 %v843
    %v845 = vlaneseq
    %v846 = vshrl.u32 %v845, 7
    %v847 = vsub.s32 %v844, %v846
    %v848 = vrot.slane %v834, %v847
    %v849 = vcombine.low %v824, %v832
    %v850 = vcombine.high %v824, %v832
    %v852 = vunpack.c.l.s4 1934713408
    %v853 = vunpack.c.0.s8 %v852
    %v854 = vlaneseq
    %v855 = vshrl.u32 %v854, 7
    %v856 = vsub.s32 %v853, %v855
    %v857 = vrot.slane %v849, %v856
    %v859 = vunpack.c.l.s4 1934713408
    %v860 = vunpack.c.0.s8 %v859
    %v861 = vlaneseq
    %v862 = vshrl.u32 %v861, 7
    %v863 = vsub.s32 %v860, %v862
    %v864 = vrot.slane %v850, %v863
    %v865 = vcombine.low %v841, %v857
    %v866 = vcombine.high %v841, %v857
    %v867 = vcombine.low %v848, %v864
    %v868 = vcombine.high %v848, %v864
    %v869 = vcombine.low %v637, %v644
    %v871 = vunpack.c.l.s4 1983009808
    %v872 = vunpack.c.0.s8 %v871
    %v873 = vlaneseq
    %v874 = vshrl.u32 %v873, 7
    %v875 = vsub.s32 %v872, %v874
    %v876 = vrot.slane %v869, %v875
    %v877 = vcombine.low %v661, %v662
    %v879 = vunpack.c.l.s4 1983009808
    %v880 = vunpack.c.0.s8 %v879
    %v881 = vlaneseq
    %v882 = vshrl.u32 %v881, 7
    %v883 = vsub.s32 %v880, %v882
    %v884 = vrot.slane %v877, %v883
    %v885 = vcombine.low %v653, %v660
    %v887 = vunpack.c.l.s4 1983009808
    %v888 = vunpack.c.0.s8 %v887
    %v889 = vlaneseq
    %v890 = vshrl.u32 %v889, 7
    %v891 = vsub.s32 %v888, %v890
    %v892 = vrot.slane %v885, %v891
    %v893 = vcombine.low %v663, %v664
    %v895 = vunpack.c.l.s4 1983009808
    %v896 = vunpack.c.0.s8 %v895
    %v897 = vlaneseq
    %v898 = vshrl.u32 %v897, 7
    %v899 = vsub.s32 %v896, %v898
    %v900 = vrot.slane %v893, %v899
    %v901 = vcombine.low %v876, %v884
    %v902 = vcombine.high %v876, %v884
    %v904 = vunpack.c.l.s4 1934713408
    %v905 = vunpack.c.0.s8 %v904
    %v906 = vlaneseq
    %v907 = vshrl.u32 %v906, 7
    %v908 = vsub.s32 %v905, %v907
    %v909 = vrot.slane %v901, %v908
    %v911 = vunpack.c.l.s4 1934713408
    %v912 = vunpack.c.0.s8 %v911
    %v913 = vlaneseq
    %v914 = vshrl.u32 %v913, 7
    %v915 = vsub.s32 %v912, %v914
    %v916 = vrot.slane %v902, %v915
    %v917 = vcombine.low %v892, %v900
    %v918 = vcombine.high %v892, %v900
    %v920 = vunpack.c.l.s4 1934713408
    %v921 = vunpack.c.0.s8 %v920
    %v922 = vlaneseq
    %v923 = vshrl.u32 %v922, 7
    %v924 = vsub.s32 %v921, %v923
    %v925 = vrot.slane %v917, %v924
    %v927 = vunpack.c.l.s4 1934713408
    %v928 = vunpack.c.0.s8 %v927
    %v929 = vlaneseq
    %v930 = vshrl.u32 %v929, 7
    %v931 = vsub.s32 %v928, %v930
    %v932 = vrot.slane %v918, %v931
    %v933 = vcombine.low %v909, %v925
    %v934 = vcombine.high %v909, %v925
    %v935 = vcombine.low %v916, %v932
    %v936 = vcombine.high %v916, %v932
    %v937 = vcombine.low %v705, %v712
    %v939 = vunpack.c.l.s4 1983009808
    %v940 = vunpack.c.0.s8 %v939
    %v941 = vlaneseq
    %v942 = vshrl.u32 %v941, 7
    %v943 = vsub.s32 %v940, %v942
    %v944 = vrot.slane %v937, %v943
    %v945 = vcombine.low %v729, %v730
    %v947 = vunpack.c.l.s4 1983009808
    %v948 = vunpack.c.0.s8 %v947
    %v949 = vlaneseq
    %v950 = vshrl.u32 %v949, 7
    %v951 = vsub.s32 %v948, %v950
    %v952 = vrot.slane %v945, %v951
    %v953 = vcombine.low %v721, %v728
    %v955 = vunpack.c.l.s4 1983009808
    %v956 = vunpack.c.0.s8 %v955
    %v957 = vlaneseq
    %v958 = vshrl.u32 %v957, 7
    %v959 = vsub.s32 %v956, %v958
    %v960 = vrot.slane %v953, %v959
    %v961 = vcombine.low %v731, %v732
    %v963 = vunpack.c.l.s4 1983009808
    %v964 = vunpack.c.0.s8 %v963
    %v965 = vlaneseq
    %v966 = vshrl.u32 %v965, 7
    %v967 = vsub.s32 %v964, %v966
    %v968 = vrot.slane %v961, %v967
    %v969 = vcombine.low %v944, %v952
    %v970 = vcombine.high %v944, %v952
    %v972 = vunpack.c.l.s4 1934713408
    %v973 = vunpack.c.0.s8 %v972
    %v974 = vlaneseq
    %v975 = vshrl.u32 %v974, 7
    %v976 = vsub.s32 %v973, %v975
    %v977 = vrot.slane %v969, %v976
    %v979 = vunpack.c.l.s4 1934713408
    %v980 = vunpack.c.0.s8 %v979
    %v981 = vlaneseq
    %v982 = vshrl.u32 %v981, 7
    %v983 = vsub.s32 %v980, %v982
    %v984 = vrot.slane %v970, %v983
    %v985 = vcombine.low %v960, %v968
    %v986 = vcombine.high %v960, %v968
    %v988 = vunpack.c.l.s4 1934713408
    %v989 = vunpack.c.0.s8 %v988
    %v990 = vlaneseq
    %v991 = vshrl.u32 %v990, 7
    %v992 = vsub.s32 %v989, %v991
    %v993 = vrot.slane %v985, %v992
    %v995 = vunpack.c.l.s4 1934713408
    %v996 = vunpack.c.0.s8 %v995
    %v997 = vlaneseq
    %v998 = vshrl.u32 %v997, 7
    %v999 = vsub.s32 %v996, %v998
    %v1000 = vrot.slane %v986, %v999
    %v1001 = vcombine.low %v977, %v993
    %v1002 = vcombine.high %v977, %v993
    %v1003 = vcombine.low %v984, %v1000
    %v1004 = vcombine.high %v984, %v1000
    %v1005 = vcombine.low %v773, %v780
    %v1007 = vunpack.c.l.s4 1983009808
    %v1008 = vunpack.c.0.s8 %v1007
    %v1009 = vlaneseq
    %v1010 = vshrl.u32 %v1009, 7
    %v1011 = vsub.s32 %v1008, %v1010
    %v1012 = vrot.slane %v1005, %v1011
    %v1013 = vcombine.low %v797, %v798
    %v1015 = vunpack.c.l.s4 1983009808
    %v1016 = vunpack.c.0.s8 %v1015
    %v1017 = vlaneseq
    %v1018 = vshrl.u32 %v1017, 7
    %v1019 = vsub.s32 %v1016, %v1018
    %v1020 = vrot.slane %v1013, %v1019
    %v1021 = vcombine.low %v789, %v796
    %v1023 = vunpack.c.l.s4 1983009808
    %v1024 = vunpack.c.0.s8 %v1023
    %v1025 = vlaneseq
    %v1026 = vshrl.u32 %v1025, 7
    %v1027 = vsub.s32 %v1024, %v1026
    %v1028 = vrot.slane %v1021, %v1027
    %v1029 = vcombine.low %v799, %v800
    %v1031 = vunpack.c.l.s4 1983009808
    %v1032 = vunpack.c.0.s8 %v1031
    %v1033 = vlaneseq
    %v1034 = vshrl.u32 %v1033, 7
    %v1035 = vsub.s32 %v1032, %v1034
    %v1036 = vrot.slane %v1029, %v1035
    %v1037 = vcombine.low %v1012, %v1020
    %v1038 = vcombine.high %v1012, %v1020
    %v1040 = vunpack.c.l.s4 1934713408
    %v1041 = vunpack.c.0.s8 %v1040
    %v1042 = vlaneseq
    %v1043 = vshrl.u32 %v1042, 7
    %v1044 = vsub.s32 %v1041, %v1043
    %v1045 = vrot.slane %v1037, %v1044
    %v1047 = vunpack.c.l.s4 1934713408
    %v1048 = vunpack.c.0.s8 %v1047
    %v1049 = vlaneseq
    %v1050 = vshrl.u32 %v1049, 7
    %v1051 = vsub.s32 %v1048, %v1050
    %v1052 = vrot.slane %v1038, %v1051
    %v1053 = vcombine.low %v1028, %v1036
    %v1054 = vcombine.high %v1028, %v1036
    %v1056 = vunpack.c.l.s4 1934713408
    %v1057 = vunpack.c.0.s8 %v1056
    %v1058 = vlaneseq
    %v1059 = vshrl.u32 %v1058, 7
    %v1060 = vsub.s32 %v1057, %v1059
    %v1061 = vrot.slane %v1053, %v1060
    %v1063 = vunpack.c.l.s4 1934713408
    %v1064 = vunpack.c.0.s8 %v1063
    %v1065 = vlaneseq
    %v1066 = vshrl.u32 %v1065, 7
    %v1067 = vsub.s32 %v1064, %v1066
    %v1068 = vrot.slane %v1054, %v1067
    %v1069 = vcombine.low %v1045, %v1061
    %v1070 = vcombine.high %v1045, %v1061
    %v1071 = vcombine.low %v1052, %v1068
    %v1072 = vcombine.high %v1052, %v1068
    %v1073 = vpack.c.bf16 %v933, %v865
    %v1074 = vpack.c.bf16 %v934, %v866
    %v1075 = vpack.c.bf16 %v935, %v867
    %v1076 = vpack.c.bf16 %v936, %v868
    %v1077 = vpack.c.bf16 %v1069, %v1001
    %v1078 = vpack.c.bf16 %v1070, %v1002
    %v1079 = vpack.c.bf16 %v1071, %v1003
    %v1080 = vpack.c.bf16 %v1072, %v1004
    %1085 = vrot.lane.b32.xlu0 %v424, 96
    %v1086 = vpop.permute.xlu0 %1085
    %1087 = vrot.lane.b32.xlu0 %v428, 96
    %v1088 = vpop.permute.xlu0 %1087
    %1089 = vrot.lane.b32.xlu0 %v434, 96
    %v1090 = vpop.permute.xlu0 %1089
    %1091 = vrot.lane.b32.xlu0 %v438, 96
    %v1092 = vpop.permute.xlu0 %1091
    %1097 = vrot.lane.b32.xlu0 %v424, 64
    %v1098 = vpop.permute.xlu0 %1097
    %1099 = vrot.lane.b32.xlu0 %v428, 64
    %v1100 = vpop.permute.xlu0 %1099
    %1101 = vrot.lane.b32.xlu0 %v434, 64
    %v1102 = vpop.permute.xlu0 %1101
    %1103 = vrot.lane.b32.xlu0 %v438, 64
    %v1104 = vpop.permute.xlu0 %1103
    %1109 = vrot.lane.b32.xlu0 %v424, 32
    %v1110 = vpop.permute.xlu0 %1109
    %1111 = vrot.lane.b32.xlu0 %v428, 32
    %v1112 = vpop.permute.xlu0 %1111
    %1113 = vrot.lane.b32.xlu0 %v434, 32
    %v1114 = vpop.permute.xlu0 %1113
    %1115 = vrot.lane.b32.xlu0 %v438, 32
    %v1116 = vpop.permute.xlu0 %1115
    %v1121 = vcombine.low %v424, %v1098
    %v1122 = vcombine.high %v424, %v1098
    %v1124 = vunpack.c.l.s4 1983009808
    %v1125 = vunpack.c.0.s8 %v1124
    %v1126 = vlaneseq
    %v1127 = vshrl.u32 %v1126, 7
    %v1128 = vsub.s32 %v1125, %v1127
    %v1129 = vrot.slane %v1121, %v1128
    %v1131 = vunpack.c.l.s4 1983009808
    %v1132 = vunpack.c.0.s8 %v1131
    %v1133 = vlaneseq
    %v1134 = vshrl.u32 %v1133, 7
    %v1135 = vsub.s32 %v1132, %v1134
    %v1136 = vrot.slane %v1122, %v1135
    %v1137 = vcombine.low %v1086, %v1110
    %v1138 = vcombine.high %v1086, %v1110
    %v1140 = vunpack.c.l.s4 1983009808
    %v1141 = vunpack.c.0.s8 %v1140
    %v1142 = vlaneseq
    %v1143 = vshrl.u32 %v1142, 7
    %v1144 = vsub.s32 %v1141, %v1143
    %v1145 = vrot.slane %v1137, %v1144
    %v1147 = vunpack.c.l.s4 1983009808
    %v1148 = vunpack.c.0.s8 %v1147
    %v1149 = vlaneseq
    %v1150 = vshrl.u32 %v1149, 7
    %v1151 = vsub.s32 %v1148, %v1150
    %v1152 = vrot.slane %v1138, %v1151
    %v1153 = vcombine.low %v1129, %v1145
    %v1154 = vcombine.high %v1129, %v1145
    %v1156 = vunpack.c.l.s4 1934713408
    %v1157 = vunpack.c.0.s8 %v1156
    %v1158 = vlaneseq
    %v1159 = vshrl.u32 %v1158, 7
    %v1160 = vsub.s32 %v1157, %v1159
    %v1161 = vrot.slane %v1153, %v1160
    %v1163 = vunpack.c.l.s4 1934713408
    %v1164 = vunpack.c.0.s8 %v1163
    %v1165 = vlaneseq
    %v1166 = vshrl.u32 %v1165, 7
    %v1167 = vsub.s32 %v1164, %v1166
    %v1168 = vrot.slane %v1154, %v1167
    %v1169 = vcombine.low %v1136, %v1152
    %v1170 = vcombine.high %v1136, %v1152
    %v1172 = vunpack.c.l.s4 1934713408
    %v1173 = vunpack.c.0.s8 %v1172
    %v1174 = vlaneseq
    %v1175 = vshrl.u32 %v1174, 7
    %v1176 = vsub.s32 %v1173, %v1175
    %v1177 = vrot.slane %v1169, %v1176
    %v1179 = vunpack.c.l.s4 1934713408
    %v1180 = vunpack.c.0.s8 %v1179
    %v1181 = vlaneseq
    %v1182 = vshrl.u32 %v1181, 7
    %v1183 = vsub.s32 %v1180, %v1182
    %v1184 = vrot.slane %v1170, %v1183
    %v1185 = vcombine.high %v1161, 0.0
    %v1186 = vcombine.high %v1168, 0.0
    %v1187 = vcombine.high %v1177, 0.0
    %v1188 = vcombine.high %v1184, 0.0
    %v1189 = vcombine.low %v428, %v1100
    %v1190 = vcombine.high %v428, %v1100
    %v1192 = vunpack.c.l.s4 1983009808
    %v1193 = vunpack.c.0.s8 %v1192
    %v1194 = vlaneseq
    %v1195 = vshrl.u32 %v1194, 7
    %v1196 = vsub.s32 %v1193, %v1195
    %v1197 = vrot.slane %v1189, %v1196
    %v1199 = vunpack.c.l.s4 1983009808
    %v1200 = vunpack.c.0.s8 %v1199
    %v1201 = vlaneseq
    %v1202 = vshrl.u32 %v1201, 7
    %v1203 = vsub.s32 %v1200, %v1202
    %v1204 = vrot.slane %v1190, %v1203
    %v1205 = vcombine.low %v1088, %v1112
    %v1206 = vcombine.high %v1088, %v1112
    %v1208 = vunpack.c.l.s4 1983009808
    %v1209 = vunpack.c.0.s8 %v1208
    %v1210 = vlaneseq
    %v1211 = vshrl.u32 %v1210, 7
    %v1212 = vsub.s32 %v1209, %v1211
    %v1213 = vrot.slane %v1205, %v1212
    %v1215 = vunpack.c.l.s4 1983009808
    %v1216 = vunpack.c.0.s8 %v1215
    %v1217 = vlaneseq
    %v1218 = vshrl.u32 %v1217, 7
    %v1219 = vsub.s32 %v1216, %v1218
    %v1220 = vrot.slane %v1206, %v1219
    %v1221 = vcombine.low %v1197, %v1213
    %v1222 = vcombine.high %v1197, %v1213
    %v1224 = vunpack.c.l.s4 1934713408
    %v1225 = vunpack.c.0.s8 %v1224
    %v1226 = vlaneseq
    %v1227 = vshrl.u32 %v1226, 7
    %v1228 = vsub.s32 %v1225, %v1227
    %v1229 = vrot.slane %v1221, %v1228
    %v1231 = vunpack.c.l.s4 1934713408
    %v1232 = vunpack.c.0.s8 %v1231
    %v1233 = vlaneseq
    %v1234 = vshrl.u32 %v1233, 7
    %v1235 = vsub.s32 %v1232, %v1234
    %v1236 = vrot.slane %v1222, %v1235
    %v1237 = vcombine.low %v1204, %v1220
    %v1238 = vcombine.high %v1204, %v1220
    %v1240 = vunpack.c.l.s4 1934713408
    %v1241 = vunpack.c.0.s8 %v1240
    %v1242 = vlaneseq
    %v1243 = vshrl.u32 %v1242, 7
    %v1244 = vsub.s32 %v1241, %v1243
    %v1245 = vrot.slane %v1237, %v1244
    %v1247 = vunpack.c.l.s4 1934713408
    %v1248 = vunpack.c.0.s8 %v1247
    %v1249 = vlaneseq
    %v1250 = vshrl.u32 %v1249, 7
    %v1251 = vsub.s32 %v1248, %v1250
    %v1252 = vrot.slane %v1238, %v1251
    %v1253 = vcombine.high %v1229, 0.0
    %v1254 = vcombine.high %v1236, 0.0
    %v1255 = vcombine.high %v1245, 0.0
    %v1256 = vcombine.high %v1252, 0.0
    %v1257 = vcombine.low %v434, %v1102
    %v1258 = vcombine.high %v434, %v1102
    %v1260 = vunpack.c.l.s4 1983009808
    %v1261 = vunpack.c.0.s8 %v1260
    %v1262 = vlaneseq
    %v1263 = vshrl.u32 %v1262, 7
    %v1264 = vsub.s32 %v1261, %v1263
    %v1265 = vrot.slane %v1257, %v1264
    %v1267 = vunpack.c.l.s4 1983009808
    %v1268 = vunpack.c.0.s8 %v1267
    %v1269 = vlaneseq
    %v1270 = vshrl.u32 %v1269, 7
    %v1271 = vsub.s32 %v1268, %v1270
    %v1272 = vrot.slane %v1258, %v1271
    %v1273 = vcombine.low %v1090, %v1114
    %v1274 = vcombine.high %v1090, %v1114
    %v1276 = vunpack.c.l.s4 1983009808
    %v1277 = vunpack.c.0.s8 %v1276
    %v1278 = vlaneseq
    %v1279 = vshrl.u32 %v1278, 7
    %v1280 = vsub.s32 %v1277, %v1279
    %v1281 = vrot.slane %v1273, %v1280
    %v1283 = vunpack.c.l.s4 1983009808
    %v1284 = vunpack.c.0.s8 %v1283
    %v1285 = vlaneseq
    %v1286 = vshrl.u32 %v1285, 7
    %v1287 = vsub.s32 %v1284, %v1286
    %v1288 = vrot.slane %v1274, %v1287
    %v1289 = vcombine.low %v1265, %v1281
    %v1290 = vcombine.high %v1265, %v1281
    %v1292 = vunpack.c.l.s4 1934713408
    %v1293 = vunpack.c.0.s8 %v1292
    %v1294 = vlaneseq
    %v1295 = vshrl.u32 %v1294, 7
    %v1296 = vsub.s32 %v1293, %v1295
    %v1297 = vrot.slane %v1289, %v1296
    %v1299 = vunpack.c.l.s4 1934713408
    %v1300 = vunpack.c.0.s8 %v1299
    %v1301 = vlaneseq
    %v1302 = vshrl.u32 %v1301, 7
    %v1303 = vsub.s32 %v1300, %v1302
    %v1304 = vrot.slane %v1290, %v1303
    %v1305 = vcombine.low %v1272, %v1288
    %v1306 = vcombine.high %v1272, %v1288
    %v1308 = vunpack.c.l.s4 1934713408
    %v1309 = vunpack.c.0.s8 %v1308
    %v1310 = vlaneseq
    %v1311 = vshrl.u32 %v1310, 7
    %v1312 = vsub.s32 %v1309, %v1311
    %v1313 = vrot.slane %v1305, %v1312
    %v1315 = vunpack.c.l.s4 1934713408
    %v1316 = vunpack.c.0.s8 %v1315
    %v1317 = vlaneseq
    %v1318 = vshrl.u32 %v1317, 7
    %v1319 = vsub.s32 %v1316, %v1318
    %v1320 = vrot.slane %v1306, %v1319
    %v1321 = vcombine.high %v1297, 0.0
    %v1322 = vcombine.high %v1304, 0.0
    %v1323 = vcombine.high %v1313, 0.0
    %v1324 = vcombine.high %v1320, 0.0
    %v1325 = vcombine.low %v438, %v1104
    %v1326 = vcombine.high %v438, %v1104
    %v1328 = vunpack.c.l.s4 1983009808
    %v1329 = vunpack.c.0.s8 %v1328
    %v1330 = vlaneseq
    %v1331 = vshrl.u32 %v1330, 7
    %v1332 = vsub.s32 %v1329, %v1331
    %v1333 = vrot.slane %v1325, %v1332
    %v1335 = vunpack.c.l.s4 1983009808
    %v1336 = vunpack.c.0.s8 %v1335
    %v1337 = vlaneseq
    %v1338 = vshrl.u32 %v1337, 7
    %v1339 = vsub.s32 %v1336, %v1338
    %v1340 = vrot.slane %v1326, %v1339
    %v1341 = vcombine.low %v1092, %v1116
    %v1342 = vcombine.high %v1092, %v1116
    %v1344 = vunpack.c.l.s4 1983009808
    %v1345 = vunpack.c.0.s8 %v1344
    %v1346 = vlaneseq
    %v1347 = vshrl.u32 %v1346, 7
    %v1348 = vsub.s32 %v1345, %v1347
    %v1349 = vrot.slane %v1341, %v1348
    %v1351 = vunpack.c.l.s4 1983009808
    %v1352 = vunpack.c.0.s8 %v1351
    %v1353 = vlaneseq
    %v1354 = vshrl.u32 %v1353, 7
    %v1355 = vsub.s32 %v1352, %v1354
    %v1356 = vrot.slane %v1342, %v1355
    %v1357 = vcombine.low %v1333, %v1349
    %v1358 = vcombine.high %v1333, %v1349
    %v1360 = vunpack.c.l.s4 1934713408
    %v1361 = vunpack.c.0.s8 %v1360
    %v1362 = vlaneseq
    %v1363 = vshrl.u32 %v1362, 7
    %v1364 = vsub.s32 %v1361, %v1363
    %v1365 = vrot.slane %v1357, %v1364
    %v1367 = vunpack.c.l.s4 1934713408
    %v1368 = vunpack.c.0.s8 %v1367
    %v1369 = vlaneseq
    %v1370 = vshrl.u32 %v1369, 7
    %v1371 = vsub.s32 %v1368, %v1370
    %v1372 = vrot.slane %v1358, %v1371
    %v1373 = vcombine.low %v1340, %v1356
    %v1374 = vcombine.high %v1340, %v1356
    %v1376 = vunpack.c.l.s4 1934713408
    %v1377 = vunpack.c.0.s8 %v1376
    %v1378 = vlaneseq
    %v1379 = vshrl.u32 %v1378, 7
    %v1380 = vsub.s32 %v1377, %v1379
    %v1381 = vrot.slane %v1373, %v1380
    %v1383 = vunpack.c.l.s4 1934713408
    %v1384 = vunpack.c.0.s8 %v1383
    %v1385 = vlaneseq
    %v1386 = vshrl.u32 %v1385, 7
    %v1387 = vsub.s32 %v1384, %v1386
    %v1388 = vrot.slane %v1374, %v1387
    %v1389 = vcombine.high %v1365, 0.0
    %v1390 = vcombine.high %v1372, 0.0
    %v1391 = vcombine.high %v1381, 0.0
    %v1392 = vcombine.high %v1388, 0.0
    %v1393 = vcombine.low %v1161, %v1168
    %v1395 = vunpack.c.l.s4 1983009808
    %v1396 = vunpack.c.0.s8 %v1395
    %v1397 = vlaneseq
    %v1398 = vshrl.u32 %v1397, 7
    %v1399 = vsub.s32 %v1396, %v1398
    %v1400 = vrot.slane %v1393, %v1399
    %v1401 = vcombine.low %v1185, %v1186
    %v1403 = vunpack.c.l.s4 1983009808
    %v1404 = vunpack.c.0.s8 %v1403
    %v1405 = vlaneseq
    %v1406 = vshrl.u32 %v1405, 7
    %v1407 = vsub.s32 %v1404, %v1406
    %v1408 = vrot.slane %v1401, %v1407
    %v1409 = vcombine.low %v1177, %v1184
    %v1411 = vunpack.c.l.s4 1983009808
    %v1412 = vunpack.c.0.s8 %v1411
    %v1413 = vlaneseq
    %v1414 = vshrl.u32 %v1413, 7
    %v1415 = vsub.s32 %v1412, %v1414
    %v1416 = vrot.slane %v1409, %v1415
    %v1417 = vcombine.low %v1187, %v1188
    %v1419 = vunpack.c.l.s4 1983009808
    %v1420 = vunpack.c.0.s8 %v1419
    %v1421 = vlaneseq
    %v1422 = vshrl.u32 %v1421, 7
    %v1423 = vsub.s32 %v1420, %v1422
    %v1424 = vrot.slane %v1417, %v1423
    %v1425 = vcombine.low %v1400, %v1408
    %v1426 = vcombine.high %v1400, %v1408
    %v1428 = vunpack.c.l.s4 1934713408
    %v1429 = vunpack.c.0.s8 %v1428
    %v1430 = vlaneseq
    %v1431 = vshrl.u32 %v1430, 7
    %v1432 = vsub.s32 %v1429, %v1431
    %v1433 = vrot.slane %v1425, %v1432
    %v1435 = vunpack.c.l.s4 1934713408
    %v1436 = vunpack.c.0.s8 %v1435
    %v1437 = vlaneseq
    %v1438 = vshrl.u32 %v1437, 7
    %v1439 = vsub.s32 %v1436, %v1438
    %v1440 = vrot.slane %v1426, %v1439
    %v1441 = vcombine.low %v1416, %v1424
    %v1442 = vcombine.high %v1416, %v1424
    %v1444 = vunpack.c.l.s4 1934713408
    %v1445 = vunpack.c.0.s8 %v1444
    %v1446 = vlaneseq
    %v1447 = vshrl.u32 %v1446, 7
    %v1448 = vsub.s32 %v1445, %v1447
    %v1449 = vrot.slane %v1441, %v1448
    %v1451 = vunpack.c.l.s4 1934713408
    %v1452 = vunpack.c.0.s8 %v1451
    %v1453 = vlaneseq
    %v1454 = vshrl.u32 %v1453, 7
    %v1455 = vsub.s32 %v1452, %v1454
    %v1456 = vrot.slane %v1442, %v1455
    %v1457 = vcombine.low %v1433, %v1449
    %v1458 = vcombine.high %v1433, %v1449
    %v1459 = vcombine.low %v1440, %v1456
    %v1460 = vcombine.high %v1440, %v1456
    %v1461 = vcombine.low %v1229, %v1236
    %v1463 = vunpack.c.l.s4 1983009808
    %v1464 = vunpack.c.0.s8 %v1463
    %v1465 = vlaneseq
    %v1466 = vshrl.u32 %v1465, 7
    %v1467 = vsub.s32 %v1464, %v1466
    %v1468 = vrot.slane %v1461, %v1467
    %v1469 = vcombine.low %v1253, %v1254
    %v1471 = vunpack.c.l.s4 1983009808
    %v1472 = vunpack.c.0.s8 %v1471
    %v1473 = vlaneseq
    %v1474 = vshrl.u32 %v1473, 7
    %v1475 = vsub.s32 %v1472, %v1474
    %v1476 = vrot.slane %v1469, %v1475
    %v1477 = vcombine.low %v1245, %v1252
    %v1479 = vunpack.c.l.s4 1983009808
    %v1480 = vunpack.c.0.s8 %v1479
    %v1481 = vlaneseq
    %v1482 = vshrl.u32 %v1481, 7
    %v1483 = vsub.s32 %v1480, %v1482
    %v1484 = vrot.slane %v1477, %v1483
    %v1485 = vcombine.low %v1255, %v1256
    %v1487 = vunpack.c.l.s4 1983009808
    %v1488 = vunpack.c.0.s8 %v1487
    %v1489 = vlaneseq
    %v1490 = vshrl.u32 %v1489, 7
    %v1491 = vsub.s32 %v1488, %v1490
    %v1492 = vrot.slane %v1485, %v1491
    %v1493 = vcombine.low %v1468, %v1476
    %v1494 = vcombine.high %v1468, %v1476
    %v1496 = vunpack.c.l.s4 1934713408
    %v1497 = vunpack.c.0.s8 %v1496
    %v1498 = vlaneseq
    %v1499 = vshrl.u32 %v1498, 7
    %v1500 = vsub.s32 %v1497, %v1499
    %v1501 = vrot.slane %v1493, %v1500
    %v1503 = vunpack.c.l.s4 1934713408
    %v1504 = vunpack.c.0.s8 %v1503
    %v1505 = vlaneseq
    %v1506 = vshrl.u32 %v1505, 7
    %v1507 = vsub.s32 %v1504, %v1506
    %v1508 = vrot.slane %v1494, %v1507
    %v1509 = vcombine.low %v1484, %v1492
    %v1510 = vcombine.high %v1484, %v1492
    %v1512 = vunpack.c.l.s4 1934713408
    %v1513 = vunpack.c.0.s8 %v1512
    %v1514 = vlaneseq
    %v1515 = vshrl.u32 %v1514, 7
    %v1516 = vsub.s32 %v1513, %v1515
    %v1517 = vrot.slane %v1509, %v1516
    %v1519 = vunpack.c.l.s4 1934713408
    %v1520 = vunpack.c.0.s8 %v1519
    %v1521 = vlaneseq
    %v1522 = vshrl.u32 %v1521, 7
    %v1523 = vsub.s32 %v1520, %v1522
    %v1524 = vrot.slane %v1510, %v1523
    %v1525 = vcombine.low %v1501, %v1517
    %v1526 = vcombine.high %v1501, %v1517
    %v1527 = vcombine.low %v1508, %v1524
    %v1528 = vcombine.high %v1508, %v1524
    %v1529 = vcombine.low %v1297, %v1304
    %v1531 = vunpack.c.l.s4 1983009808
    %v1532 = vunpack.c.0.s8 %v1531
    %v1533 = vlaneseq
    %v1534 = vshrl.u32 %v1533, 7
    %v1535 = vsub.s32 %v1532, %v1534
    %v1536 = vrot.slane %v1529, %v1535
    %v1537 = vcombine.low %v1321, %v1322
    %v1539 = vunpack.c.l.s4 1983009808
    %v1540 = vunpack.c.0.s8 %v1539
    %v1541 = vlaneseq
    %v1542 = vshrl.u32 %v1541, 7
    %v1543 = vsub.s32 %v1540, %v1542
    %v1544 = vrot.slane %v1537, %v1543
    %v1545 = vcombine.low %v1313, %v1320
    %v1547 = vunpack.c.l.s4 1983009808
    %v1548 = vunpack.c.0.s8 %v1547
    %v1549 = vlaneseq
    %v1550 = vshrl.u32 %v1549, 7
    %v1551 = vsub.s32 %v1548, %v1550
    %v1552 = vrot.slane %v1545, %v1551
    %v1553 = vcombine.low %v1323, %v1324
    %v1555 = vunpack.c.l.s4 1983009808
    %v1556 = vunpack.c.0.s8 %v1555
    %v1557 = vlaneseq
    %v1558 = vshrl.u32 %v1557, 7
    %v1559 = vsub.s32 %v1556, %v1558
    %v1560 = vrot.slane %v1553, %v1559
    %v1561 = vcombine.low %v1536, %v1544
    %v1562 = vcombine.high %v1536, %v1544
    %v1564 = vunpack.c.l.s4 1934713408
    %v1565 = vunpack.c.0.s8 %v1564
    %v1566 = vlaneseq
    %v1567 = vshrl.u32 %v1566, 7
    %v1568 = vsub.s32 %v1565, %v1567
    %v1569 = vrot.slane %v1561, %v1568
    %v1571 = vunpack.c.l.s4 1934713408
    %v1572 = vunpack.c.0.s8 %v1571
    %v1573 = vlaneseq
    %v1574 = vshrl.u32 %v1573, 7
    %v1575 = vsub.s32 %v1572, %v1574
    %v1576 = vrot.slane %v1562, %v1575
    %v1577 = vcombine.low %v1552, %v1560
    %v1578 = vcombine.high %v1552, %v1560
    %v1580 = vunpack.c.l.s4 1934713408
    %v1581 = vunpack.c.0.s8 %v1580
    %v1582 = vlaneseq
    %v1583 = vshrl.u32 %v1582, 7
    %v1584 = vsub.s32 %v1581, %v1583
    %v1585 = vrot.slane %v1577, %v1584
    %v1587 = vunpack.c.l.s4 1934713408
    %v1588 = vunpack.c.0.s8 %v1587
    %v1589 = vlaneseq
    %v1590 = vshrl.u32 %v1589, 7
    %v1591 = vsub.s32 %v1588, %v1590
    %v1592 = vrot.slane %v1578, %v1591
    %v1593 = vcombine.low %v1569, %v1585
    %v1594 = vcombine.high %v1569, %v1585
    %v1595 = vcombine.low %v1576, %v1592
    %v1596 = vcombine.high %v1576, %v1592
    %v1597 = vcombine.low %v1365, %v1372
    %v1599 = vunpack.c.l.s4 1983009808
    %v1600 = vunpack.c.0.s8 %v1599
    %v1601 = vlaneseq
    %v1602 = vshrl.u32 %v1601, 7
    %v1603 = vsub.s32 %v1600, %v1602
    %v1604 = vrot.slane %v1597, %v1603
    %v1605 = vcombine.low %v1389, %v1390
    %v1607 = vunpack.c.l.s4 1983009808
    %v1608 = vunpack.c.0.s8 %v1607
    %v1609 = vlaneseq
    %v1610 = vshrl.u32 %v1609, 7
    %v1611 = vsub.s32 %v1608, %v1610
    %v1612 = vrot.slane %v1605, %v1611
    %v1613 = vcombine.low %v1381, %v1388
    %v1615 = vunpack.c.l.s4 1983009808
    %v1616 = vunpack.c.0.s8 %v1615
    %v1617 = vlaneseq
    %v1618 = vshrl.u32 %v1617, 7
    %v1619 = vsub.s32 %v1616, %v1618
    %v1620 = vrot.slane %v1613, %v1619
    %v1621 = vcombine.low %v1391, %v1392
    %v1623 = vunpack.c.l.s4 1983009808
    %v1624 = vunpack.c.0.s8 %v1623
    %v1625 = vlaneseq
    %v1626 = vshrl.u32 %v1625, 7
    %v1627 = vsub.s32 %v1624, %v1626
    %v1628 = vrot.slane %v1621, %v1627
    %v1629 = vcombine.low %v1604, %v1612
    %v1630 = vcombine.high %v1604, %v1612
    %v1632 = vunpack.c.l.s4 1934713408
    %v1633 = vunpack.c.0.s8 %v1632
    %v1634 = vlaneseq
    %v1635 = vshrl.u32 %v1634, 7
    %v1636 = vsub.s32 %v1633, %v1635
    %v1637 = vrot.slane %v1629, %v1636
    %v1639 = vunpack.c.l.s4 1934713408
    %v1640 = vunpack.c.0.s8 %v1639
    %v1641 = vlaneseq
    %v1642 = vshrl.u32 %v1641, 7
    %v1643 = vsub.s32 %v1640, %v1642
    %v1644 = vrot.slane %v1630, %v1643
    %v1645 = vcombine.low %v1620, %v1628
    %v1646 = vcombine.high %v1620, %v1628
    %v1648 = vunpack.c.l.s4 1934713408
    %v1649 = vunpack.c.0.s8 %v1648
    %v1650 = vlaneseq
    %v1651 = vshrl.u32 %v1650, 7
    %v1652 = vsub.s32 %v1649, %v1651
    %v1653 = vrot.slane %v1645, %v1652
    %v1655 = vunpack.c.l.s4 1934713408
    %v1656 = vunpack.c.0.s8 %v1655
    %v1657 = vlaneseq
    %v1658 = vshrl.u32 %v1657, 7
    %v1659 = vsub.s32 %v1656, %v1658
    %v1660 = vrot.slane %v1646, %v1659
    %v1661 = vcombine.low %v1637, %v1653
    %v1662 = vcombine.high %v1637, %v1653
    %v1663 = vcombine.low %v1644, %v1660
    %v1664 = vcombine.high %v1644, %v1660
    %v1665 = vpack.c.bf16 %v1525, %v1457
    %v1666 = vpack.c.bf16 %v1526, %v1458
    %v1667 = vpack.c.bf16 %v1527, %v1459
    %v1668 = vpack.c.bf16 %v1528, %v1460
    %v1669 = vpack.c.bf16 %v1661, %v1593
    %v1670 = vpack.c.bf16 %v1662, %v1594
    %v1671 = vpack.c.bf16 %v1663, %v1595
    %v1672 = vpack.c.bf16 %v1664, %v1596
    %1677 = vrot.lane.b32.xlu0 %v475, 96
    %v1678 = vpop.permute.xlu0 %1677
    %1679 = vrot.lane.b32.xlu0 %v478, 96
    %v1680 = vpop.permute.xlu0 %1679
    %1681 = vrot.lane.b32.xlu0 %v483, 96
    %v1682 = vpop.permute.xlu0 %1681
    %1683 = vrot.lane.b32.xlu0 %v486, 96
    %v1684 = vpop.permute.xlu0 %1683
    %1689 = vrot.lane.b32.xlu0 %v475, 64
    %v1690 = vpop.permute.xlu0 %1689
    %1691 = vrot.lane.b32.xlu0 %v478, 64
    %v1692 = vpop.permute.xlu0 %1691
    %1693 = vrot.lane.b32.xlu0 %v483, 64
    %v1694 = vpop.permute.xlu0 %1693
    %1695 = vrot.lane.b32.xlu0 %v486, 64
    %v1696 = vpop.permute.xlu0 %1695
    %1701 = vrot.lane.b32.xlu0 %v475, 32
    %v1702 = vpop.permute.xlu0 %1701
    %1703 = vrot.lane.b32.xlu0 %v478, 32
    %v1704 = vpop.permute.xlu0 %1703
    %1705 = vrot.lane.b32.xlu0 %v483, 32
    %v1706 = vpop.permute.xlu0 %1705
    %1707 = vrot.lane.b32.xlu0 %v486, 32
    %v1708 = vpop.permute.xlu0 %1707
    %v1713 = vcombine.low %v475, %v1690
    %v1714 = vcombine.high %v475, %v1690
    %v1716 = vunpack.c.l.s4 1983009808
    %v1717 = vunpack.c.0.s8 %v1716
    %v1718 = vlaneseq
    %v1719 = vshrl.u32 %v1718, 7
    %v1720 = vsub.s32 %v1717, %v1719
    %v1721 = vrot.slane %v1713, %v1720
    %v1723 = vunpack.c.l.s4 1983009808
    %v1724 = vunpack.c.0.s8 %v1723
    %v1725 = vlaneseq
    %v1726 = vshrl.u32 %v1725, 7
    %v1727 = vsub.s32 %v1724, %v1726
    %v1728 = vrot.slane %v1714, %v1727
    %v1729 = vcombine.low %v1678, %v1702
    %v1730 = vcombine.high %v1678, %v1702
    %v1732 = vunpack.c.l.s4 1983009808
    %v1733 = vunpack.c.0.s8 %v1732
    %v1734 = vlaneseq
    %v1735 = vshrl.u32 %v1734, 7
    %v1736 = vsub.s32 %v1733, %v1735
    %v1737 = vrot.slane %v1729, %v1736
    %v1739 = vunpack.c.l.s4 1983009808
    %v1740 = vunpack.c.0.s8 %v1739
    %v1741 = vlaneseq
    %v1742 = vshrl.u32 %v1741, 7
    %v1743 = vsub.s32 %v1740, %v1742
    %v1744 = vrot.slane %v1730, %v1743
    %v1745 = vcombine.low %v1721, %v1737
    %v1746 = vcombine.high %v1721, %v1737
    %v1748 = vunpack.c.l.s4 1934713408
    %v1749 = vunpack.c.0.s8 %v1748
    %v1750 = vlaneseq
    %v1751 = vshrl.u32 %v1750, 7
    %v1752 = vsub.s32 %v1749, %v1751
    %v1753 = vrot.slane %v1745, %v1752
    %v1755 = vunpack.c.l.s4 1934713408
    %v1756 = vunpack.c.0.s8 %v1755
    %v1757 = vlaneseq
    %v1758 = vshrl.u32 %v1757, 7
    %v1759 = vsub.s32 %v1756, %v1758
    %v1760 = vrot.slane %v1746, %v1759
    %v1761 = vcombine.low %v1728, %v1744
    %v1762 = vcombine.high %v1728, %v1744
    %v1764 = vunpack.c.l.s4 1934713408
    %v1765 = vunpack.c.0.s8 %v1764
    %v1766 = vlaneseq
    %v1767 = vshrl.u32 %v1766, 7
    %v1768 = vsub.s32 %v1765, %v1767
    %v1769 = vrot.slane %v1761, %v1768
    %v1771 = vunpack.c.l.s4 1934713408
    %v1772 = vunpack.c.0.s8 %v1771
    %v1773 = vlaneseq
    %v1774 = vshrl.u32 %v1773, 7
    %v1775 = vsub.s32 %v1772, %v1774
    %v1776 = vrot.slane %v1762, %v1775
    %v1777 = vcombine.high %v1753, 0.0
    %v1778 = vcombine.high %v1760, 0.0
    %v1779 = vcombine.high %v1769, 0.0
    %v1780 = vcombine.high %v1776, 0.0
    %v1781 = vcombine.low %v478, %v1692
    %v1782 = vcombine.high %v478, %v1692
    %v1784 = vunpack.c.l.s4 1983009808
    %v1785 = vunpack.c.0.s8 %v1784
    %v1786 = vlaneseq
    %v1787 = vshrl.u32 %v1786, 7
    %v1788 = vsub.s32 %v1785, %v1787
    %v1789 = vrot.slane %v1781, %v1788
    %v1791 = vunpack.c.l.s4 1983009808
    %v1792 = vunpack.c.0.s8 %v1791
    %v1793 = vlaneseq
    %v1794 = vshrl.u32 %v1793, 7
    %v1795 = vsub.s32 %v1792, %v1794
    %v1796 = vrot.slane %v1782, %v1795
    %v1797 = vcombine.low %v1680, %v1704
    %v1798 = vcombine.high %v1680, %v1704
    %v1800 = vunpack.c.l.s4 1983009808
    %v1801 = vunpack.c.0.s8 %v1800
    %v1802 = vlaneseq
    %v1803 = vshrl.u32 %v1802, 7
    %v1804 = vsub.s32 %v1801, %v1803
    %v1805 = vrot.slane %v1797, %v1804
    %v1807 = vunpack.c.l.s4 1983009808
    %v1808 = vunpack.c.0.s8 %v1807
    %v1809 = vlaneseq
    %v1810 = vshrl.u32 %v1809, 7
    %v1811 = vsub.s32 %v1808, %v1810
    %v1812 = vrot.slane %v1798, %v1811
    %v1813 = vcombine.low %v1789, %v1805
    %v1814 = vcombine.high %v1789, %v1805
    %v1816 = vunpack.c.l.s4 1934713408
    %v1817 = vunpack.c.0.s8 %v1816
    %v1818 = vlaneseq
    %v1819 = vshrl.u32 %v1818, 7
    %v1820 = vsub.s32 %v1817, %v1819
    %v1821 = vrot.slane %v1813, %v1820
    %v1823 = vunpack.c.l.s4 1934713408
    %v1824 = vunpack.c.0.s8 %v1823
    %v1825 = vlaneseq
    %v1826 = vshrl.u32 %v1825, 7
    %v1827 = vsub.s32 %v1824, %v1826
    %v1828 = vrot.slane %v1814, %v1827
    %v1829 = vcombine.low %v1796, %v1812
    %v1830 = vcombine.high %v1796, %v1812
    %v1832 = vunpack.c.l.s4 1934713408
    %v1833 = vunpack.c.0.s8 %v1832
    %v1834 = vlaneseq
    %v1835 = vshrl.u32 %v1834, 7
    %v1836 = vsub.s32 %v1833, %v1835
    %v1837 = vrot.slane %v1829, %v1836
    %v1839 = vunpack.c.l.s4 1934713408
    %v1840 = vunpack.c.0.s8 %v1839
    %v1841 = vlaneseq
    %v1842 = vshrl.u32 %v1841, 7
    %v1843 = vsub.s32 %v1840, %v1842
    %v1844 = vrot.slane %v1830, %v1843
    %v1845 = vcombine.high %v1821, 0.0
    %v1846 = vcombine.high %v1828, 0.0
    %v1847 = vcombine.high %v1837, 0.0
    %v1848 = vcombine.high %v1844, 0.0
    %v1849 = vcombine.low %v483, %v1694
    %v1850 = vcombine.high %v483, %v1694
    %v1852 = vunpack.c.l.s4 1983009808
    %v1853 = vunpack.c.0.s8 %v1852
    %v1854 = vlaneseq
    %v1855 = vshrl.u32 %v1854, 7
    %v1856 = vsub.s32 %v1853, %v1855
    %v1857 = vrot.slane %v1849, %v1856
    %v1859 = vunpack.c.l.s4 1983009808
    %v1860 = vunpack.c.0.s8 %v1859
    %v1861 = vlaneseq
    %v1862 = vshrl.u32 %v1861, 7
    %v1863 = vsub.s32 %v1860, %v1862
    %v1864 = vrot.slane %v1850, %v1863
    %v1865 = vcombine.low %v1682, %v1706
    %v1866 = vcombine.high %v1682, %v1706
    %v1868 = vunpack.c.l.s4 1983009808
    %v1869 = vunpack.c.0.s8 %v1868
    %v1870 = vlaneseq
    %v1871 = vshrl.u32 %v1870, 7
    %v1872 = vsub.s32 %v1869, %v1871
    %v1873 = vrot.slane %v1865, %v1872
    %v1875 = vunpack.c.l.s4 1983009808
    %v1876 = vunpack.c.0.s8 %v1875
    %v1877 = vlaneseq
    %v1878 = vshrl.u32 %v1877, 7
    %v1879 = vsub.s32 %v1876, %v1878
    %v1880 = vrot.slane %v1866, %v1879
    %v1881 = vcombine.low %v1857, %v1873
    %v1882 = vcombine.high %v1857, %v1873
    %v1884 = vunpack.c.l.s4 1934713408
    %v1885 = vunpack.c.0.s8 %v1884
    %v1886 = vlaneseq
    %v1887 = vshrl.u32 %v1886, 7
    %v1888 = vsub.s32 %v1885, %v1887
    %v1889 = vrot.slane %v1881, %v1888
    %v1891 = vunpack.c.l.s4 1934713408
    %v1892 = vunpack.c.0.s8 %v1891
    %v1893 = vlaneseq
    %v1894 = vshrl.u32 %v1893, 7
    %v1895 = vsub.s32 %v1892, %v1894
    %v1896 = vrot.slane %v1882, %v1895
    %v1897 = vcombine.low %v1864, %v1880
    %v1898 = vcombine.high %v1864, %v1880
    %v1900 = vunpack.c.l.s4 1934713408
    %v1901 = vunpack.c.0.s8 %v1900
    %v1902 = vlaneseq
    %v1903 = vshrl.u32 %v1902, 7
    %v1904 = vsub.s32 %v1901, %v1903
    %v1905 = vrot.slane %v1897, %v1904
    %v1907 = vunpack.c.l.s4 1934713408
    %v1908 = vunpack.c.0.s8 %v1907
    %v1909 = vlaneseq
    %v1910 = vshrl.u32 %v1909, 7
    %v1911 = vsub.s32 %v1908, %v1910
    %v1912 = vrot.slane %v1898, %v1911
    %v1913 = vcombine.high %v1889, 0.0
    %v1914 = vcombine.high %v1896, 0.0
    %v1915 = vcombine.high %v1905, 0.0
    %v1916 = vcombine.high %v1912, 0.0
    %v1917 = vcombine.low %v486, %v1696
    %v1918 = vcombine.high %v486, %v1696
    %v1920 = vunpack.c.l.s4 1983009808
    %v1921 = vunpack.c.0.s8 %v1920
    %v1922 = vlaneseq
    %v1923 = vshrl.u32 %v1922, 7
    %v1924 = vsub.s32 %v1921, %v1923
    %v1925 = vrot.slane %v1917, %v1924
    %v1927 = vunpack.c.l.s4 1983009808
    %v1928 = vunpack.c.0.s8 %v1927
    %v1929 = vlaneseq
    %v1930 = vshrl.u32 %v1929, 7
    %v1931 = vsub.s32 %v1928, %v1930
    %v1932 = vrot.slane %v1918, %v1931
    %v1933 = vcombine.low %v1684, %v1708
    %v1934 = vcombine.high %v1684, %v1708
    %v1936 = vunpack.c.l.s4 1983009808
    %v1937 = vunpack.c.0.s8 %v1936
    %v1938 = vlaneseq
    %v1939 = vshrl.u32 %v1938, 7
    %v1940 = vsub.s32 %v1937, %v1939
    %v1941 = vrot.slane %v1933, %v1940
    %v1943 = vunpack.c.l.s4 1983009808
    %v1944 = vunpack.c.0.s8 %v1943
    %v1945 = vlaneseq
    %v1946 = vshrl.u32 %v1945, 7
    %v1947 = vsub.s32 %v1944, %v1946
    %v1948 = vrot.slane %v1934, %v1947
    %v1949 = vcombine.low %v1925, %v1941
    %v1950 = vcombine.high %v1925, %v1941
    %v1952 = vunpack.c.l.s4 1934713408
    %v1953 = vunpack.c.0.s8 %v1952
    %v1954 = vlaneseq
    %v1955 = vshrl.u32 %v1954, 7
    %v1956 = vsub.s32 %v1953, %v1955
    %v1957 = vrot.slane %v1949, %v1956
    %v1959 = vunpack.c.l.s4 1934713408
    %v1960 = vunpack.c.0.s8 %v1959
    %v1961 = vlaneseq
    %v1962 = vshrl.u32 %v1961, 7
    %v1963 = vsub.s32 %v1960, %v1962
    %v1964 = vrot.slane %v1950, %v1963
    %v1965 = vcombine.low %v1932, %v1948
    %v1966 = vcombine.high %v1932, %v1948
    %v1968 = vunpack.c.l.s4 1934713408
    %v1969 = vunpack.c.0.s8 %v1968
    %v1970 = vlaneseq
    %v1971 = vshrl.u32 %v1970, 7
    %v1972 = vsub.s32 %v1969, %v1971
    %v1973 = vrot.slane %v1965, %v1972
    %v1975 = vunpack.c.l.s4 1934713408
    %v1976 = vunpack.c.0.s8 %v1975
    %v1977 = vlaneseq
    %v1978 = vshrl.u32 %v1977, 7
    %v1979 = vsub.s32 %v1976, %v1978
    %v1980 = vrot.slane %v1966, %v1979
    %v1981 = vcombine.high %v1957, 0.0
    %v1982 = vcombine.high %v1964, 0.0
    %v1983 = vcombine.high %v1973, 0.0
    %v1984 = vcombine.high %v1980, 0.0
    %v1985 = vcombine.low %v1753, %v1760
    %v1987 = vunpack.c.l.s4 1983009808
    %v1988 = vunpack.c.0.s8 %v1987
    %v1989 = vlaneseq
    %v1990 = vshrl.u32 %v1989, 7
    %v1991 = vsub.s32 %v1988, %v1990
    %v1992 = vrot.slane %v1985, %v1991
    %v1993 = vcombine.low %v1777, %v1778
    %v1995 = vunpack.c.l.s4 1983009808
    %v1996 = vunpack.c.0.s8 %v1995
    %v1997 = vlaneseq
    %v1998 = vshrl.u32 %v1997, 7
    %v1999 = vsub.s32 %v1996, %v1998
    %v2000 = vrot.slane %v1993, %v1999
    %v2001 = vcombine.low %v1769, %v1776
    %v2003 = vunpack.c.l.s4 1983009808
    %v2004 = vunpack.c.0.s8 %v2003
    %v2005 = vlaneseq
    %v2006 = vshrl.u32 %v2005, 7
    %v2007 = vsub.s32 %v2004, %v2006
    %v2008 = vrot.slane %v2001, %v2007
    %v2009 = vcombine.low %v1779, %v1780
    %v2011 = vunpack.c.l.s4 1983009808
    %v2012 = vunpack.c.0.s8 %v2011
    %v2013 = vlaneseq
    %v2014 = vshrl.u32 %v2013, 7
    %v2015 = vsub.s32 %v2012, %v2014
    %v2016 = vrot.slane %v2009, %v2015
    %v2017 = vcombine.low %v1992, %v2000
    %v2018 = vcombine.high %v1992, %v2000
    %v2020 = vunpack.c.l.s4 1934713408
    %v2021 = vunpack.c.0.s8 %v2020
    %v2022 = vlaneseq
    %v2023 = vshrl.u32 %v2022, 7
    %v2024 = vsub.s32 %v2021, %v2023
    %v2025 = vrot.slane %v2017, %v2024
    %v2027 = vunpack.c.l.s4 1934713408
    %v2028 = vunpack.c.0.s8 %v2027
    %v2029 = vlaneseq
    %v2030 = vshrl.u32 %v2029, 7
    %v2031 = vsub.s32 %v2028, %v2030
    %v2032 = vrot.slane %v2018, %v2031
    %v2033 = vcombine.low %v2008, %v2016
    %v2034 = vcombine.high %v2008, %v2016
    %v2036 = vunpack.c.l.s4 1934713408
    %v2037 = vunpack.c.0.s8 %v2036
    %v2038 = vlaneseq
    %v2039 = vshrl.u32 %v2038, 7
    %v2040 = vsub.s32 %v2037, %v2039
    %v2041 = vrot.slane %v2033, %v2040
    %v2043 = vunpack.c.l.s4 1934713408
    %v2044 = vunpack.c.0.s8 %v2043
    %v2045 = vlaneseq
    %v2046 = vshrl.u32 %v2045, 7
    %v2047 = vsub.s32 %v2044, %v2046
    %v2048 = vrot.slane %v2034, %v2047
    %v2049 = vcombine.low %v2025, %v2041
    %v2050 = vcombine.high %v2025, %v2041
    %v2051 = vcombine.low %v2032, %v2048
    %v2052 = vcombine.high %v2032, %v2048
    %v2053 = vcombine.low %v1821, %v1828
    %v2055 = vunpack.c.l.s4 1983009808
    %v2056 = vunpack.c.0.s8 %v2055
    %v2057 = vlaneseq
    %v2058 = vshrl.u32 %v2057, 7
    %v2059 = vsub.s32 %v2056, %v2058
    %v2060 = vrot.slane %v2053, %v2059
    %v2061 = vcombine.low %v1845, %v1846
    %v2063 = vunpack.c.l.s4 1983009808
    %v2064 = vunpack.c.0.s8 %v2063
    %v2065 = vlaneseq
    %v2066 = vshrl.u32 %v2065, 7
    %v2067 = vsub.s32 %v2064, %v2066
    %v2068 = vrot.slane %v2061, %v2067
    %v2069 = vcombine.low %v1837, %v1844
    %v2071 = vunpack.c.l.s4 1983009808
    %v2072 = vunpack.c.0.s8 %v2071
    %v2073 = vlaneseq
    %v2074 = vshrl.u32 %v2073, 7
    %v2075 = vsub.s32 %v2072, %v2074
    %v2076 = vrot.slane %v2069, %v2075
    %v2077 = vcombine.low %v1847, %v1848
    %v2079 = vunpack.c.l.s4 1983009808
    %v2080 = vunpack.c.0.s8 %v2079
    %v2081 = vlaneseq
    %v2082 = vshrl.u32 %v2081, 7
    %v2083 = vsub.s32 %v2080, %v2082
    %v2084 = vrot.slane %v2077, %v2083
    %v2085 = vcombine.low %v2060, %v2068
    %v2086 = vcombine.high %v2060, %v2068
    %v2088 = vunpack.c.l.s4 1934713408
    %v2089 = vunpack.c.0.s8 %v2088
    %v2090 = vlaneseq
    %v2091 = vshrl.u32 %v2090, 7
    %v2092 = vsub.s32 %v2089, %v2091
    %v2093 = vrot.slane %v2085, %v2092
    %v2095 = vunpack.c.l.s4 1934713408
    %v2096 = vunpack.c.0.s8 %v2095
    %v2097 = vlaneseq
    %v2098 = vshrl.u32 %v2097, 7
    %v2099 = vsub.s32 %v2096, %v2098
    %v2100 = vrot.slane %v2086, %v2099
    %v2101 = vcombine.low %v2076, %v2084
    %v2102 = vcombine.high %v2076, %v2084
    %v2104 = vunpack.c.l.s4 1934713408
    %v2105 = vunpack.c.0.s8 %v2104
    %v2106 = vlaneseq
    %v2107 = vshrl.u32 %v2106, 7
    %v2108 = vsub.s32 %v2105, %v2107
    %v2109 = vrot.slane %v2101, %v2108
    %v2111 = vunpack.c.l.s4 1934713408
    %v2112 = vunpack.c.0.s8 %v2111
    %v2113 = vlaneseq
    %v2114 = vshrl.u32 %v2113, 7
    %v2115 = vsub.s32 %v2112, %v2114
    %v2116 = vrot.slane %v2102, %v2115
    %v2117 = vcombine.low %v2093, %v2109
    %v2118 = vcombine.high %v2093, %v2109
    %v2119 = vcombine.low %v2100, %v2116
    %v2120 = vcombine.high %v2100, %v2116
    %v2121 = vcombine.low %v1889, %v1896
    %v2123 = vunpack.c.l.s4 1983009808
    %v2124 = vunpack.c.0.s8 %v2123
    %v2125 = vlaneseq
    %v2126 = vshrl.u32 %v2125, 7
    %v2127 = vsub.s32 %v2124, %v2126
    %v2128 = vrot.slane %v2121, %v2127
    %v2129 = vcombine.low %v1913, %v1914
    %v2131 = vunpack.c.l.s4 1983009808
    %v2132 = vunpack.c.0.s8 %v2131
    %v2133 = vlaneseq
    %v2134 = vshrl.u32 %v2133, 7
    %v2135 = vsub.s32 %v2132, %v2134
    %v2136 = vrot.slane %v2129, %v2135
    %v2137 = vcombine.low %v1905, %v1912
    %v2139 = vunpack.c.l.s4 1983009808
    %v2140 = vunpack.c.0.s8 %v2139
    %v2141 = vlaneseq
    %v2142 = vshrl.u32 %v2141, 7
    %v2143 = vsub.s32 %v2140, %v2142
    %v2144 = vrot.slane %v2137, %v2143
    %v2145 = vcombine.low %v1915, %v1916
    %v2147 = vunpack.c.l.s4 1983009808
    %v2148 = vunpack.c.0.s8 %v2147
    %v2149 = vlaneseq
    %v2150 = vshrl.u32 %v2149, 7
    %v2151 = vsub.s32 %v2148, %v2150
    %v2152 = vrot.slane %v2145, %v2151
    %v2153 = vcombine.low %v2128, %v2136
    %v2154 = vcombine.high %v2128, %v2136
    %v2156 = vunpack.c.l.s4 1934713408
    %v2157 = vunpack.c.0.s8 %v2156
    %v2158 = vlaneseq
    %v2159 = vshrl.u32 %v2158, 7
    %v2160 = vsub.s32 %v2157, %v2159
    %v2161 = vrot.slane %v2153, %v2160
    %v2163 = vunpack.c.l.s4 1934713408
    %v2164 = vunpack.c.0.s8 %v2163
    %v2165 = vlaneseq
    %v2166 = vshrl.u32 %v2165, 7
    %v2167 = vsub.s32 %v2164, %v2166
    %v2168 = vrot.slane %v2154, %v2167
    %v2169 = vcombine.low %v2144, %v2152
    %v2170 = vcombine.high %v2144, %v2152
    %v2172 = vunpack.c.l.s4 1934713408
    %v2173 = vunpack.c.0.s8 %v2172
    %v2174 = vlaneseq
    %v2175 = vshrl.u32 %v2174, 7
    %v2176 = vsub.s32 %v2173, %v2175
    %v2177 = vrot.slane %v2169, %v2176
    %v2179 = vunpack.c.l.s4 1934713408
    %v2180 = vunpack.c.0.s8 %v2179
    %v2181 = vlaneseq
    %v2182 = vshrl.u32 %v2181, 7
    %v2183 = vsub.s32 %v2180, %v2182
    %v2184 = vrot.slane %v2170, %v2183
    %v2185 = vcombine.low %v2161, %v2177
    %v2186 = vcombine.high %v2161, %v2177
    %v2187 = vcombine.low %v2168, %v2184
    %v2188 = vcombine.high %v2168, %v2184
    %v2189 = vcombine.low %v1957, %v1964
    %v2191 = vunpack.c.l.s4 1983009808
    %v2192 = vunpack.c.0.s8 %v2191
    %v2193 = vlaneseq
    %v2194 = vshrl.u32 %v2193, 7
    %v2195 = vsub.s32 %v2192, %v2194
    %v2196 = vrot.slane %v2189, %v2195
    %v2197 = vcombine.low %v1981, %v1982
    %v2199 = vunpack.c.l.s4 1983009808
    %v2200 = vunpack.c.0.s8 %v2199
    %v2201 = vlaneseq
    %v2202 = vshrl.u32 %v2201, 7
    %v2203 = vsub.s32 %v2200, %v2202
    %v2204 = vrot.slane %v2197, %v2203
    %v2205 = vcombine.low %v1973, %v1980
    %v2207 = vunpack.c.l.s4 1983009808
    %v2208 = vunpack.c.0.s8 %v2207
    %v2209 = vlaneseq
    %v2210 = vshrl.u32 %v2209, 7
    %v2211 = vsub.s32 %v2208, %v2210
    %v2212 = vrot.slane %v2205, %v2211
    %v2213 = vcombine.low %v1983, %v1984
    %v2215 = vunpack.c.l.s4 1983009808
    %v2216 = vunpack.c.0.s8 %v2215
    %v2217 = vlaneseq
    %v2218 = vshrl.u32 %v2217, 7
    %v2219 = vsub.s32 %v2216, %v2218
    %v2220 = vrot.slane %v2213, %v2219
    %v2221 = vcombine.low %v2196, %v2204
    %v2222 = vcombine.high %v2196, %v2204
    %v2224 = vunpack.c.l.s4 1934713408
    %v2225 = vunpack.c.0.s8 %v2224
    %v2226 = vlaneseq
    %v2227 = vshrl.u32 %v2226, 7
    %v2228 = vsub.s32 %v2225, %v2227
    %v2229 = vrot.slane %v2221, %v2228
    %v2231 = vunpack.c.l.s4 1934713408
    %v2232 = vunpack.c.0.s8 %v2231
    %v2233 = vlaneseq
    %v2234 = vshrl.u32 %v2233, 7
    %v2235 = vsub.s32 %v2232, %v2234
    %v2236 = vrot.slane %v2222, %v2235
    %v2237 = vcombine.low %v2212, %v2220
    %v2238 = vcombine.high %v2212, %v2220
    %v2240 = vunpack.c.l.s4 1934713408
    %v2241 = vunpack.c.0.s8 %v2240
    %v2242 = vlaneseq
    %v2243 = vshrl.u32 %v2242, 7
    %v2244 = vsub.s32 %v2241, %v2243
    %v2245 = vrot.slane %v2237, %v2244
    %v2247 = vunpack.c.l.s4 1934713408
    %v2248 = vunpack.c.0.s8 %v2247
    %v2249 = vlaneseq
    %v2250 = vshrl.u32 %v2249, 7
    %v2251 = vsub.s32 %v2248, %v2250
    %v2252 = vrot.slane %v2238, %v2251
    %v2253 = vcombine.low %v2229, %v2245
    %v2254 = vcombine.high %v2229, %v2245
    %v2255 = vcombine.low %v2236, %v2252
    %v2256 = vcombine.high %v2236, %v2252
    %v2257 = vpack.c.bf16 %v2117, %v2049
    %v2258 = vpack.c.bf16 %v2118, %v2050
    %v2259 = vpack.c.bf16 %v2119, %v2051
    %v2260 = vpack.c.bf16 %v2120, %v2052
    %v2261 = vpack.c.bf16 %v2253, %v2185
    %v2262 = vpack.c.bf16 %v2254, %v2186
    %v2263 = vpack.c.bf16 %v2255, %v2187
    %v2264 = vpack.c.bf16 %v2256, %v2188
    %vm2265 = vcmask 261120
    %v2267 = vsel %vm2265, %v1073, 0
    %v2270 = vsel %vm2265, %v1665, 0
    %2272 = vmatprep.subr.bf16.mxu0 0
    %2273 = vmatpush1.bf16.xpose.msra.mxu0 %v2270
    %2274 = vmatprep.subr.bf16.mxu0 0
    %2275 = vmatpush1.bf16.xpose.msra.mxu0 0
    %2276 = vmatprep.subr.bf16.mxu0 0
    %2277 = vmatpush1.bf16.xpose.msra.mxu0 0
    %2278 = vmatprep.subr.bf16.mxu0 0
    %2279 = vmatpush1.bf16.xpose.msra.mxu0 0
    %2280 = vmatprep.subr.bf16.mxu0 0
    %2281 = vmatpush1.bf16.xpose.msra.mxu0 0
    %2282 = vmatprep.subr.bf16.mxu0 0
    %2283 = vmatpush1.bf16.xpose.msra.mxu0 0
    %2284 = vmatprep.subr.bf16.mxu0 0
    %2285 = vmatpush1.bf16.xpose.msra.mxu0 0
    %2286 = vmatprep.subr.bf16.mxu0 0
    %2287 = vmatpush1.bf16.xpose.msra.mxu0 0
    %2288 = vmatprep.subr.bf16.mxu0 0
    %2289 = vmatpush1.bf16.xpose.msra.mxu0 0
    %2290 = vmatprep.subr.bf16.mxu0 0
    %2291 = vmatpush1.bf16.xpose.msra.mxu0 0
    %2292 = vmatprep.subr.bf16.mxu0 0
    %2293 = vmatpush1.bf16.xpose.msra.mxu0 0
    %2294 = vmatprep.subr.bf16.mxu0 0
    %2295 = vmatpush1.bf16.xpose.msra.mxu0 0
    %2296 = vmatprep.subr.bf16.mxu0 0
    %2297 = vmatpush1.bf16.xpose.msra.mxu0 0
    %2298 = vmatprep.subr.bf16.mxu0 0
    %2299 = vmatpush1.bf16.xpose.msra.mxu0 0
    %2300 = vmatprep.subr.bf16.mxu0 0
    %2301 = vmatpush1.bf16.xpose.msra.mxu0 0
    %2302 = vmatprep.subr.bf16.mxu0 0
    %2303 = vmatpush1.bf16.xpose.msra.mxu0 0
    %2304 = vmatprep.mubr.bf16.mxu0 0
    %2305 = vmatmul.mubr.bf16.gmra.mrb[0].mxu0 %v2267
    %v2306 = vpop.f32.mrb[0].mxu0
    %v2307 = vadd.f32 0.0, %v2306
    %v2308 = vpop.f32.mrb[0].mxu0
    %v2309 = vpop.f32.mrb[0].mxu0
    %v2310 = vadd.f32 0.0, %v2309
    %v2311 = vpop.f32.mrb[0].mxu0
    %2312 = vdwg.mxu0
    %v2314 = vsel %vm2265, %v1074, 0
    %v2317 = vsel %vm2265, %v1666, 0
    %2319 = vmatprep.subr.bf16.mxu0 0
    %2320 = vmatpush1.bf16.xpose.msra.mxu0 %v2317
    %2321 = vmatprep.subr.bf16.mxu0 0
    %2322 = vmatpush1.bf16.xpose.msra.mxu0 0
    %2323 = vmatprep.subr.bf16.mxu0 0
    %2324 = vmatpush1.bf16.xpose.msra.mxu0 0
    %2325 = vmatprep.subr.bf16.mxu0 0
    %2326 = vmatpush1.bf16.xpose.msra.mxu0 0
    %2327 = vmatprep.subr.bf16.mxu0 0
    %2328 = vmatpush1.bf16.xpose.msra.mxu0 0
    %2329 = vmatprep.subr.bf16.mxu0 0
    %2330 = vmatpush1.bf16.xpose.msra.mxu0 0
    %2331 = vmatprep.subr.bf16.mxu0 0
    %2332 = vmatpush1.bf16.xpose.msra.mxu0 0
    %2333 = vmatprep.subr.bf16.mxu0 0
    %2334 = vmatpush1.bf16.xpose.msra.mxu0 0
    %2335 = vmatprep.subr.bf16.mxu0 0
    %2336 = vmatpush1.bf16.xpose.msra.mxu0 0
    %2337 = vmatprep.subr.bf16.mxu0 0
    %2338 = vmatpush1.bf16.xpose.msra.mxu0 0
    %2339 = vmatprep.subr.bf16.mxu0 0
    %2340 = vmatpush1.bf16.xpose.msra.mxu0 0
    %2341 = vmatprep.subr.bf16.mxu0 0
    %2342 = vmatpush1.bf16.xpose.msra.mxu0 0
    %2343 = vmatprep.subr.bf16.mxu0 0
    %2344 = vmatpush1.bf16.xpose.msra.mxu0 0
    %2345 = vmatprep.subr.bf16.mxu0 0
    %2346 = vmatpush1.bf16.xpose.msra.mxu0 0
    %2347 = vmatprep.subr.bf16.mxu0 0
    %2348 = vmatpush1.bf16.xpose.msra.mxu0 0
    %2349 = vmatprep.subr.bf16.mxu0 0
    %2350 = vmatpush1.bf16.xpose.msra.mxu0 0
    %2351 = vmatprep.mubr.bf16.mxu0 0
    %2352 = vmatmul.mubr.bf16.gmra.mrb[0].mxu0 %v2314
    %v2353 = vpop.f32.mrb[0].mxu0
    %v2354 = vadd.f32 0.0, %v2353
    %v2355 = vpop.f32.mrb[0].mxu0
    %v2356 = vpop.f32.mrb[0].mxu0
    %v2357 = vadd.f32 0.0, %v2356
    %v2358 = vpop.f32.mrb[0].mxu0
    %2359 = vdwg.mxu0
    %v2361 = vsel %vm2265, %v1075, 0
    %v2364 = vsel %vm2265, %v1667, 0
    %2366 = vmatprep.subr.bf16.mxu0 0
    %2367 = vmatpush1.bf16.xpose.msra.mxu0 %v2364
    %2368 = vmatprep.subr.bf16.mxu0 0
    %2369 = vmatpush1.bf16.xpose.msra.mxu0 0
    %2370 = vmatprep.subr.bf16.mxu0 0
    %2371 = vmatpush1.bf16.xpose.msra.mxu0 0
    %2372 = vmatprep.subr.bf16.mxu0 0
    %2373 = vmatpush1.bf16.xpose.msra.mxu0 0
    %2374 = vmatprep.subr.bf16.mxu0 0
    %2375 = vmatpush1.bf16.xpose.msra.mxu0 0
    %2376 = vmatprep.subr.bf16.mxu0 0
    %2377 = vmatpush1.bf16.xpose.msra.mxu0 0
    %2378 = vmatprep.subr.bf16.mxu0 0
    %2379 = vmatpush1.bf16.xpose.msra.mxu0 0
    %2380 = vmatprep.subr.bf16.mxu0 0
    %2381 = vmatpush1.bf16.xpose.msra.mxu0 0
    %2382 = vmatprep.subr.bf16.mxu0 0
    %2383 = vmatpush1.bf16.xpose.msra.mxu0 0
    %2384 = vmatprep.subr.bf16.mxu0 0
    %2385 = vmatpush1.bf16.xpose.msra.mxu0 0
    %2386 = vmatprep.subr.bf16.mxu0 0
    %2387 = vmatpush1.bf16.xpose.msra.mxu0 0
    %2388 = vmatprep.subr.bf16.mxu0 0
    %2389 = vmatpush1.bf16.xpose.msra.mxu0 0
    %2390 = vmatprep.subr.bf16.mxu0 0
    %2391 = vmatpush1.bf16.xpose.msra.mxu0 0
    %2392 = vmatprep.subr.bf16.mxu0 0
    %2393 = vmatpush1.bf16.xpose.msra.mxu0 0
    %2394 = vmatprep.subr.bf16.mxu0 0
    %2395 = vmatpush1.bf16.xpose.msra.mxu0 0
    %2396 = vmatprep.subr.bf16.mxu0 0
    %2397 = vmatpush1.bf16.xpose.msra.mxu0 0
    %2398 = vmatprep.mubr.bf16.mxu0 0
    %2399 = vmatmul.mubr.bf16.gmra.mrb[0].mxu0 %v2361
    %v2400 = vpop.f32.mrb[0].mxu0
    %v2401 = vadd.f32 0.0, %v2400
    %v2402 = vpop.f32.mrb[0].mxu0
    %v2403 = vpop.f32.mrb[0].mxu0
    %v2404 = vadd.f32 0.0, %v2403
    %v2405 = vpop.f32.mrb[0].mxu0
    %2406 = vdwg.mxu0
    %v2408 = vsel %vm2265, %v1076, 0
    %v2411 = vsel %vm2265, %v1668, 0
    %2413 = vmatprep.subr.bf16.mxu0 0
    %2414 = vmatpush1.bf16.xpose.msra.mxu0 %v2411
    %2415 = vmatprep.subr.bf16.mxu0 0
    %2416 = vmatpush1.bf16.xpose.msra.mxu0 0
    %2417 = vmatprep.subr.bf16.mxu0 0
    %2418 = vmatpush1.bf16.xpose.msra.mxu0 0
    %2419 = vmatprep.subr.bf16.mxu0 0
    %2420 = vmatpush1.bf16.xpose.msra.mxu0 0
    %2421 = vmatprep.subr.bf16.mxu0 0
    %2422 = vmatpush1.bf16.xpose.msra.mxu0 0
    %2423 = vmatprep.subr.bf16.mxu0 0
    %2424 = vmatpush1.bf16.xpose.msra.mxu0 0
    %2425 = vmatprep.subr.bf16.mxu0 0
    %2426 = vmatpush1.bf16.xpose.msra.mxu0 0
    %2427 = vmatprep.subr.bf16.mxu0 0
    %2428 = vmatpush1.bf16.xpose.msra.mxu0 0
    %2429 = vmatprep.subr.bf16.mxu0 0
    %2430 = vmatpush1.bf16.xpose.msra.mxu0 0
    %2431 = vmatprep.subr.bf16.mxu0 0
    %2432 = vmatpush1.bf16.xpose.msra.mxu0 0
    %2433 = vmatprep.subr.bf16.mxu0 0
    %2434 = vmatpush1.bf16.xpose.msra.mxu0 0
    %2435 = vmatprep.subr.bf16.mxu0 0
    %2436 = vmatpush1.bf16.xpose.msra.mxu0 0
    %2437 = vmatprep.subr.bf16.mxu0 0
    %2438 = vmatpush1.bf16.xpose.msra.mxu0 0
    %2439 = vmatprep.subr.bf16.mxu0 0
    %2440 = vmatpush1.bf16.xpose.msra.mxu0 0
    %2441 = vmatprep.subr.bf16.mxu0 0
    %2442 = vmatpush1.bf16.xpose.msra.mxu0 0
    %2443 = vmatprep.subr.bf16.mxu0 0
    %2444 = vmatpush1.bf16.xpose.msra.mxu0 0
    %2445 = vmatprep.mubr.bf16.mxu0 0
    %2446 = vmatmul.mubr.bf16.gmra.mrb[0].mxu0 %v2408
    %v2447 = vpop.f32.mrb[0].mxu0
    %v2448 = vadd.f32 0.0, %v2447
    %v2449 = vpop.f32.mrb[0].mxu0
    %v2450 = vpop.f32.mrb[0].mxu0
    %v2451 = vadd.f32 0.0, %v2450
    %v2452 = vpop.f32.mrb[0].mxu0
    %2453 = vdwg.mxu0
    %v2455 = vsel %vm2265, %v1077, 0
    %v2458 = vsel %vm2265, %v1669, 0
    %2460 = vmatprep.subr.bf16.mxu0 0
    %2461 = vmatpush1.bf16.xpose.msra.mxu0 %v2458
    %2462 = vmatprep.subr.bf16.mxu0 0
    %2463 = vmatpush1.bf16.xpose.msra.mxu0 0
    %2464 = vmatprep.subr.bf16.mxu0 0
    %2465 = vmatpush1.bf16.xpose.msra.mxu0 0
    %2466 = vmatprep.subr.bf16.mxu0 0
    %2467 = vmatpush1.bf16.xpose.msra.mxu0 0
    %2468 = vmatprep.subr.bf16.mxu0 0
    %2469 = vmatpush1.bf16.xpose.msra.mxu0 0
    %2470 = vmatprep.subr.bf16.mxu0 0
    %2471 = vmatpush1.bf16.xpose.msra.mxu0 0
    %2472 = vmatprep.subr.bf16.mxu0 0
    %2473 = vmatpush1.bf16.xpose.msra.mxu0 0
    %2474 = vmatprep.subr.bf16.mxu0 0
    %2475 = vmatpush1.bf16.xpose.msra.mxu0 0
    %2476 = vmatprep.subr.bf16.mxu0 0
    %2477 = vmatpush1.bf16.xpose.msra.mxu0 0
    %2478 = vmatprep.subr.bf16.mxu0 0
    %2479 = vmatpush1.bf16.xpose.msra.mxu0 0
    %2480 = vmatprep.subr.bf16.mxu0 0
    %2481 = vmatpush1.bf16.xpose.msra.mxu0 0
    %2482 = vmatprep.subr.bf16.mxu0 0
    %2483 = vmatpush1.bf16.xpose.msra.mxu0 0
    %2484 = vmatprep.subr.bf16.mxu0 0
    %2485 = vmatpush1.bf16.xpose.msra.mxu0 0
    %2486 = vmatprep.subr.bf16.mxu0 0
    %2487 = vmatpush1.bf16.xpose.msra.mxu0 0
    %2488 = vmatprep.subr.bf16.mxu0 0
    %2489 = vmatpush1.bf16.xpose.msra.mxu0 0
    %2490 = vmatprep.subr.bf16.mxu0 0
    %2491 = vmatpush1.bf16.xpose.msra.mxu0 0
    %2492 = vmatprep.mubr.bf16.mxu0 0
    %2493 = vmatmul.mubr.bf16.gmra.mrb[0].mxu0 %v2455
    %v2494 = vpop.f32.mrb[0].mxu0
    %v2495 = vadd.f32 0.0, %v2494
    %v2496 = vpop.f32.mrb[0].mxu0
    %v2497 = vpop.f32.mrb[0].mxu0
    %v2498 = vadd.f32 0.0, %v2497
    %v2499 = vpop.f32.mrb[0].mxu0
    %2500 = vdwg.mxu0
    %v2502 = vsel %vm2265, %v1078, 0
    %v2505 = vsel %vm2265, %v1670, 0
    %2507 = vmatprep.subr.bf16.mxu0 0
    %2508 = vmatpush1.bf16.xpose.msra.mxu0 %v2505
    %2509 = vmatprep.subr.bf16.mxu0 0
    %2510 = vmatpush1.bf16.xpose.msra.mxu0 0
    %2511 = vmatprep.subr.bf16.mxu0 0
    %2512 = vmatpush1.bf16.xpose.msra.mxu0 0
    %2513 = vmatprep.subr.bf16.mxu0 0
    %2514 = vmatpush1.bf16.xpose.msra.mxu0 0
    %2515 = vmatprep.subr.bf16.mxu0 0
    %2516 = vmatpush1.bf16.xpose.msra.mxu0 0
    %2517 = vmatprep.subr.bf16.mxu0 0
    %2518 = vmatpush1.bf16.xpose.msra.mxu0 0
    %2519 = vmatprep.subr.bf16.mxu0 0
    %2520 = vmatpush1.bf16.xpose.msra.mxu0 0
    %2521 = vmatprep.subr.bf16.mxu0 0
    %2522 = vmatpush1.bf16.xpose.msra.mxu0 0
    %2523 = vmatprep.subr.bf16.mxu0 0
    %2524 = vmatpush1.bf16.xpose.msra.mxu0 0
    %2525 = vmatprep.subr.bf16.mxu0 0
    %2526 = vmatpush1.bf16.xpose.msra.mxu0 0
    %2527 = vmatprep.subr.bf16.mxu0 0
    %2528 = vmatpush1.bf16.xpose.msra.mxu0 0
    %2529 = vmatprep.subr.bf16.mxu0 0
    %2530 = vmatpush1.bf16.xpose.msra.mxu0 0
    %2531 = vmatprep.subr.bf16.mxu0 0
    %2532 = vmatpush1.bf16.xpose.msra.mxu0 0
    %2533 = vmatprep.subr.bf16.mxu0 0
    %2534 = vmatpush1.bf16.xpose.msra.mxu0 0
    %2535 = vmatprep.subr.bf16.mxu0 0
    %2536 = vmatpush1.bf16.xpose.msra.mxu0 0
    %2537 = vmatprep.subr.bf16.mxu0 0
    %2538 = vmatpush1.bf16.xpose.msra.mxu0 0
    %2539 = vmatprep.mubr.bf16.mxu0 0
    %2540 = vmatmul.mubr.bf16.gmra.mrb[0].mxu0 %v2502
    %v2541 = vpop.f32.mrb[0].mxu0
    %v2542 = vadd.f32 0.0, %v2541
    %v2543 = vpop.f32.mrb[0].mxu0
    %v2544 = vpop.f32.mrb[0].mxu0
    %v2545 = vadd.f32 0.0, %v2544
    %v2546 = vpop.f32.mrb[0].mxu0
    %2547 = vdwg.mxu0
    %v2549 = vsel %vm2265, %v1079, 0
    %v2552 = vsel %vm2265, %v1671, 0
    %2554 = vmatprep.subr.bf16.mxu0 0
    %2555 = vmatpush1.bf16.xpose.msra.mxu0 %v2552
    %2556 = vmatprep.subr.bf16.mxu0 0
    %2557 = vmatpush1.bf16.xpose.msra.mxu0 0
    %2558 = vmatprep.subr.bf16.mxu0 0
    %2559 = vmatpush1.bf16.xpose.msra.mxu0 0
    %2560 = vmatprep.subr.bf16.mxu0 0
    %2561 = vmatpush1.bf16.xpose.msra.mxu0 0
    %2562 = vmatprep.subr.bf16.mxu0 0
    %2563 = vmatpush1.bf16.xpose.msra.mxu0 0
    %2564 = vmatprep.subr.bf16.mxu0 0
    %2565 = vmatpush1.bf16.xpose.msra.mxu0 0
    %2566 = vmatprep.subr.bf16.mxu0 0
    %2567 = vmatpush1.bf16.xpose.msra.mxu0 0
    %2568 = vmatprep.subr.bf16.mxu0 0
    %2569 = vmatpush1.bf16.xpose.msra.mxu0 0
    %2570 = vmatprep.subr.bf16.mxu0 0
    %2571 = vmatpush1.bf16.xpose.msra.mxu0 0
    %2572 = vmatprep.subr.bf16.mxu0 0
    %2573 = vmatpush1.bf16.xpose.msra.mxu0 0
    %2574 = vmatprep.subr.bf16.mxu0 0
    %2575 = vmatpush1.bf16.xpose.msra.mxu0 0
    %2576 = vmatprep.subr.bf16.mxu0 0
    %2577 = vmatpush1.bf16.xpose.msra.mxu0 0
    %2578 = vmatprep.subr.bf16.mxu0 0
    %2579 = vmatpush1.bf16.xpose.msra.mxu0 0
    %2580 = vmatprep.subr.bf16.mxu0 0
    %2581 = vmatpush1.bf16.xpose.msra.mxu0 0
    %2582 = vmatprep.subr.bf16.mxu0 0
    %2583 = vmatpush1.bf16.xpose.msra.mxu0 0
    %2584 = vmatprep.subr.bf16.mxu0 0
    %2585 = vmatpush1.bf16.xpose.msra.mxu0 0
    %2586 = vmatprep.mubr.bf16.mxu0 0
    %2587 = vmatmul.mubr.bf16.gmra.mrb[0].mxu0 %v2549
    %v2588 = vpop.f32.mrb[0].mxu0
    %v2589 = vadd.f32 0.0, %v2588
    %v2590 = vpop.f32.mrb[0].mxu0
    %v2591 = vpop.f32.mrb[0].mxu0
    %v2592 = vadd.f32 0.0, %v2591
    %v2593 = vpop.f32.mrb[0].mxu0
    %2594 = vdwg.mxu0
    %v2596 = vsel %vm2265, %v1080, 0
    %v2599 = vsel %vm2265, %v1672, 0
    %2601 = vmatprep.subr.bf16.mxu0 0
    %2602 = vmatpush1.bf16.xpose.msra.mxu0 %v2599
    %2603 = vmatprep.subr.bf16.mxu0 0
    %2604 = vmatpush1.bf16.xpose.msra.mxu0 0
    %2605 = vmatprep.subr.bf16.mxu0 0
    %2606 = vmatpush1.bf16.xpose.msra.mxu0 0
    %2607 = vmatprep.subr.bf16.mxu0 0
    %2608 = vmatpush1.bf16.xpose.msra.mxu0 0
    %2609 = vmatprep.subr.bf16.mxu0 0
    %2610 = vmatpush1.bf16.xpose.msra.mxu0 0
    %2611 = vmatprep.subr.bf16.mxu0 0
    %2612 = vmatpush1.bf16.xpose.msra.mxu0 0
    %2613 = vmatprep.subr.bf16.mxu0 0
    %2614 = vmatpush1.bf16.xpose.msra.mxu0 0
    %2615 = vmatprep.subr.bf16.mxu0 0
    %2616 = vmatpush1.bf16.xpose.msra.mxu0 0
    %2617 = vmatprep.subr.bf16.mxu0 0
    %2618 = vmatpush1.bf16.xpose.msra.mxu0 0
    %2619 = vmatprep.subr.bf16.mxu0 0
    %2620 = vmatpush1.bf16.xpose.msra.mxu0 0
    %2621 = vmatprep.subr.bf16.mxu0 0
    %2622 = vmatpush1.bf16.xpose.msra.mxu0 0
    %2623 = vmatprep.subr.bf16.mxu0 0
    %2624 = vmatpush1.bf16.xpose.msra.mxu0 0
    %2625 = vmatprep.subr.bf16.mxu0 0
    %2626 = vmatpush1.bf16.xpose.msra.mxu0 0
    %2627 = vmatprep.subr.bf16.mxu0 0
    %2628 = vmatpush1.bf16.xpose.msra.mxu0 0
    %2629 = vmatprep.subr.bf16.mxu0 0
    %2630 = vmatpush1.bf16.xpose.msra.mxu0 0
    %2631 = vmatprep.subr.bf16.mxu0 0
    %2632 = vmatpush1.bf16.xpose.msra.mxu0 0
    %2633 = vmatprep.mubr.bf16.mxu0 0
    %2634 = vmatmul.mubr.bf16.gmra.mrb[0].mxu0 %v2596
    %v2635 = vpop.f32.mrb[0].mxu0
    %v2636 = vadd.f32 0.0, %v2635
    %v2637 = vpop.f32.mrb[0].mxu0
    %v2638 = vpop.f32.mrb[0].mxu0
    %v2639 = vadd.f32 0.0, %v2638
    %v2640 = vpop.f32.mrb[0].mxu0
    %2641 = vdwg.mxu0
    %vm2642 = vcmask 130048
    %v2643 = vsel %vm2642, %v2307, -inf
    %2644 = vmax.xlane.f32.xlu0 %v2643
    %v2645 = vpop.xlane.xlu0 %2644
    %v2646 = vsel %vm2642, %v2310, -inf
    %2647 = vmax.xlane.f32.xlu0 %v2646
    %v2648 = vpop.xlane.xlu0 %2647
    %v2649 = vsel %vm2642, %v2354, -inf
    %2650 = vmax.xlane.f32.xlu0 %v2649
    %v2651 = vpop.xlane.xlu0 %2650
    %v2652 = vsel %vm2642, %v2357, -inf
    %2653 = vmax.xlane.f32.xlu0 %v2652
    %v2654 = vpop.xlane.xlu0 %2653
    %v2655 = vsel %vm2642, %v2401, -inf
    %2656 = vmax.xlane.f32.xlu0 %v2655
    %v2657 = vpop.xlane.xlu0 %2656
    %v2658 = vsel %vm2642, %v2404, -inf
    %2659 = vmax.xlane.f32.xlu0 %v2658
    %v2660 = vpop.xlane.xlu0 %2659
    %v2661 = vsel %vm2642, %v2448, -inf
    %2662 = vmax.xlane.f32.xlu0 %v2661
    %v2663 = vpop.xlane.xlu0 %2662
    %v2664 = vsel %vm2642, %v2451, -inf
    %2665 = vmax.xlane.f32.xlu0 %v2664
    %v2666 = vpop.xlane.xlu0 %2665
    %v2667 = vsel %vm2642, %v2495, -inf
    %2668 = vmax.xlane.f32.xlu0 %v2667
    %v2669 = vpop.xlane.xlu0 %2668
    %v2670 = vsel %vm2642, %v2498, -inf
    %2671 = vmax.xlane.f32.xlu0 %v2670
    %v2672 = vpop.xlane.xlu0 %2671
    %v2673 = vsel %vm2642, %v2542, -inf
    %2674 = vmax.xlane.f32.xlu0 %v2673
    %v2675 = vpop.xlane.xlu0 %2674
    %v2676 = vsel %vm2642, %v2545, -inf
    %2677 = vmax.xlane.f32.xlu0 %v2676
    %v2678 = vpop.xlane.xlu0 %2677
    %v2679 = vsel %vm2642, %v2589, -inf
    %2680 = vmax.xlane.f32.xlu0 %v2679
    %v2681 = vpop.xlane.xlu0 %2680
    %v2682 = vsel %vm2642, %v2592, -inf
    %2683 = vmax.xlane.f32.xlu0 %v2682
    %v2684 = vpop.xlane.xlu0 %2683
    %v2685 = vsel %vm2642, %v2636, -inf
    %2686 = vmax.xlane.f32.xlu0 %v2685
    %v2687 = vpop.xlane.xlu0 %2686
    %v2688 = vsel %vm2642, %v2639, -inf
    %2689 = vmax.xlane.f32.xlu0 %v2688
    %v2690 = vpop.xlane.xlu0 %2689
    %v2691 = vsub.f32 %v2307, %v2645
    %v2692 = vsub.f32 %v2310, %v2648
    %v2693 = vsub.f32 %v2354, %v2651
    %v2694 = vsub.f32 %v2357, %v2654
    %v2695 = vsub.f32 %v2401, %v2657
    %v2696 = vsub.f32 %v2404, %v2660
    %v2697 = vsub.f32 %v2448, %v2663
    %v2698 = vsub.f32 %v2451, %v2666
    %v2699 = vsub.f32 %v2495, %v2669
    %v2700 = vsub.f32 %v2498, %v2672
    %v2701 = vsub.f32 %v2542, %v2675
    %v2702 = vsub.f32 %v2545, %v2678
    %v2703 = vsub.f32 %v2589, %v2681
    %v2704 = vsub.f32 %v2592, %v2684
    %v2705 = vsub.f32 %v2636, %v2687
    %v2706 = vsub.f32 %v2639, %v2690
    %v2707 = vmul.f32 %v2691, 1.442695
    %v2708 = vpow.pop %v2707
    %v2709 = vmul.f32 %v2692, 1.442695
    %v2710 = vpow.pop %v2709
    %v2711 = vmul.f32 %v2693, 1.442695
    %v2712 = vpow.pop %v2711
    %v2713 = vmul.f32 %v2694, 1.442695
    %v2714 = vpow.pop %v2713
    %v2715 = vmul.f32 %v2695, 1.442695
    %v2716 = vpow.pop %v2715
    %v2717 = vmul.f32 %v2696, 1.442695
    %v2718 = vpow.pop %v2717
    %v2719 = vmul.f32 %v2697, 1.442695
    %v2720 = vpow.pop %v2719
    %v2721 = vmul.f32 %v2698, 1.442695
    %v2722 = vpow.pop %v2721
    %v2723 = vmul.f32 %v2699, 1.442695
    %v2724 = vpow.pop %v2723
    %v2725 = vmul.f32 %v2700, 1.442695
    %v2726 = vpow.pop %v2725
    %v2727 = vmul.f32 %v2701, 1.442695
    %v2728 = vpow.pop %v2727
    %v2729 = vmul.f32 %v2702, 1.442695
    %v2730 = vpow.pop %v2729
    %v2731 = vmul.f32 %v2703, 1.442695
    %v2732 = vpow.pop %v2731
    %v2733 = vmul.f32 %v2704, 1.442695
    %v2734 = vpow.pop %v2733
    %v2735 = vmul.f32 %v2705, 1.442695
    %v2736 = vpow.pop %v2735
    %v2737 = vmul.f32 %v2706, 1.442695
    %v2738 = vpow.pop %v2737
    %v2739 = vsel %vm2642, %v2708, 0.0
    %2740 = vadd.xlane.f32.xlu0 %v2739
    %v2741 = vpop.xlane.xlu0 %2740
    %v2742 = vsel %vm2642, %v2710, 0.0
    %2743 = vadd.xlane.f32.xlu0 %v2742
    %v2744 = vpop.xlane.xlu0 %2743
    %v2745 = vsel %vm2642, %v2712, 0.0
    %2746 = vadd.xlane.f32.xlu0 %v2745
    %v2747 = vpop.xlane.xlu0 %2746
    %v2748 = vsel %vm2642, %v2714, 0.0
    %2749 = vadd.xlane.f32.xlu0 %v2748
    %v2750 = vpop.xlane.xlu0 %2749
    %v2751 = vsel %vm2642, %v2716, 0.0
    %2752 = vadd.xlane.f32.xlu0 %v2751
    %v2753 = vpop.xlane.xlu0 %2752
    %v2754 = vsel %vm2642, %v2718, 0.0
    %2755 = vadd.xlane.f32.xlu0 %v2754
    %v2756 = vpop.xlane.xlu0 %2755
    %v2757 = vsel %vm2642, %v2720, 0.0
    %2758 = vadd.xlane.f32.xlu0 %v2757
    %v2759 = vpop.xlane.xlu0 %2758
    %v2760 = vsel %vm2642, %v2722, 0.0
    %2761 = vadd.xlane.f32.xlu0 %v2760
    %v2762 = vpop.xlane.xlu0 %2761
    %v2763 = vsel %vm2642, %v2724, 0.0
    %2764 = vadd.xlane.f32.xlu0 %v2763
    %v2765 = vpop.xlane.xlu0 %2764
    %v2766 = vsel %vm2642, %v2726, 0.0
    %2767 = vadd.xlane.f32.xlu0 %v2766
    %v2768 = vpop.xlane.xlu0 %2767
    %v2769 = vsel %vm2642, %v2728, 0.0
    %2770 = vadd.xlane.f32.xlu0 %v2769
    %v2771 = vpop.xlane.xlu0 %2770
    %v2772 = vsel %vm2642, %v2730, 0.0
    %2773 = vadd.xlane.f32.xlu0 %v2772
    %v2774 = vpop.xlane.xlu0 %2773
    %v2775 = vsel %vm2642, %v2732, 0.0
    %2776 = vadd.xlane.f32.xlu0 %v2775
    %v2777 = vpop.xlane.xlu0 %2776
    %v2778 = vsel %vm2642, %v2734, 0.0
    %2779 = vadd.xlane.f32.xlu0 %v2778
    %v2780 = vpop.xlane.xlu0 %2779
    %v2781 = vsel %vm2642, %v2736, 0.0
    %2782 = vadd.xlane.f32.xlu0 %v2781
    %v2783 = vpop.xlane.xlu0 %2782
    %v2784 = vsel %vm2642, %v2738, 0.0
    %2785 = vadd.xlane.f32.xlu0 %v2784
    %v2786 = vpop.xlane.xlu0 %2785
    %v2787 = vrcp.pop %v2741
    %v2788 = vrcp.pop %v2744
    %v2789 = vrcp.pop %v2747
    %v2790 = vrcp.pop %v2750
    %v2791 = vrcp.pop %v2753
    %v2792 = vrcp.pop %v2756
    %v2793 = vrcp.pop %v2759
    %v2794 = vrcp.pop %v2762
    %v2795 = vrcp.pop %v2765
    %v2796 = vrcp.pop %v2768
    %v2797 = vrcp.pop %v2771
    %v2798 = vrcp.pop %v2774
    %v2799 = vrcp.pop %v2777
    %v2800 = vrcp.pop %v2780
    %v2801 = vrcp.pop %v2783
    %v2802 = vrcp.pop %v2786
    %v2803 = vmul.f32 %v2708, %v2787
    %v2804 = vmul.f32 %v2710, %v2788
    %v2805 = vmul.f32 %v2712, %v2789
    %v2806 = vmul.f32 %v2714, %v2790
    %v2807 = vmul.f32 %v2716, %v2791
    %v2808 = vmul.f32 %v2718, %v2792
    %v2809 = vmul.f32 %v2720, %v2793
    %v2810 = vmul.f32 %v2722, %v2794
    %v2811 = vmul.f32 %v2724, %v2795
    %v2812 = vmul.f32 %v2726, %v2796
    %v2813 = vmul.f32 %v2728, %v2797
    %v2814 = vmul.f32 %v2730, %v2798
    %v2815 = vmul.f32 %v2732, %v2799
    %v2816 = vmul.f32 %v2734, %v2800
    %v2817 = vmul.f32 %v2736, %v2801
    %v2818 = vmul.f32 %v2738, %v2802
    %v2819 = vpack.c.bf16 %v2804, %v2803
    %v2820 = vpack.c.bf16 %v2806, %v2805
    %v2821 = vpack.c.bf16 %v2808, %v2807
    %v2822 = vpack.c.bf16 %v2810, %v2809
    %v2823 = vpack.c.bf16 %v2812, %v2811
    %v2824 = vpack.c.bf16 %v2814, %v2813
    %v2825 = vpack.c.bf16 %v2816, %v2815
    %v2826 = vpack.c.bf16 %v2818, %v2817
    %v2828 = vsel %vm2642, %v2819, 0
    %2830 = vmatprep.subr.bf16.mxu0 0
    %2831 = vmatpush1.bf16.msra.mxu0 %v2257
    %2832 = vmatprep.subr.bf16.mxu0 0
    %2833 = vmatpush1.bf16.msra.mxu0 0
    %2834 = vmatprep.subr.bf16.mxu0 0
    %2835 = vmatpush1.bf16.msra.mxu0 0
    %2836 = vmatprep.subr.bf16.mxu0 0
    %2837 = vmatpush1.bf16.msra.mxu0 0
    %2838 = vmatprep.subr.bf16.mxu0 0
    %2839 = vmatpush1.bf16.msra.mxu0 0
    %2840 = vmatprep.subr.bf16.mxu0 0
    %2841 = vmatpush1.bf16.msra.mxu0 0
    %2842 = vmatprep.subr.bf16.mxu0 0
    %2843 = vmatpush1.bf16.msra.mxu0 0
    %2844 = vmatprep.subr.bf16.mxu0 0
    %2845 = vmatpush1.bf16.msra.mxu0 0
    %2846 = vmatprep.subr.bf16.mxu0 0
    %2847 = vmatpush1.bf16.msra.mxu0 0
    %2848 = vmatprep.subr.bf16.mxu0 0
    %2849 = vmatpush1.bf16.msra.mxu0 0
    %2850 = vmatprep.subr.bf16.mxu0 0
    %2851 = vmatpush1.bf16.msra.mxu0 0
    %2852 = vmatprep.subr.bf16.mxu0 0
    %2853 = vmatpush1.bf16.msra.mxu0 0
    %2854 = vmatprep.subr.bf16.mxu0 0
    %2855 = vmatpush1.bf16.msra.mxu0 0
    %2856 = vmatprep.subr.bf16.mxu0 0
    %2857 = vmatpush1.bf16.msra.mxu0 0
    %2858 = vmatprep.subr.bf16.mxu0 0
    %2859 = vmatpush1.bf16.msra.mxu0 0
    %2860 = vmatprep.subr.bf16.mxu0 0
    %2861 = vmatpush1.bf16.msra.mxu0 0
    %2862 = vmatprep.mubr.bf16.mxu0 0
    %2863 = vmatmul.mubr.bf16.gmra.mrb[0].mxu0 %v2828
    %v2864 = vpop.f32.mrb[0].mxu0
    %v2865 = vadd.f32 0.0, %v2864
    %v2866 = vpop.f32.mrb[0].mxu0
    %v2867 = vpop.f32.mrb[0].mxu0
    %v2868 = vadd.f32 0.0, %v2867
    %v2869 = vpop.f32.mrb[0].mxu0
    %2870 = vdwg.mxu0
    %v2872 = vsel %vm2642, %v2820, 0
    %2874 = vmatprep.subr.bf16.mxu0 0
    %2875 = vmatpush1.bf16.msra.mxu0 %v2258
    %2876 = vmatprep.subr.bf16.mxu0 0
    %2877 = vmatpush1.bf16.msra.mxu0 0
    %2878 = vmatprep.subr.bf16.mxu0 0
    %2879 = vmatpush1.bf16.msra.mxu0 0
    %2880 = vmatprep.subr.bf16.mxu0 0
    %2881 = vmatpush1.bf16.msra.mxu0 0
    %2882 = vmatprep.subr.bf16.mxu0 0
    %2883 = vmatpush1.bf16.msra.mxu0 0
    %2884 = vmatprep.subr.bf16.mxu0 0
    %2885 = vmatpush1.bf16.msra.mxu0 0
    %2886 = vmatprep.subr.bf16.mxu0 0
    %2887 = vmatpush1.bf16.msra.mxu0 0
    %2888 = vmatprep.subr.bf16.mxu0 0
    %2889 = vmatpush1.bf16.msra.mxu0 0
    %2890 = vmatprep.subr.bf16.mxu0 0
    %2891 = vmatpush1.bf16.msra.mxu0 0
    %2892 = vmatprep.subr.bf16.mxu0 0
    %2893 = vmatpush1.bf16.msra.mxu0 0
    %2894 = vmatprep.subr.bf16.mxu0 0
    %2895 = vmatpush1.bf16.msra.mxu0 0
    %2896 = vmatprep.subr.bf16.mxu0 0
    %2897 = vmatpush1.bf16.msra.mxu0 0
    %2898 = vmatprep.subr.bf16.mxu0 0
    %2899 = vmatpush1.bf16.msra.mxu0 0
    %2900 = vmatprep.subr.bf16.mxu0 0
    %2901 = vmatpush1.bf16.msra.mxu0 0
    %2902 = vmatprep.subr.bf16.mxu0 0
    %2903 = vmatpush1.bf16.msra.mxu0 0
    %2904 = vmatprep.subr.bf16.mxu0 0
    %2905 = vmatpush1.bf16.msra.mxu0 0
    %2906 = vmatprep.mubr.bf16.mxu0 0
    %2907 = vmatmul.mubr.bf16.gmra.mrb[0].mxu0 %v2872
    %v2908 = vpop.f32.mrb[0].mxu0
    %v2909 = vadd.f32 0.0, %v2908
    %v2910 = vpop.f32.mrb[0].mxu0
    %v2911 = vpop.f32.mrb[0].mxu0
    %v2912 = vadd.f32 0.0, %v2911
    %v2913 = vpop.f32.mrb[0].mxu0
    %2914 = vdwg.mxu0
    %v2916 = vsel %vm2642, %v2821, 0
    %2918 = vmatprep.subr.bf16.mxu0 0
    %2919 = vmatpush1.bf16.msra.mxu0 %v2259
    %2920 = vmatprep.subr.bf16.mxu0 0
    %2921 = vmatpush1.bf16.msra.mxu0 0
    %2922 = vmatprep.subr.bf16.mxu0 0
    %2923 = vmatpush1.bf16.msra.mxu0 0
    %2924 = vmatprep.subr.bf16.mxu0 0
    %2925 = vmatpush1.bf16.msra.mxu0 0
    %2926 = vmatprep.subr.bf16.mxu0 0
    %2927 = vmatpush1.bf16.msra.mxu0 0
    %2928 = vmatprep.subr.bf16.mxu0 0
    %2929 = vmatpush1.bf16.msra.mxu0 0
    %2930 = vmatprep.subr.bf16.mxu0 0
    %2931 = vmatpush1.bf16.msra.mxu0 0
    %2932 = vmatprep.subr.bf16.mxu0 0
    %2933 = vmatpush1.bf16.msra.mxu0 0
    %2934 = vmatprep.subr.bf16.mxu0 0
    %2935 = vmatpush1.bf16.msra.mxu0 0
    %2936 = vmatprep.subr.bf16.mxu0 0
    %2937 = vmatpush1.bf16.msra.mxu0 0
    %2938 = vmatprep.subr.bf16.mxu0 0
    %2939 = vmatpush1.bf16.msra.mxu0 0
    %2940 = vmatprep.subr.bf16.mxu0 0
    %2941 = vmatpush1.bf16.msra.mxu0 0
    %2942 = vmatprep.subr.bf16.mxu0 0
    %2943 = vmatpush1.bf16.msra.mxu0 0
    %2944 = vmatprep.subr.bf16.mxu0 0
    %2945 = vmatpush1.bf16.msra.mxu0 0
    %2946 = vmatprep.subr.bf16.mxu0 0
    %2947 = vmatpush1.bf16.msra.mxu0 0
    %2948 = vmatprep.subr.bf16.mxu0 0
    %2949 = vmatpush1.bf16.msra.mxu0 0
    %2950 = vmatprep.mubr.bf16.mxu0 0
    %2951 = vmatmul.mubr.bf16.gmra.mrb[0].mxu0 %v2916
    %v2952 = vpop.f32.mrb[0].mxu0
    %v2953 = vadd.f32 0.0, %v2952
    %v2954 = vpop.f32.mrb[0].mxu0
    %v2955 = vpop.f32.mrb[0].mxu0
    %v2956 = vadd.f32 0.0, %v2955
    %v2957 = vpop.f32.mrb[0].mxu0
    %2958 = vdwg.mxu0
    %v2960 = vsel %vm2642, %v2822, 0
    %2962 = vmatprep.subr.bf16.mxu0 0
    %2963 = vmatpush1.bf16.msra.mxu0 %v2260
    %2964 = vmatprep.subr.bf16.mxu0 0
    %2965 = vmatpush1.bf16.msra.mxu0 0
    %2966 = vmatprep.subr.bf16.mxu0 0
    %2967 = vmatpush1.bf16.msra.mxu0 0
    %2968 = vmatprep.subr.bf16.mxu0 0
    %2969 = vmatpush1.bf16.msra.mxu0 0
    %2970 = vmatprep.subr.bf16.mxu0 0
    %2971 = vmatpush1.bf16.msra.mxu0 0
    %2972 = vmatprep.subr.bf16.mxu0 0
    %2973 = vmatpush1.bf16.msra.mxu0 0
    %2974 = vmatprep.subr.bf16.mxu0 0
    %2975 = vmatpush1.bf16.msra.mxu0 0
    %2976 = vmatprep.subr.bf16.mxu0 0
    %2977 = vmatpush1.bf16.msra.mxu0 0
    %2978 = vmatprep.subr.bf16.mxu0 0
    %2979 = vmatpush1.bf16.msra.mxu0 0
    %2980 = vmatprep.subr.bf16.mxu0 0
    %2981 = vmatpush1.bf16.msra.mxu0 0
    %2982 = vmatprep.subr.bf16.mxu0 0
    %2983 = vmatpush1.bf16.msra.mxu0 0
    %2984 = vmatprep.subr.bf16.mxu0 0
    %2985 = vmatpush1.bf16.msra.mxu0 0
    %2986 = vmatprep.subr.bf16.mxu0 0
    %2987 = vmatpush1.bf16.msra.mxu0 0
    %2988 = vmatprep.subr.bf16.mxu0 0
    %2989 = vmatpush1.bf16.msra.mxu0 0
    %2990 = vmatprep.subr.bf16.mxu0 0
    %2991 = vmatpush1.bf16.msra.mxu0 0
    %2992 = vmatprep.subr.bf16.mxu0 0
    %2993 = vmatpush1.bf16.msra.mxu0 0
    %2994 = vmatprep.mubr.bf16.mxu0 0
    %2995 = vmatmul.mubr.bf16.gmra.mrb[0].mxu0 %v2960
    %v2996 = vpop.f32.mrb[0].mxu0
    %v2997 = vadd.f32 0.0, %v2996
    %v2998 = vpop.f32.mrb[0].mxu0
    %v2999 = vpop.f32.mrb[0].mxu0
    %v3000 = vadd.f32 0.0, %v2999
    %v3001 = vpop.f32.mrb[0].mxu0
    %3002 = vdwg.mxu0
    %v3004 = vsel %vm2642, %v2823, 0
    %3006 = vmatprep.subr.bf16.mxu0 0
    %3007 = vmatpush1.bf16.msra.mxu0 %v2261
    %3008 = vmatprep.subr.bf16.mxu0 0
    %3009 = vmatpush1.bf16.msra.mxu0 0
    %3010 = vmatprep.subr.bf16.mxu0 0
    %3011 = vmatpush1.bf16.msra.mxu0 0
    %3012 = vmatprep.subr.bf16.mxu0 0
    %3013 = vmatpush1.bf16.msra.mxu0 0
    %3014 = vmatprep.subr.bf16.mxu0 0
    %3015 = vmatpush1.bf16.msra.mxu0 0
    %3016 = vmatprep.subr.bf16.mxu0 0
    %3017 = vmatpush1.bf16.msra.mxu0 0
    %3018 = vmatprep.subr.bf16.mxu0 0
    %3019 = vmatpush1.bf16.msra.mxu0 0
    %3020 = vmatprep.subr.bf16.mxu0 0
    %3021 = vmatpush1.bf16.msra.mxu0 0
    %3022 = vmatprep.subr.bf16.mxu0 0
    %3023 = vmatpush1.bf16.msra.mxu0 0
    %3024 = vmatprep.subr.bf16.mxu0 0
    %3025 = vmatpush1.bf16.msra.mxu0 0
    %3026 = vmatprep.subr.bf16.mxu0 0
    %3027 = vmatpush1.bf16.msra.mxu0 0
    %3028 = vmatprep.subr.bf16.mxu0 0
    %3029 = vmatpush1.bf16.msra.mxu0 0
    %3030 = vmatprep.subr.bf16.mxu0 0
    %3031 = vmatpush1.bf16.msra.mxu0 0
    %3032 = vmatprep.subr.bf16.mxu0 0
    %3033 = vmatpush1.bf16.msra.mxu0 0
    %3034 = vmatprep.subr.bf16.mxu0 0
    %3035 = vmatpush1.bf16.msra.mxu0 0
    %3036 = vmatprep.subr.bf16.mxu0 0
    %3037 = vmatpush1.bf16.msra.mxu0 0
    %3038 = vmatprep.mubr.bf16.mxu0 0
    %3039 = vmatmul.mubr.bf16.gmra.mrb[0].mxu0 %v3004
    %v3040 = vpop.f32.mrb[0].mxu0
    %v3041 = vadd.f32 0.0, %v3040
    %v3042 = vpop.f32.mrb[0].mxu0
    %v3043 = vpop.f32.mrb[0].mxu0
    %v3044 = vadd.f32 0.0, %v3043
    %v3045 = vpop.f32.mrb[0].mxu0
    %3046 = vdwg.mxu0
    %v3048 = vsel %vm2642, %v2824, 0
    %3050 = vmatprep.subr.bf16.mxu0 0
    %3051 = vmatpush1.bf16.msra.mxu0 %v2262
    %3052 = vmatprep.subr.bf16.mxu0 0
    %3053 = vmatpush1.bf16.msra.mxu0 0
    %3054 = vmatprep.subr.bf16.mxu0 0
    %3055 = vmatpush1.bf16.msra.mxu0 0
    %3056 = vmatprep.subr.bf16.mxu0 0
    %3057 = vmatpush1.bf16.msra.mxu0 0
    %3058 = vmatprep.subr.bf16.mxu0 0
    %3059 = vmatpush1.bf16.msra.mxu0 0
    %3060 = vmatprep.subr.bf16.mxu0 0
    %3061 = vmatpush1.bf16.msra.mxu0 0
    %3062 = vmatprep.subr.bf16.mxu0 0
    %3063 = vmatpush1.bf16.msra.mxu0 0
    %3064 = vmatprep.subr.bf16.mxu0 0
    %3065 = vmatpush1.bf16.msra.mxu0 0
    %3066 = vmatprep.subr.bf16.mxu0 0
    %3067 = vmatpush1.bf16.msra.mxu0 0
    %3068 = vmatprep.subr.bf16.mxu0 0
    %3069 = vmatpush1.bf16.msra.mxu0 0
    %3070 = vmatprep.subr.bf16.mxu0 0
    %3071 = vmatpush1.bf16.msra.mxu0 0
    %3072 = vmatprep.subr.bf16.mxu0 0
    %3073 = vmatpush1.bf16.msra.mxu0 0
    %3074 = vmatprep.subr.bf16.mxu0 0
    %3075 = vmatpush1.bf16.msra.mxu0 0
    %3076 = vmatprep.subr.bf16.mxu0 0
    %3077 = vmatpush1.bf16.msra.mxu0 0
    %3078 = vmatprep.subr.bf16.mxu0 0
    %3079 = vmatpush1.bf16.msra.mxu0 0
    %3080 = vmatprep.subr.bf16.mxu0 0
    %3081 = vmatpush1.bf16.msra.mxu0 0
    %3082 = vmatprep.mubr.bf16.mxu0 0
    %3083 = vmatmul.mubr.bf16.gmra.mrb[0].mxu0 %v3048
    %v3084 = vpop.f32.mrb[0].mxu0
    %v3085 = vadd.f32 0.0, %v3084
    %v3086 = vpop.f32.mrb[0].mxu0
    %v3087 = vpop.f32.mrb[0].mxu0
    %v3088 = vadd.f32 0.0, %v3087
    %v3089 = vpop.f32.mrb[0].mxu0
    %3090 = vdwg.mxu0
    %v3092 = vsel %vm2642, %v2825, 0
    %3094 = vmatprep.subr.bf16.mxu0 0
    %3095 = vmatpush1.bf16.msra.mxu0 %v2263
    %3096 = vmatprep.subr.bf16.mxu0 0
    %3097 = vmatpush1.bf16.msra.mxu0 0
    %3098 = vmatprep.subr.bf16.mxu0 0
    %3099 = vmatpush1.bf16.msra.mxu0 0
    %3100 = vmatprep.subr.bf16.mxu0 0
    %3101 = vmatpush1.bf16.msra.mxu0 0
    %3102 = vmatprep.subr.bf16.mxu0 0
    %3103 = vmatpush1.bf16.msra.mxu0 0
    %3104 = vmatprep.subr.bf16.mxu0 0
    %3105 = vmatpush1.bf16.msra.mxu0 0
    %3106 = vmatprep.subr.bf16.mxu0 0
    %3107 = vmatpush1.bf16.msra.mxu0 0
    %3108 = vmatprep.subr.bf16.mxu0 0
    %3109 = vmatpush1.bf16.msra.mxu0 0
    %3110 = vmatprep.subr.bf16.mxu0 0
    %3111 = vmatpush1.bf16.msra.mxu0 0
    %3112 = vmatprep.subr.bf16.mxu0 0
    %3113 = vmatpush1.bf16.msra.mxu0 0
    %3114 = vmatprep.subr.bf16.mxu0 0
    %3115 = vmatpush1.bf16.msra.mxu0 0
    %3116 = vmatprep.subr.bf16.mxu0 0
    %3117 = vmatpush1.bf16.msra.mxu0 0
    %3118 = vmatprep.subr.bf16.mxu0 0
    %3119 = vmatpush1.bf16.msra.mxu0 0
    %3120 = vmatprep.subr.bf16.mxu0 0
    %3121 = vmatpush1.bf16.msra.mxu0 0
    %3122 = vmatprep.subr.bf16.mxu0 0
    %3123 = vmatpush1.bf16.msra.mxu0 0
    %3124 = vmatprep.subr.bf16.mxu0 0
    %3125 = vmatpush1.bf16.msra.mxu0 0
    %3126 = vmatprep.mubr.bf16.mxu0 0
    %3127 = vmatmul.mubr.bf16.gmra.mrb[0].mxu0 %v3092
    %v3128 = vpop.f32.mrb[0].mxu0
    %v3129 = vadd.f32 0.0, %v3128
    %v3130 = vpop.f32.mrb[0].mxu0
    %v3131 = vpop.f32.mrb[0].mxu0
    %v3132 = vadd.f32 0.0, %v3131
    %v3133 = vpop.f32.mrb[0].mxu0
    %3134 = vdwg.mxu0
    %v3136 = vsel %vm2642, %v2826, 0
    %3138 = vmatprep.subr.bf16.mxu0 0
    %3139 = vmatpush1.bf16.msra.mxu0 %v2264
    %3140 = vmatprep.subr.bf16.mxu0 0
    %3141 = vmatpush1.bf16.msra.mxu0 0
    %3142 = vmatprep.subr.bf16.mxu0 0
    %3143 = vmatpush1.bf16.msra.mxu0 0
    %3144 = vmatprep.subr.bf16.mxu0 0
    %3145 = vmatpush1.bf16.msra.mxu0 0
    %3146 = vmatprep.subr.bf16.mxu0 0
    %3147 = vmatpush1.bf16.msra.mxu0 0
    %3148 = vmatprep.subr.bf16.mxu0 0
    %3149 = vmatpush1.bf16.msra.mxu0 0
    %3150 = vmatprep.subr.bf16.mxu0 0
    %3151 = vmatpush1.bf16.msra.mxu0 0
    %3152 = vmatprep.subr.bf16.mxu0 0
    %3153 = vmatpush1.bf16.msra.mxu0 0
    %3154 = vmatprep.subr.bf16.mxu0 0
    %3155 = vmatpush1.bf16.msra.mxu0 0
    %3156 = vmatprep.subr.bf16.mxu0 0
    %3157 = vmatpush1.bf16.msra.mxu0 0
    %3158 = vmatprep.subr.bf16.mxu0 0
    %3159 = vmatpush1.bf16.msra.mxu0 0
    %3160 = vmatprep.subr.bf16.mxu0 0
    %3161 = vmatpush1.bf16.msra.mxu0 0
    %3162 = vmatprep.subr.bf16.mxu0 0
    %3163 = vmatpush1.bf16.msra.mxu0 0
    %3164 = vmatprep.subr.bf16.mxu0 0
    %3165 = vmatpush1.bf16.msra.mxu0 0
    %3166 = vmatprep.subr.bf16.mxu0 0
    %3167 = vmatpush1.bf16.msra.mxu0 0
    %3168 = vmatprep.subr.bf16.mxu0 0
    %3169 = vmatpush1.bf16.msra.mxu0 0
    %3170 = vmatprep.mubr.bf16.mxu0 0
    %3171 = vmatmul.mubr.bf16.gmra.mrb[0].mxu0 %v3136
    %v3172 = vpop.f32.mrb[0].mxu0
    %v3173 = vadd.f32 0.0, %v3172
    %v3174 = vpop.f32.mrb[0].mxu0
    %v3175 = vpop.f32.mrb[0].mxu0
    %v3176 = vadd.f32 0.0, %v3175
    %v3177 = vpop.f32.mrb[0].mxu0
    %3178 = vdwg.mxu0
    %v3179 = vcombine.low %v2865, %v2953
    %v3180 = vcombine.high %v2865, %v2953
    %v3182 = vunpack.c.l.s4 1983009808
    %v3183 = vunpack.c.0.s8 %v3182
    %v3184 = vlaneseq
    %v3185 = vshrl.u32 %v3184, 7
    %v3186 = vsub.s32 %v3183, %v3185
    %v3187 = vrot.slane %v3179, %v3186
    %v3189 = vunpack.c.l.s4 1983009808
    %v3190 = vunpack.c.0.s8 %v3189
    %v3191 = vlaneseq
    %v3192 = vshrl.u32 %v3191, 7
    %v3193 = vsub.s32 %v3190, %v3192
    %v3194 = vrot.slane %v3180, %v3193
    %v3195 = vcombine.low %v2909, %v2997
    %v3196 = vcombine.high %v2909, %v2997
    %v3198 = vunpack.c.l.s4 1983009808
    %v3199 = vunpack.c.0.s8 %v3198
    %v3200 = vlaneseq
    %v3201 = vshrl.u32 %v3200, 7
    %v3202 = vsub.s32 %v3199, %v3201
    %v3203 = vrot.slane %v3195, %v3202
    %v3205 = vunpack.c.l.s4 1983009808
    %v3206 = vunpack.c.0.s8 %v3205
    %v3207 = vlaneseq
    %v3208 = vshrl.u32 %v3207, 7
    %v3209 = vsub.s32 %v3206, %v3208
    %v3210 = vrot.slane %v3196, %v3209
    %v3211 = vcombine.low %v3187, %v3203
    %v3212 = vcombine.high %v3187, %v3203
    %v3214 = vunpack.c.l.s4 1934713408
    %v3215 = vunpack.c.0.s8 %v3214
    %v3216 = vlaneseq
    %v3217 = vshrl.u32 %v3216, 7
    %v3218 = vsub.s32 %v3215, %v3217
    %v3219 = vrot.slane %v3211, %v3218
    %v3221 = vunpack.c.l.s4 1934713408
    %v3222 = vunpack.c.0.s8 %v3221
    %v3223 = vlaneseq
    %v3224 = vshrl.u32 %v3223, 7
    %v3225 = vsub.s32 %v3222, %v3224
    %v3226 = vrot.slane %v3212, %v3225
    %v3227 = vcombine.low %v3194, %v3210
    %v3228 = vcombine.high %v3194, %v3210
    %v3230 = vunpack.c.l.s4 1934713408
    %v3231 = vunpack.c.0.s8 %v3230
    %v3232 = vlaneseq
    %v3233 = vshrl.u32 %v3232, 7
    %v3234 = vsub.s32 %v3231, %v3233
    %v3235 = vrot.slane %v3227, %v3234
    %v3237 = vunpack.c.l.s4 1934713408
    %v3238 = vunpack.c.0.s8 %v3237
    %v3239 = vlaneseq
    %v3240 = vshrl.u32 %v3239, 7
    %v3241 = vsub.s32 %v3238, %v3240
    %v3242 = vrot.slane %v3228, %v3241
    %v3243 = vcombine.high %v3219, 0.0
    %v3244 = vcombine.high %v3226, 0.0
    %v3245 = vcombine.high %v3235, 0.0
    %v3246 = vcombine.high %v3242, 0.0
    %v3247 = vcombine.low %v2868, %v2956
    %v3248 = vcombine.high %v2868, %v2956
    %v3250 = vunpack.c.l.s4 1983009808
    %v3251 = vunpack.c.0.s8 %v3250
    %v3252 = vlaneseq
    %v3253 = vshrl.u32 %v3252, 7
    %v3254 = vsub.s32 %v3251, %v3253
    %v3255 = vrot.slane %v3247, %v3254
    %v3257 = vunpack.c.l.s4 1983009808
    %v3258 = vunpack.c.0.s8 %v3257
    %v3259 = vlaneseq
    %v3260 = vshrl.u32 %v3259, 7
    %v3261 = vsub.s32 %v3258, %v3260
    %v3262 = vrot.slane %v3248, %v3261
    %v3263 = vcombine.low %v2912, %v3000
    %v3264 = vcombine.high %v2912, %v3000
    %v3266 = vunpack.c.l.s4 1983009808
    %v3267 = vunpack.c.0.s8 %v3266
    %v3268 = vlaneseq
    %v3269 = vshrl.u32 %v3268, 7
    %v3270 = vsub.s32 %v3267, %v3269
    %v3271 = vrot.slane %v3263, %v3270
    %v3273 = vunpack.c.l.s4 1983009808
    %v3274 = vunpack.c.0.s8 %v3273
    %v3275 = vlaneseq
    %v3276 = vshrl.u32 %v3275, 7
    %v3277 = vsub.s32 %v3274, %v3276
    %v3278 = vrot.slane %v3264, %v3277
    %v3279 = vcombine.low %v3255, %v3271
    %v3280 = vcombine.high %v3255, %v3271
    %v3282 = vunpack.c.l.s4 1934713408
    %v3283 = vunpack.c.0.s8 %v3282
    %v3284 = vlaneseq
    %v3285 = vshrl.u32 %v3284, 7
    %v3286 = vsub.s32 %v3283, %v3285
    %v3287 = vrot.slane %v3279, %v3286
    %v3289 = vunpack.c.l.s4 1934713408
    %v3290 = vunpack.c.0.s8 %v3289
    %v3291 = vlaneseq
    %v3292 = vshrl.u32 %v3291, 7
    %v3293 = vsub.s32 %v3290, %v3292
    %v3294 = vrot.slane %v3280, %v3293
    %v3295 = vcombine.low %v3262, %v3278
    %v3296 = vcombine.high %v3262, %v3278
    %v3298 = vunpack.c.l.s4 1934713408
    %v3299 = vunpack.c.0.s8 %v3298
    %v3300 = vlaneseq
    %v3301 = vshrl.u32 %v3300, 7
    %v3302 = vsub.s32 %v3299, %v3301
    %v3303 = vrot.slane %v3295, %v3302
    %v3305 = vunpack.c.l.s4 1934713408
    %v3306 = vunpack.c.0.s8 %v3305
    %v3307 = vlaneseq
    %v3308 = vshrl.u32 %v3307, 7
    %v3309 = vsub.s32 %v3306, %v3308
    %v3310 = vrot.slane %v3296, %v3309
    %v3311 = vcombine.high %v3287, 0.0
    %v3312 = vcombine.high %v3294, 0.0
    %v3313 = vcombine.high %v3303, 0.0
    %v3314 = vcombine.high %v3310, 0.0
    %v3315 = vcombine.low %v3041, %v3129
    %v3316 = vcombine.high %v3041, %v3129
    %v3318 = vunpack.c.l.s4 1983009808
    %v3319 = vunpack.c.0.s8 %v3318
    %v3320 = vlaneseq
    %v3321 = vshrl.u32 %v3320, 7
    %v3322 = vsub.s32 %v3319, %v3321
    %v3323 = vrot.slane %v3315, %v3322
    %v3325 = vunpack.c.l.s4 1983009808
    %v3326 = vunpack.c.0.s8 %v3325
    %v3327 = vlaneseq
    %v3328 = vshrl.u32 %v3327, 7
    %v3329 = vsub.s32 %v3326, %v3328
    %v3330 = vrot.slane %v3316, %v3329
    %v3331 = vcombine.low %v3085, %v3173
    %v3332 = vcombine.high %v3085, %v3173
    %v3334 = vunpack.c.l.s4 1983009808
    %v3335 = vunpack.c.0.s8 %v3334
    %v3336 = vlaneseq
    %v3337 = vshrl.u32 %v3336, 7
    %v3338 = vsub.s32 %v3335, %v3337
    %v3339 = vrot.slane %v3331, %v3338
    %v3341 = vunpack.c.l.s4 1983009808
    %v3342 = vunpack.c.0.s8 %v3341
    %v3343 = vlaneseq
    %v3344 = vshrl.u32 %v3343, 7
    %v3345 = vsub.s32 %v3342, %v3344
    %v3346 = vrot.slane %v3332, %v3345
    %v3347 = vcombine.low %v3323, %v3339
    %v3348 = vcombine.high %v3323, %v3339
    %v3350 = vunpack.c.l.s4 1934713408
    %v3351 = vunpack.c.0.s8 %v3350
    %v3352 = vlaneseq
    %v3353 = vshrl.u32 %v3352, 7
    %v3354 = vsub.s32 %v3351, %v3353
    %v3355 = vrot.slane %v3347, %v3354
    %v3357 = vunpack.c.l.s4 1934713408
    %v3358 = vunpack.c.0.s8 %v3357
    %v3359 = vlaneseq
    %v3360 = vshrl.u32 %v3359, 7
    %v3361 = vsub.s32 %v3358, %v3360
    %v3362 = vrot.slane %v3348, %v3361
    %v3363 = vcombine.low %v3330, %v3346
    %v3364 = vcombine.high %v3330, %v3346
    %v3366 = vunpack.c.l.s4 1934713408
    %v3367 = vunpack.c.0.s8 %v3366
    %v3368 = vlaneseq
    %v3369 = vshrl.u32 %v3368, 7
    %v3370 = vsub.s32 %v3367, %v3369
    %v3371 = vrot.slane %v3363, %v3370
    %v3373 = vunpack.c.l.s4 1934713408
    %v3374 = vunpack.c.0.s8 %v3373
    %v3375 = vlaneseq
    %v3376 = vshrl.u32 %v3375, 7
    %v3377 = vsub.s32 %v3374, %v3376
    %v3378 = vrot.slane %v3364, %v3377
    %v3379 = vcombine.high %v3355, 0.0
    %v3380 = vcombine.high %v3362, 0.0
    %v3381 = vcombine.high %v3371, 0.0
    %v3382 = vcombine.high %v3378, 0.0
    %v3383 = vcombine.low %v3044, %v3132
    %v3384 = vcombine.high %v3044, %v3132
    %v3386 = vunpack.c.l.s4 1983009808
    %v3387 = vunpack.c.0.s8 %v3386
    %v3388 = vlaneseq
    %v3389 = vshrl.u32 %v3388, 7
    %v3390 = vsub.s32 %v3387, %v3389
    %v3391 = vrot.slane %v3383, %v3390
    %v3393 = vunpack.c.l.s4 1983009808
    %v3394 = vunpack.c.0.s8 %v3393
    %v3395 = vlaneseq
    %v3396 = vshrl.u32 %v3395, 7
    %v3397 = vsub.s32 %v3394, %v3396
    %v3398 = vrot.slane %v3384, %v3397
    %v3399 = vcombine.low %v3088, %v3176
    %v3400 = vcombine.high %v3088, %v3176
    %v3402 = vunpack.c.l.s4 1983009808
    %v3403 = vunpack.c.0.s8 %v3402
    %v3404 = vlaneseq
    %v3405 = vshrl.u32 %v3404, 7
    %v3406 = vsub.s32 %v3403, %v3405
    %v3407 = vrot.slane %v3399, %v3406
    %v3409 = vunpack.c.l.s4 1983009808
    %v3410 = vunpack.c.0.s8 %v3409
    %v3411 = vlaneseq
    %v3412 = vshrl.u32 %v3411, 7
    %v3413 = vsub.s32 %v3410, %v3412
    %v3414 = vrot.slane %v3400, %v3413
    %v3415 = vcombine.low %v3391, %v3407
    %v3416 = vcombine.high %v3391, %v3407
    %v3418 = vunpack.c.l.s4 1934713408
    %v3419 = vunpack.c.0.s8 %v3418
    %v3420 = vlaneseq
    %v3421 = vshrl.u32 %v3420, 7
    %v3422 = vsub.s32 %v3419, %v3421
    %v3423 = vrot.slane %v3415, %v3422
    %v3425 = vunpack.c.l.s4 1934713408
    %v3426 = vunpack.c.0.s8 %v3425
    %v3427 = vlaneseq
    %v3428 = vshrl.u32 %v3427, 7
    %v3429 = vsub.s32 %v3426, %v3428
    %v3430 = vrot.slane %v3416, %v3429
    %v3431 = vcombine.low %v3398, %v3414
    %v3432 = vcombine.high %v3398, %v3414
    %v3434 = vunpack.c.l.s4 1934713408
    %v3435 = vunpack.c.0.s8 %v3434
    %v3436 = vlaneseq
    %v3437 = vshrl.u32 %v3436, 7
    %v3438 = vsub.s32 %v3435, %v3437
    %v3439 = vrot.slane %v3431, %v3438
    %v3441 = vunpack.c.l.s4 1934713408
    %v3442 = vunpack.c.0.s8 %v3441
    %v3443 = vlaneseq
    %v3444 = vshrl.u32 %v3443, 7
    %v3445 = vsub.s32 %v3442, %v3444
    %v3446 = vrot.slane %v3432, %v3445
    %v3447 = vcombine.high %v3423, 0.0
    %v3448 = vcombine.high %v3430, 0.0
    %v3449 = vcombine.high %v3439, 0.0
    %v3450 = vcombine.high %v3446, 0.0
    %v3451 = vcombine.low %v3219, %v3226
    %v3453 = vunpack.c.l.s4 1983009808
    %v3454 = vunpack.c.0.s8 %v3453
    %v3455 = vlaneseq
    %v3456 = vshrl.u32 %v3455, 7
    %v3457 = vsub.s32 %v3454, %v3456
    %v3458 = vrot.slane %v3451, %v3457
    %v3459 = vcombine.low %v3243, %v3244
    %v3461 = vunpack.c.l.s4 1983009808
    %v3462 = vunpack.c.0.s8 %v3461
    %v3463 = vlaneseq
    %v3464 = vshrl.u32 %v3463, 7
    %v3465 = vsub.s32 %v3462, %v3464
    %v3466 = vrot.slane %v3459, %v3465
    %v3467 = vcombine.low %v3235, %v3242
    %v3469 = vunpack.c.l.s4 1983009808
    %v3470 = vunpack.c.0.s8 %v3469
    %v3471 = vlaneseq
    %v3472 = vshrl.u32 %v3471, 7
    %v3473 = vsub.s32 %v3470, %v3472
    %v3474 = vrot.slane %v3467, %v3473
    %v3475 = vcombine.low %v3245, %v3246
    %v3477 = vunpack.c.l.s4 1983009808
    %v3478 = vunpack.c.0.s8 %v3477
    %v3479 = vlaneseq
    %v3480 = vshrl.u32 %v3479, 7
    %v3481 = vsub.s32 %v3478, %v3480
    %v3482 = vrot.slane %v3475, %v3481
    %v3483 = vcombine.low %v3458, %v3466
    %v3484 = vcombine.high %v3458, %v3466
    %v3486 = vunpack.c.l.s4 1934713408
    %v3487 = vunpack.c.0.s8 %v3486
    %v3488 = vlaneseq
    %v3489 = vshrl.u32 %v3488, 7
    %v3490 = vsub.s32 %v3487, %v3489
    %v3491 = vrot.slane %v3483, %v3490
    %v3493 = vunpack.c.l.s4 1934713408
    %v3494 = vunpack.c.0.s8 %v3493
    %v3495 = vlaneseq
    %v3496 = vshrl.u32 %v3495, 7
    %v3497 = vsub.s32 %v3494, %v3496
    %v3498 = vrot.slane %v3484, %v3497
    %v3499 = vcombine.low %v3474, %v3482
    %v3500 = vcombine.high %v3474, %v3482
    %v3502 = vunpack.c.l.s4 1934713408
    %v3503 = vunpack.c.0.s8 %v3502
    %v3504 = vlaneseq
    %v3505 = vshrl.u32 %v3504, 7
    %v3506 = vsub.s32 %v3503, %v3505
    %v3507 = vrot.slane %v3499, %v3506
    %v3509 = vunpack.c.l.s4 1934713408
    %v3510 = vunpack.c.0.s8 %v3509
    %v3511 = vlaneseq
    %v3512 = vshrl.u32 %v3511, 7
    %v3513 = vsub.s32 %v3510, %v3512
    %v3514 = vrot.slane %v3500, %v3513
    %v3515 = vcombine.low %v3491, %v3507
    %v3516 = vcombine.high %v3491, %v3507
    %v3517 = vcombine.low %v3498, %v3514
    %v3518 = vcombine.high %v3498, %v3514
    %v3519 = vcombine.low %v3287, %v3294
    %v3521 = vunpack.c.l.s4 1983009808
    %v3522 = vunpack.c.0.s8 %v3521
    %v3523 = vlaneseq
    %v3524 = vshrl.u32 %v3523, 7
    %v3525 = vsub.s32 %v3522, %v3524
    %v3526 = vrot.slane %v3519, %v3525
    %v3527 = vcombine.low %v3311, %v3312
    %v3529 = vunpack.c.l.s4 1983009808
    %v3530 = vunpack.c.0.s8 %v3529
    %v3531 = vlaneseq
    %v3532 = vshrl.u32 %v3531, 7
    %v3533 = vsub.s32 %v3530, %v3532
    %v3534 = vrot.slane %v3527, %v3533
    %v3535 = vcombine.low %v3303, %v3310
    %v3537 = vunpack.c.l.s4 1983009808
    %v3538 = vunpack.c.0.s8 %v3537
    %v3539 = vlaneseq
    %v3540 = vshrl.u32 %v3539, 7
    %v3541 = vsub.s32 %v3538, %v3540
    %v3542 = vrot.slane %v3535, %v3541
    %v3543 = vcombine.low %v3313, %v3314
    %v3545 = vunpack.c.l.s4 1983009808
    %v3546 = vunpack.c.0.s8 %v3545
    %v3547 = vlaneseq
    %v3548 = vshrl.u32 %v3547, 7
    %v3549 = vsub.s32 %v3546, %v3548
    %v3550 = vrot.slane %v3543, %v3549
    %v3551 = vcombine.low %v3526, %v3534
    %v3552 = vcombine.high %v3526, %v3534
    %v3554 = vunpack.c.l.s4 1934713408
    %v3555 = vunpack.c.0.s8 %v3554
    %v3556 = vlaneseq
    %v3557 = vshrl.u32 %v3556, 7
    %v3558 = vsub.s32 %v3555, %v3557
    %v3559 = vrot.slane %v3551, %v3558
    %v3561 = vunpack.c.l.s4 1934713408
    %v3562 = vunpack.c.0.s8 %v3561
    %v3563 = vlaneseq
    %v3564 = vshrl.u32 %v3563, 7
    %v3565 = vsub.s32 %v3562, %v3564
    %v3566 = vrot.slane %v3552, %v3565
    %v3567 = vcombine.low %v3542, %v3550
    %v3568 = vcombine.high %v3542, %v3550
    %v3570 = vunpack.c.l.s4 1934713408
    %v3571 = vunpack.c.0.s8 %v3570
    %v3572 = vlaneseq
    %v3573 = vshrl.u32 %v3572, 7
    %v3574 = vsub.s32 %v3571, %v3573
    %v3575 = vrot.slane %v3567, %v3574
    %v3577 = vunpack.c.l.s4 1934713408
    %v3578 = vunpack.c.0.s8 %v3577
    %v3579 = vlaneseq
    %v3580 = vshrl.u32 %v3579, 7
    %v3581 = vsub.s32 %v3578, %v3580
    %v3582 = vrot.slane %v3568, %v3581
    %v3583 = vcombine.low %v3559, %v3575
    %v3584 = vcombine.high %v3559, %v3575
    %v3585 = vcombine.low %v3566, %v3582
    %v3586 = vcombine.high %v3566, %v3582
    %v3587 = vcombine.low %v3355, %v3362
    %v3589 = vunpack.c.l.s4 1983009808
    %v3590 = vunpack.c.0.s8 %v3589
    %v3591 = vlaneseq
    %v3592 = vshrl.u32 %v3591, 7
    %v3593 = vsub.s32 %v3590, %v3592
    %v3594 = vrot.slane %v3587, %v3593
    %v3595 = vcombine.low %v3379, %v3380
    %v3597 = vunpack.c.l.s4 1983009808
    %v3598 = vunpack.c.0.s8 %v3597
    %v3599 = vlaneseq
    %v3600 = vshrl.u32 %v3599, 7
    %v3601 = vsub.s32 %v3598, %v3600
    %v3602 = vrot.slane %v3595, %v3601
    %v3603 = vcombine.low %v3371, %v3378
    %v3605 = vunpack.c.l.s4 1983009808
    %v3606 = vunpack.c.0.s8 %v3605
    %v3607 = vlaneseq
    %v3608 = vshrl.u32 %v3607, 7
    %v3609 = vsub.s32 %v3606, %v3608
    %v3610 = vrot.slane %v3603, %v3609
    %v3611 = vcombine.low %v3381, %v3382
    %v3613 = vunpack.c.l.s4 1983009808
    %v3614 = vunpack.c.0.s8 %v3613
    %v3615 = vlaneseq
    %v3616 = vshrl.u32 %v3615, 7
    %v3617 = vsub.s32 %v3614, %v3616
    %v3618 = vrot.slane %v3611, %v3617
    %v3619 = vcombine.low %v3594, %v3602
    %v3620 = vcombine.high %v3594, %v3602
    %v3622 = vunpack.c.l.s4 1934713408
    %v3623 = vunpack.c.0.s8 %v3622
    %v3624 = vlaneseq
    %v3625 = vshrl.u32 %v3624, 7
    %v3626 = vsub.s32 %v3623, %v3625
    %v3627 = vrot.slane %v3619, %v3626
    %v3629 = vunpack.c.l.s4 1934713408
    %v3630 = vunpack.c.0.s8 %v3629
    %v3631 = vlaneseq
    %v3632 = vshrl.u32 %v3631, 7
    %v3633 = vsub.s32 %v3630, %v3632
    %v3634 = vrot.slane %v3620, %v3633
    %v3635 = vcombine.low %v3610, %v3618
    %v3636 = vcombine.high %v3610, %v3618
    %v3638 = vunpack.c.l.s4 1934713408
    %v3639 = vunpack.c.0.s8 %v3638
    %v3640 = vlaneseq
    %v3641 = vshrl.u32 %v3640, 7
    %v3642 = vsub.s32 %v3639, %v3641
    %v3643 = vrot.slane %v3635, %v3642
    %v3645 = vunpack.c.l.s4 1934713408
    %v3646 = vunpack.c.0.s8 %v3645
    %v3647 = vlaneseq
    %v3648 = vshrl.u32 %v3647, 7
    %v3649 = vsub.s32 %v3646, %v3648
    %v3650 = vrot.slane %v3636, %v3649
    %v3651 = vcombine.low %v3627, %v3643
    %v3652 = vcombine.high %v3627, %v3643
    %v3653 = vcombine.low %v3634, %v3650
    %v3654 = vcombine.high %v3634, %v3650
    %v3655 = vcombine.low %v3423, %v3430
    %v3657 = vunpack.c.l.s4 1983009808
    %v3658 = vunpack.c.0.s8 %v3657
    %v3659 = vlaneseq
    %v3660 = vshrl.u32 %v3659, 7
    %v3661 = vsub.s32 %v3658, %v3660
    %v3662 = vrot.slane %v3655, %v3661
    %v3663 = vcombine.low %v3447, %v3448
    %v3665 = vunpack.c.l.s4 1983009808
    %v3666 = vunpack.c.0.s8 %v3665
    %v3667 = vlaneseq
    %v3668 = vshrl.u32 %v3667, 7
    %v3669 = vsub.s32 %v3666, %v3668
    %v3670 = vrot.slane %v3663, %v3669
    %v3671 = vcombine.low %v3439, %v3446
    %v3673 = vunpack.c.l.s4 1983009808
    %v3674 = vunpack.c.0.s8 %v3673
    %v3675 = vlaneseq
    %v3676 = vshrl.u32 %v3675, 7
    %v3677 = vsub.s32 %v3674, %v3676
    %v3678 = vrot.slane %v3671, %v3677
    %v3679 = vcombine.low %v3449, %v3450
    %v3681 = vunpack.c.l.s4 1983009808
    %v3682 = vunpack.c.0.s8 %v3681
    %v3683 = vlaneseq
    %v3684 = vshrl.u32 %v3683, 7
    %v3685 = vsub.s32 %v3682, %v3684
    %v3686 = vrot.slane %v3679, %v3685
    %v3687 = vcombine.low %v3662, %v3670
    %v3688 = vcombine.high %v3662, %v3670
    %v3690 = vunpack.c.l.s4 1934713408
    %v3691 = vunpack.c.0.s8 %v3690
    %v3692 = vlaneseq
    %v3693 = vshrl.u32 %v3692, 7
    %v3694 = vsub.s32 %v3691, %v3693
    %v3695 = vrot.slane %v3687, %v3694
    %v3697 = vunpack.c.l.s4 1934713408
    %v3698 = vunpack.c.0.s8 %v3697
    %v3699 = vlaneseq
    %v3700 = vshrl.u32 %v3699, 7
    %v3701 = vsub.s32 %v3698, %v3700
    %v3702 = vrot.slane %v3688, %v3701
    %v3703 = vcombine.low %v3678, %v3686
    %v3704 = vcombine.high %v3678, %v3686
    %v3706 = vunpack.c.l.s4 1934713408
    %v3707 = vunpack.c.0.s8 %v3706
    %v3708 = vlaneseq
    %v3709 = vshrl.u32 %v3708, 7
    %v3710 = vsub.s32 %v3707, %v3709
    %v3711 = vrot.slane %v3703, %v3710
    %v3713 = vunpack.c.l.s4 1934713408
    %v3714 = vunpack.c.0.s8 %v3713
    %v3715 = vlaneseq
    %v3716 = vshrl.u32 %v3715, 7
    %v3717 = vsub.s32 %v3714, %v3716
    %v3718 = vrot.slane %v3704, %v3717
    %v3719 = vcombine.low %v3695, %v3711
    %v3720 = vcombine.high %v3695, %v3711
    %v3721 = vcombine.low %v3702, %v3718
    %v3722 = vcombine.high %v3702, %v3718
    %3727 = vrot.lane.b32.xlu0 %v3516, 32
    %v3728 = vpop.permute.xlu0 %3727
    %3729 = vrot.lane.b32.xlu0 %v3584, 32
    %v3730 = vpop.permute.xlu0 %3729
    %3731 = vrot.lane.b32.xlu0 %v3652, 32
    %v3732 = vpop.permute.xlu0 %3731
    %3733 = vrot.lane.b32.xlu0 %v3720, 32
    %v3734 = vpop.permute.xlu0 %3733
    %3743 = vrot.lane.b32.xlu0 %v3517, 64
    %v3744 = vpop.permute.xlu0 %3743
    %3745 = vrot.lane.b32.xlu0 %v3585, 64
    %v3746 = vpop.permute.xlu0 %3745
    %3747 = vrot.lane.b32.xlu0 %v3653, 64
    %v3748 = vpop.permute.xlu0 %3747
    %3749 = vrot.lane.b32.xlu0 %v3721, 64
    %v3750 = vpop.permute.xlu0 %3749
    %3759 = vrot.lane.b32.xlu0 %v3518, 96
    %v3760 = vpop.permute.xlu0 %3759
    %3761 = vrot.lane.b32.xlu0 %v3586, 96
    %v3762 = vpop.permute.xlu0 %3761
    %3763 = vrot.lane.b32.xlu0 %v3654, 96
    %v3764 = vpop.permute.xlu0 %3763
    %3765 = vrot.lane.b32.xlu0 %v3722, 96
    %v3766 = vpop.permute.xlu0 %3765
    %v3771 = vsel %vm2265, %v3515, %v3728
    %v3772 = vsel %vm2265, %v3583, %v3730
    %v3773 = vsel %vm2265, %v3651, %v3732
    %v3774 = vsel %vm2265, %v3719, %v3734
    %vm3775 = vcmask 523264
    %v3776 = vsel %vm3775, %v3771, %v3744
    %v3777 = vsel %vm3775, %v3772, %v3746
    %v3778 = vsel %vm3775, %v3773, %v3748
    %v3779 = vsel %vm3775, %v3774, %v3750
    %vm3780 = vcmask 785408
    %v3781 = vsel %vm3780, %v3776, %v3760
    %v3782 = vsel %vm3780, %v3777, %v3762
    %v3783 = vsel %vm3780, %v3778, %v3764
    %v3784 = vsel %vm3780, %v3779, %v3766
    %v3785 = vpack.c.bf16 %v3782, %v3781
    %v3786 = vpack.c.bf16 %v3784, %v3783
    %v3787 = vld [vmem:[#allocation10] sm:$0xf]
    %v3788 = vld [vmem:[#allocation10 + $0x4] sm:$0xf]
    %v3789 = vld [vmem:[#allocation10 + $0x8] sm:$0xf]
    %v3790 = vld [vmem:[#allocation10 + $0xc] sm:$0xf]
    %v3791 = vld [vmem:[#allocation10 + $0x10] sm:$0xf]
    %v3792 = vld [vmem:[#allocation10 + $0x14] sm:$0xf]
    %v3793 = vld [vmem:[#allocation10 + $0x18] sm:$0xf]
    %v3794 = vld [vmem:[#allocation10 + $0x1c] sm:$0xf]
    %v3795 = vld [vmem:[#allocation10 + $0x20] sm:$0xf]
    %v3796 = vld [vmem:[#allocation10 + $0x24] sm:$0xf]
    %v3797 = vld [vmem:[#allocation10 + $0x28] sm:$0xf]
    %v3798 = vld [vmem:[#allocation10 + $0x2c] sm:$0xf]
    %v3799 = vld [vmem:[#allocation10 + $0x30] sm:$0xf]
    %v3800 = vld [vmem:[#allocation10 + $0x34] sm:$0xf]
    %v3801 = vld [vmem:[#allocation10 + $0x38] sm:$0xf]
    %v3802 = vld [vmem:[#allocation10 + $0x3c] sm:$0xf]
    %v3803 = vld [vmem:[%s6] sm:$0x1]
    %v3805 = vlaneseq
    %v3806 = vshrl.u32 %v3805, 7
    %v3807 = vsub.s32 0, %v3806
    %v3808 = vrot.slane %v3803, %v3807
    %v3826 = vunpack.c.l.b16 %v3787
    %v3827 = vunpack.c.l.b16 %v3788
    %v3828 = vunpack.c.l.b16 %v3789
    %v3829 = vunpack.c.l.b16 %v3790
    %v3830 = vunpack.c.l.b16 %v3791
    %v3831 = vunpack.c.l.b16 %v3792
    %v3832 = vunpack.c.l.b16 %v3793
    %v3833 = vunpack.c.l.b16 %v3794
    %v3834 = vunpack.c.l.b16 %v3795
    %v3835 = vunpack.c.l.b16 %v3796
    %v3836 = vunpack.c.l.b16 %v3797
    %v3837 = vunpack.c.l.b16 %v3798
    %v3838 = vunpack.c.l.b16 %v3799
    %v3839 = vunpack.c.l.b16 %v3800
    %v3840 = vunpack.c.l.b16 %v3801
    %v3841 = vunpack.c.l.b16 %v3802
    %v3842 = vpack.c.b16 %v3827, %v3826
    %v3843 = vpack.c.b16 %v3829, %v3828
    %v3844 = vpack.c.b16 %v3831, %v3830
    %v3845 = vpack.c.b16 %v3833, %v3832
    %v3846 = vpack.c.b16 %v3835, %v3834
    %v3847 = vpack.c.b16 %v3837, %v3836
    %v3848 = vpack.c.b16 %v3839, %v3838
    %v3849 = vpack.c.b16 %v3841, %v3840
    %3858 = vmatprep.subr.bf16.mxu0 0
    %3859 = vmatpush1.bf16.msra.mxu0 %v3842
    %3860 = vmatprep.subr.bf16.mxu0 0
    %3861 = vmatpush1.bf16.msra.mxu0 %v3843
    %3862 = vmatprep.subr.bf16.mxu0 0
    %3863 = vmatpush1.bf16.msra.mxu0 %v3844
    %3864 = vmatprep.subr.bf16.mxu0 0
    %3865 = vmatpush1.bf16.msra.mxu0 %v3845
    %3866 = vmatprep.subr.bf16.mxu0 0
    %3867 = vmatpush1.bf16.msra.mxu0 %v3846
    %3868 = vmatprep.subr.bf16.mxu0 0
    %3869 = vmatpush1.bf16.msra.mxu0 %v3847
    %3870 = vmatprep.subr.bf16.mxu0 0
    %3871 = vmatpush1.bf16.msra.mxu0 %v3848
    %3872 = vmatprep.subr.bf16.mxu0 0
    %3873 = vmatpush1.bf16.msra.mxu0 %v3849
    %3874 = vmatprep.subr.bf16.mxu0 0
    %3875 = vmatpush1.bf16.msra.mxu0 0
    %3876 = vmatprep.subr.bf16.mxu0 0
    %3877 = vmatpush1.bf16.msra.mxu0 0
    %3878 = vmatprep.subr.bf16.mxu0 0
    %3879 = vmatpush1.bf16.msra.mxu0 0
    %3880 = vmatprep.subr.bf16.mxu0 0
    %3881 = vmatpush1.bf16.msra.mxu0 0
    %3882 = vmatprep.subr.bf16.mxu0 0
    %3883 = vmatpush1.bf16.msra.mxu0 0
    %3884 = vmatprep.subr.bf16.mxu0 0
    %3885 = vmatpush1.bf16.msra.mxu0 0
    %3886 = vmatprep.subr.bf16.mxu0 0
    %3887 = vmatpush1.bf16.msra.mxu0 0
    %3888 = vmatprep.subr.bf16.mxu0 0
    %3889 = vmatpush1.bf16.msra.mxu0 0
    %3890 = vmatprep.mubr.bf16.mxu0 0
    %3891 = vmatmul.mubr.bf16.gmra.mrb[0].mxu0 %v3785
    %v3892 = vpop.f32.mrb[0].mxu0
    %v3893 = vadd.f32 %v3808, %v3892
    %v3894 = vpop.f32.mrb[0].mxu0
    %v3895 = vpop.f32.mrb[0].mxu0
    %v3896 = vadd.f32 %v3808, %v3895
    %v3897 = vpop.f32.mrb[0].mxu0
    %3898 = vmatprep.mubr.bf16.mxu0 0
    %3899 = vmatmul.mubr.bf16.gmra.mrb[0].mxu0 %v3786
    %v3900 = vpop.f32.mrb[0].mxu0
    %v3901 = vadd.f32 %v3808, %v3900
    %v3902 = vpop.f32.mrb[0].mxu0
    %v3903 = vpop.f32.mrb[0].mxu0
    %v3904 = vadd.f32 %v3808, %v3903
    %v3905 = vpop.f32.mrb[0].mxu0
    %3906 = vdwg.mxu0
    %v3907 = vadd.f32 %v137, %v3893
    %v3908 = vadd.f32 %v138, %v3896
    %v3909 = vadd.f32 %v139, %v3901
    %v3910 = vadd.f32 %v140, %v3904
    %v3911 = vld [vmem:[%s7] sm:$0x1]
    %v3912 = vld [vmem:[%s8] sm:$0x1]
    %3913 = vadd.xlane.f32.xlu0 %v3907
    %v3914 = vpop.xlane.xlu0 %3913
    %3915 = vadd.xlane.f32.xlu0 %v3908
    %v3916 = vpop.xlane.xlu0 %3915
    %3917 = vadd.xlane.f32.xlu0 %v3909
    %v3918 = vpop.xlane.xlu0 %3917
    %3919 = vadd.xlane.f32.xlu0 %v3910
    %v3920 = vpop.xlane.xlu0 %3919
    %v3921 = vmul.f32 %v3914, %v151
    %v3922 = vmul.f32 %v3916, %v151
    %v3923 = vmul.f32 %v3918, %v151
    %v3924 = vmul.f32 %v3920, %v151
    %v3925 = vsub.f32 %v3907, %v3921
    %v3926 = vsub.f32 %v3908, %v3922
    %v3927 = vsub.f32 %v3909, %v3923
    %v3928 = vsub.f32 %v3910, %v3924
    %v3929 = vmul.f32 %v3925, %v3925
    %v3930 = vmul.f32 %v3926, %v3926
    %v3931 = vmul.f32 %v3927, %v3927
    %v3932 = vmul.f32 %v3928, %v3928
    %3933 = vadd.xlane.f32.xlu0 %v3929
    %v3934 = vpop.xlane.xlu0 %3933
    %3935 = vadd.xlane.f32.xlu0 %v3930
    %v3936 = vpop.xlane.xlu0 %3935
    %3937 = vadd.xlane.f32.xlu0 %v3931
    %v3938 = vpop.xlane.xlu0 %3937
    %3939 = vadd.xlane.f32.xlu0 %v3932
    %v3940 = vpop.xlane.xlu0 %3939
    %v3941 = vmul.f32 %v3934, %v151
    %v3942 = vmul.f32 %v3936, %v151
    %v3943 = vmul.f32 %v3938, %v151
    %v3944 = vmul.f32 %v3940, %v151
    %v3945 = vadd.f32 %v3941, 1e-05
    %v3946 = vadd.f32 %v3942, 1e-05
    %v3947 = vadd.f32 %v3943, 1e-05
    %v3948 = vadd.f32 %v3944, 1e-05
    %v3949 = vrsqrt.pop %v3945
    %v3950 = vrsqrt.pop %v3946
    %v3951 = vrsqrt.pop %v3947
    %v3952 = vrsqrt.pop %v3948
    %v3953 = vmul.f32 %v3925, %v3949
    %v3954 = vmul.f32 %v3926, %v3950
    %v3955 = vmul.f32 %v3927, %v3951
    %v3956 = vmul.f32 %v3928, %v3952
    %v3958 = vlaneseq
    %v3959 = vshrl.u32 %v3958, 7
    %v3960 = vsub.s32 0, %v3959
    %v3961 = vrot.slane %v3911, %v3960
    %v3963 = vmul.f32 %v3953, %v3961
    %v3964 = vmul.f32 %v3954, %v3961
    %v3965 = vmul.f32 %v3955, %v3961
    %v3966 = vmul.f32 %v3956, %v3961
    %v3968 = vlaneseq
    %v3969 = vshrl.u32 %v3968, 7
    %v3970 = vsub.s32 0, %v3969
    %v3971 = vrot.slane %v3912, %v3970
    %v3973 = vadd.f32 %v3963, %v3971
    %v3974 = vadd.f32 %v3964, %v3971
    %v3975 = vadd.f32 %v3965, %v3971
    %v3976 = vadd.f32 %v3966, %v3971
    %v3977 = vpack.c.bf16 %v3974, %v3973
    %v3978 = vpack.c.bf16 %v3976, %v3975
    %v3979 = vld [vmem:[#allocation11] sm:$0xff]
    %v3980 = vld [vmem:[#allocation11 + $0x8] sm:$0xff]
    %v3981 = vld [vmem:[#allocation11 + $0x10] sm:$0xff]
    %v3982 = vld [vmem:[#allocation11 + $0x18] sm:$0xff]
    %v3983 = vld [vmem:[#allocation11 + $0x20] sm:$0xff]
    %v3984 = vld [vmem:[#allocation11 + $0x28] sm:$0xff]
    %v3985 = vld [vmem:[#allocation11 + $0x30] sm:$0xff]
    %v3986 = vld [vmem:[#allocation11 + $0x38] sm:$0xff]
    %v3987 = vld [vmem:[#allocation11 + $0x40] sm:$0xff]
    %v3988 = vld [vmem:[#allocation11 + $0x48] sm:$0xff]
    %v3989 = vld [vmem:[#allocation11 + $0x50] sm:$0xff]
    %v3990 = vld [vmem:[#allocation11 + $0x58] sm:$0xff]
    %v3991 = vld [vmem:[#allocation11 + $0x60] sm:$0xff]
    %v3992 = vld [vmem:[#allocation11 + $0x68] sm:$0xff]
    %v3993 = vld [vmem:[#allocation11 + $0x70] sm:$0xff]
    %v3994 = vld [vmem:[#allocation11 + $0x78] sm:$0xff]
    %v3995 = vld [vmem:[#allocation11 + $0x80] sm:$0xff]
    %v3996 = vld [vmem:[#allocation11 + $0x88] sm:$0xff]
    %v3997 = vld [vmem:[#allocation11 + $0x90] sm:$0xff]
    %v3998 = vld [vmem:[#allocation11 + $0x98] sm:$0xff]
    %v3999 = vld [vmem:[#allocation11 + $0xa0] sm:$0xff]
    %v4000 = vld [vmem:[#allocation11 + $0xa8] sm:$0xff]
    %v4001 = vld [vmem:[#allocation11 + $0xb0] sm:$0xff]
    %v4002 = vld [vmem:[#allocation11 + $0xb8] sm:$0xff]
    %v4003 = vld [vmem:[#allocation11 + $0xc0] sm:$0xff]
    %v4004 = vld [vmem:[#allocation11 + $0xc8] sm:$0xff]
    %v4005 = vld [vmem:[#allocation11 + $0xd0] sm:$0xff]
    %v4006 = vld [vmem:[#allocation11 + $0xd8] sm:$0xff]
    %v4007 = vld [vmem:[#allocation11 + $0xe0] sm:$0xff]
    %v4008 = vld [vmem:[#allocation11 + $0xe8] sm:$0xff]
    %v4009 = vld [vmem:[#allocation11 + $0xf0] sm:$0xff]
    %v4010 = vld [vmem:[#allocation11 + $0xf8] sm:$0xff]
    %v4011 = vld [vmem:[%s10] sm:$0xf]
    %v4013 = vlaneseq
    %v4014 = vshrl.u32 %v4013, 7
    %v4015 = vsub.s32 0, %v4014
    %v4016 = vrot.slane %v4011, %v4015
    %v4017 = vlaneseq
    %v4018 = vshrl.u32 %v4017, 7
    %v4019 = vsub.s32 1, %v4018
    %v4020 = vrot.slane %v4011, %v4019
    %v4021 = vlaneseq
    %v4022 = vshrl.u32 %v4021, 7
    %v4023 = vsub.s32 2, %v4022
    %v4024 = vrot.slane %v4011, %v4023
    %v4025 = vlaneseq
    %v4026 = vshrl.u32 %v4025, 7
    %v4027 = vsub.s32 3, %v4026
    %v4028 = vrot.slane %v4011, %v4027
    %v4065 = vunpack.c.l.b16 %v3979
    %v4066 = vunpack.c.h.b16 %v3979
    %v4067 = vunpack.c.l.b16 %v3980
    %v4068 = vunpack.c.h.b16 %v3980
    %v4069 = vunpack.c.l.b16 %v3981
    %v4070 = vunpack.c.h.b16 %v3981
    %v4071 = vunpack.c.l.b16 %v3982
    %v4072 = vunpack.c.h.b16 %v3982
    %v4073 = vunpack.c.l.b16 %v3983
    %v4074 = vunpack.c.h.b16 %v3983
    %v4075 = vunpack.c.l.b16 %v3984
    %v4076 = vunpack.c.h.b16 %v3984
    %v4077 = vunpack.c.l.b16 %v3985
    %v4078 = vunpack.c.h.b16 %v3985
    %v4079 = vunpack.c.l.b16 %v3986
    %v4080 = vunpack.c.h.b16 %v3986
    %v4081 = vunpack.c.l.b16 %v3987
    %v4082 = vunpack.c.h.b16 %v3987
    %v4083 = vunpack.c.l.b16 %v3988
    %v4084 = vunpack.c.h.b16 %v3988
    %v4085 = vunpack.c.l.b16 %v3989
    %v4086 = vunpack.c.h.b16 %v3989
    %v4087 = vunpack.c.l.b16 %v3990
    %v4088 = vunpack.c.h.b16 %v3990
    %v4089 = vunpack.c.l.b16 %v3991
    %v4090 = vunpack.c.h.b16 %v3991
    %v4091 = vunpack.c.l.b16 %v3992
    %v4092 = vunpack.c.h.b16 %v3992
    %v4093 = vunpack.c.l.b16 %v3993
    %v4094 = vunpack.c.h.b16 %v3993
    %v4095 = vunpack.c.l.b16 %v3994
    %v4096 = vunpack.c.h.b16 %v3994
    %v4097 = vunpack.c.l.b16 %v3995
    %v4098 = vunpack.c.h.b16 %v3995
    %v4099 = vunpack.c.l.b16 %v3996
    %v4100 = vunpack.c.h.b16 %v3996
    %v4101 = vunpack.c.l.b16 %v3997
    %v4102 = vunpack.c.h.b16 %v3997
    %v4103 = vunpack.c.l.b16 %v3998
    %v4104 = vunpack.c.h.b16 %v3998
    %v4105 = vunpack.c.l.b16 %v3999
    %v4106 = vunpack.c.h.b16 %v3999
    %v4107 = vunpack.c.l.b16 %v4000
    %v4108 = vunpack.c.h.b16 %v4000
    %v4109 = vunpack.c.l.b16 %v4001
    %v4110 = vunpack.c.h.b16 %v4001
    %v4111 = vunpack.c.l.b16 %v4002
    %v4112 = vunpack.c.h.b16 %v4002
    %v4113 = vunpack.c.l.b16 %v4003
    %v4114 = vunpack.c.h.b16 %v4003
    %v4115 = vunpack.c.l.b16 %v4004
    %v4116 = vunpack.c.h.b16 %v4004
    %v4117 = vunpack.c.l.b16 %v4005
    %v4118 = vunpack.c.h.b16 %v4005
    %v4119 = vunpack.c.l.b16 %v4006
    %v4120 = vunpack.c.h.b16 %v4006
    %v4121 = vunpack.c.l.b16 %v4007
    %v4122 = vunpack.c.h.b16 %v4007
    %v4123 = vunpack.c.l.b16 %v4008
    %v4124 = vunpack.c.h.b16 %v4008
    %v4125 = vunpack.c.l.b16 %v4009
    %v4126 = vunpack.c.h.b16 %v4009
    %v4127 = vunpack.c.l.b16 %v4010
    %v4128 = vunpack.c.h.b16 %v4010
    %v4129 = vpack.c.b16 %v4069, %v4065
    %v4130 = vpack.c.b16 %v4070, %v4066
    %v4131 = vpack.c.b16 %v4071, %v4067
    %v4132 = vpack.c.b16 %v4072, %v4068
    %v4133 = vpack.c.b16 %v4077, %v4073
    %v4134 = vpack.c.b16 %v4078, %v4074
    %v4135 = vpack.c.b16 %v4079, %v4075
    %v4136 = vpack.c.b16 %v4080, %v4076
    %v4137 = vpack.c.b16 %v4085, %v4081
    %v4138 = vpack.c.b16 %v4086, %v4082
    %v4139 = vpack.c.b16 %v4087, %v4083
    %v4140 = vpack.c.b16 %v4088, %v4084
    %v4141 = vpack.c.b16 %v4093, %v4089
    %v4142 = vpack.c.b16 %v4094, %v4090
    %v4143 = vpack.c.b16 %v4095, %v4091
    %v4144 = vpack.c.b16 %v4096, %v4092
    %v4145 = vpack.c.b16 %v4101, %v4097
    %v4146 = vpack.c.b16 %v4102, %v4098
    %v4147 = vpack.c.b16 %v4103, %v4099
    %v4148 = vpack.c.b16 %v4104, %v4100
    %v4149 = vpack.c.b16 %v4109, %v4105
    %v4150 = vpack.c.b16 %v4110, %v4106
    %v4151 = vpack.c.b16 %v4111, %v4107
    %v4152 = vpack.c.b16 %v4112, %v4108
    %v4153 = vpack.c.b16 %v4117, %v4113
    %v4154 = vpack.c.b16 %v4118, %v4114
    %v4155 = vpack.c.b16 %v4119, %v4115
    %v4156 = vpack.c.b16 %v4120, %v4116
    %v4157 = vpack.c.b16 %v4125, %v4121
    %v4158 = vpack.c.b16 %v4126, %v4122
    %v4159 = vpack.c.b16 %v4127, %v4123
    %v4160 = vpack.c.b16 %v4128, %v4124
    %4193 = vmatprep.subr.bf16.mxu0 %v4130
    %4194 = vmatpush1.bf16.msra.mxu0 %v4129
    %4195 = vmatprep.subr.bf16.mxu0 %v4134
    %4196 = vmatpush1.bf16.msra.mxu0 %v4133
    %4197 = vmatprep.subr.bf16.mxu0 %v4138
    %4198 = vmatpush1.bf16.msra.mxu0 %v4137
    %4199 = vmatprep.subr.bf16.mxu0 %v4142
    %4200 = vmatpush1.bf16.msra.mxu0 %v4141
    %4201 = vmatprep.subr.bf16.mxu0 %v4146
    %4202 = vmatpush1.bf16.msra.mxu0 %v4145
    %4203 = vmatprep.subr.bf16.mxu0 %v4150
    %4204 = vmatpush1.bf16.msra.mxu0 %v4149
    %4205 = vmatprep.subr.bf16.mxu0 %v4154
    %4206 = vmatpush1.bf16.msra.mxu0 %v4153
    %4207 = vmatprep.subr.bf16.mxu0 %v4158
    %4208 = vmatpush1.bf16.msra.mxu0 %v4157
    %4209 = vmatprep.subr.bf16.mxu0 0
    %4210 = vmatpush1.bf16.msra.mxu0 0
    %4211 = vmatprep.subr.bf16.mxu0 0
    %4212 = vmatpush1.bf16.msra.mxu0 0
    %4213 = vmatprep.subr.bf16.mxu0 0
    %4214 = vmatpush1.bf16.msra.mxu0 0
    %4215 = vmatprep.subr.bf16.mxu0 0
    %4216 = vmatpush1.bf16.msra.mxu0 0
    %4217 = vmatprep.subr.bf16.mxu0 0
    %4218 = vmatpush1.bf16.msra.mxu0 0
    %4219 = vmatprep.subr.bf16.mxu0 0
    %4220 = vmatpush1.bf16.msra.mxu0 0
    %4221 = vmatprep.subr.bf16.mxu0 0
    %4222 = vmatpush1.bf16.msra.mxu0 0
    %4223 = vmatprep.subr.bf16.mxu0 0
    %4224 = vmatpush1.bf16.msra.mxu0 0
    %4225 = vmatprep.mubr.bf16.mxu0 0
    %4226 = vmatmul.mubr.bf16.gmra.mrb[0].mxu0 %v3977
    %v4227 = vpop.f32.mrb[0].mxu0
    %v4228 = vadd.f32 %v4016, %v4227
    %v4229 = vpop.f32.mrb[0].mxu0
    %v4230 = vadd.f32 %v4020, %v4229
    %v4231 = vpop.f32.mrb[0].mxu0
    %v4232 = vadd.f32 %v4016, %v4231
    %v4233 = vpop.f32.mrb[0].mxu0
    %v4234 = vadd.f32 %v4020, %v4233
    %4235 = vmatprep.mubr.bf16.mxu0 0
    %4236 = vmatmul.mubr.bf16.gmra.mrb[0].mxu0 %v3978
    %v4237 = vpop.f32.mrb[0].mxu0
    %v4238 = vadd.f32 %v4016, %v4237
    %v4239 = vpop.f32.mrb[0].mxu0
    %v4240 = vadd.f32 %v4020, %v4239
    %v4241 = vpop.f32.mrb[0].mxu0
    %v4242 = vadd.f32 %v4016, %v4241
    %v4243 = vpop.f32.mrb[0].mxu0
    %v4244 = vadd.f32 %v4020, %v4243
    %4245 = vdwg.mxu0
    %4246 = vmatprep.subr.bf16.mxu0 %v4132
    %4247 = vmatpush1.bf16.msra.mxu0 %v4131
    %4248 = vmatprep.subr.bf16.mxu0 %v4136
    %4249 = vmatpush1.bf16.msra.mxu0 %v4135
    %4250 = vmatprep.subr.bf16.mxu0 %v4140
    %4251 = vmatpush1.bf16.msra.mxu0 %v4139
    %4252 = vmatprep.subr.bf16.mxu0 %v4144
    %4253 = vmatpush1.bf16.msra.mxu0 %v4143
    %4254 = vmatprep.subr.bf16.mxu0 %v4148
    %4255 = vmatpush1.bf16.msra.mxu0 %v4147
    %4256 = vmatprep.subr.bf16.mxu0 %v4152
    %4257 = vmatpush1.bf16.msra.mxu0 %v4151
    %4258 = vmatprep.subr.bf16.mxu0 %v4156
    %4259 = vmatpush1.bf16.msra.mxu0 %v4155
    %4260 = vmatprep.subr.bf16.mxu0 %v4160
    %4261 = vmatpush1.bf16.msra.mxu0 %v4159
    %4262 = vmatprep.subr.bf16.mxu0 0
    %4263 = vmatpush1.bf16.msra.mxu0 0
    %4264 = vmatprep.subr.bf16.mxu0 0
    %4265 = vmatpush1.bf16.msra.mxu0 0
    %4266 = vmatprep.subr.bf16.mxu0 0
    %4267 = vmatpush1.bf16.msra.mxu0 0
    %4268 = vmatprep.subr.bf16.mxu0 0
    %4269 = vmatpush1.bf16.msra.mxu0 0
    %4270 = vmatprep.subr.bf16.mxu0 0
    %4271 = vmatpush1.bf16.msra.mxu0 0
    %4272 = vmatprep.subr.bf16.mxu0 0
    %4273 = vmatpush1.bf16.msra.mxu0 0
    %4274 = vmatprep.subr.bf16.mxu0 0
    %4275 = vmatpush1.bf16.msra.mxu0 0
    %4276 = vmatprep.subr.bf16.mxu0 0
    %4277 = vmatpush1.bf16.msra.mxu0 0
    %4278 = vmatprep.mubr.bf16.mxu0 0
    %4279 = vmatmul.mubr.bf16.gmra.mrb[0].mxu0 %v3977
    %v4280 = vpop.f32.mrb[0].mxu0
    %v4281 = vadd.f32 %v4024, %v4280
    %v4282 = vpop.f32.mrb[0].mxu0
    %v4283 = vadd.f32 %v4028, %v4282
    %v4284 = vpop.f32.mrb[0].mxu0
    %v4285 = vadd.f32 %v4024, %v4284
    %v4286 = vpop.f32.mrb[0].mxu0
    %v4287 = vadd.f32 %v4028, %v4286
    %4288 = vmatprep.mubr.bf16.mxu0 0
    %4289 = vmatmul.mubr.bf16.gmra.mrb[0].mxu0 %v3978
    %v4290 = vpop.f32.mrb[0].mxu0
    %v4291 = vadd.f32 %v4024, %v4290
    %v4292 = vpop.f32.mrb[0].mxu0
    %v4293 = vadd.f32 %v4028, %v4292
    %v4294 = vpop.f32.mrb[0].mxu0
    %v4295 = vadd.f32 %v4024, %v4294
    %v4296 = vpop.f32.mrb[0].mxu0
    %v4297 = vadd.f32 %v4028, %v4296
    %4298 = vdwg.mxu0
    %v4299 = vmul.f32 %v4228, 0.5
    %v4300 = vmul.f32 %v4230, 0.5
    %v4301 = vmul.f32 %v4281, 0.5
    %v4302 = vmul.f32 %v4283, 0.5
    %v4303 = vmul.f32 %v4232, 0.5
    %v4304 = vmul.f32 %v4234, 0.5
    %v4305 = vmul.f32 %v4285, 0.5
    %v4306 = vmul.f32 %v4287, 0.5
    %v4307 = vmul.f32 %v4238, 0.5
    %v4308 = vmul.f32 %v4240, 0.5
    %v4309 = vmul.f32 %v4291, 0.5
    %v4310 = vmul.f32 %v4293, 0.5
    %v4311 = vmul.f32 %v4242, 0.5
    %v4312 = vmul.f32 %v4244, 0.5
    %v4313 = vmul.f32 %v4295, 0.5
    %v4314 = vmul.f32 %v4297, 0.5
    %v4315 = vmul.f32 %v4228, 0.70710677
    %v4316 = vmul.f32 %v4230, 0.70710677
    %v4317 = vmul.f32 %v4281, 0.70710677
    %v4318 = vmul.f32 %v4283, 0.70710677
    %v4319 = vmul.f32 %v4232, 0.70710677
    %v4320 = vmul.f32 %v4234, 0.70710677
    %v4321 = vmul.f32 %v4285, 0.70710677
    %v4322 = vmul.f32 %v4287, 0.70710677
    %v4323 = vmul.f32 %v4238, 0.70710677
    %v4324 = vmul.f32 %v4240, 0.70710677
    %v4325 = vmul.f32 %v4291, 0.70710677
    %v4326 = vmul.f32 %v4293, 0.70710677
    %v4327 = vmul.f32 %v4242, 0.70710677
    %v4328 = vmul.f32 %v4244, 0.70710677
    %v4329 = vmul.f32 %v4295, 0.70710677
    %v4330 = vmul.f32 %v4297, 0.70710677
    %v4331 = verf.f32.pop %v4315
    %v4332 = verf.f32.pop %v4316
    %v4333 = verf.f32.pop %v4317
    %v4334 = verf.f32.pop %v4318
    %v4335 = verf.f32.pop %v4319
    %v4336 = verf.f32.pop %v4320
    %v4337 = verf.f32.pop %v4321
    %v4338 = verf.f32.pop %v4322
    %v4339 = verf.f32.pop %v4323
    %v4340 = verf.f32.pop %v4324
    %v4341 = verf.f32.pop %v4325
    %v4342 = verf.f32.pop %v4326
    %v4343 = verf.f32.pop %v4327
    %v4344 = verf.f32.pop %v4328
    %v4345 = verf.f32.pop %v4329
    %v4346 = verf.f32.pop %v4330
    %v4347 = vadd.f32 %v4331, 1.0
    %v4348 = vadd.f32 %v4332, 1.0
    %v4349 = vadd.f32 %v4333, 1.0
    %v4350 = vadd.f32 %v4334, 1.0
    %v4351 = vadd.f32 %v4335, 1.0
    %v4352 = vadd.f32 %v4336, 1.0
    %v4353 = vadd.f32 %v4337, 1.0
    %v4354 = vadd.f32 %v4338, 1.0
    %v4355 = vadd.f32 %v4339, 1.0
    %v4356 = vadd.f32 %v4340, 1.0
    %v4357 = vadd.f32 %v4341, 1.0
    %v4358 = vadd.f32 %v4342, 1.0
    %v4359 = vadd.f32 %v4343, 1.0
    %v4360 = vadd.f32 %v4344, 1.0
    %v4361 = vadd.f32 %v4345, 1.0
    %v4362 = vadd.f32 %v4346, 1.0
    %v4363 = vmul.f32 %v4299, %v4347
    %v4364 = vmul.f32 %v4300, %v4348
    %v4365 = vmul.f32 %v4301, %v4349
    %v4366 = vmul.f32 %v4302, %v4350
    %v4367 = vmul.f32 %v4303, %v4351
    %v4368 = vmul.f32 %v4304, %v4352
    %v4369 = vmul.f32 %v4305, %v4353
    %v4370 = vmul.f32 %v4306, %v4354
    %v4371 = vmul.f32 %v4307, %v4355
    %v4372 = vmul.f32 %v4308, %v4356
    %v4373 = vmul.f32 %v4309, %v4357
    %v4374 = vmul.f32 %v4310, %v4358
    %v4375 = vmul.f32 %v4311, %v4359
    %v4376 = vmul.f32 %v4312, %v4360
    %v4377 = vmul.f32 %v4313, %v4361
    %v4378 = vmul.f32 %v4314, %v4362
    %v4379 = vpack.c.bf16 %v4367, %v4363
    %v4380 = vpack.c.bf16 %v4368, %v4364
    %v4381 = vpack.c.bf16 %v4369, %v4365
    %v4382 = vpack.c.bf16 %v4370, %v4366
    %v4383 = vpack.c.bf16 %v4375, %v4371
    %v4384 = vpack.c.bf16 %v4376, %v4372
    %v4385 = vpack.c.bf16 %v4377, %v4373
    %v4386 = vpack.c.bf16 %v4378, %v4374
    %v4387 = vld [vmem:[#allocation13] sm:$0xf]
    %v4388 = vld [vmem:[#allocation13 + $0x4] sm:$0xf]
    %v4389 = vld [vmem:[#allocation13 + $0x8] sm:$0xf]
    %v4390 = vld [vmem:[#allocation13 + $0xc] sm:$0xf]
    %v4391 = vld [vmem:[#allocation13 + $0x10] sm:$0xf]
    %v4392 = vld [vmem:[#allocation13 + $0x14] sm:$0xf]
    %v4393 = vld [vmem:[#allocation13 + $0x18] sm:$0xf]
    %v4394 = vld [vmem:[#allocation13 + $0x1c] sm:$0xf]
    %v4395 = vld [vmem:[#allocation13 + $0x20] sm:$0xf]
    %v4396 = vld [vmem:[#allocation13 + $0x24] sm:$0xf]
    %v4397 = vld [vmem:[#allocation13 + $0x28] sm:$0xf]
    %v4398 = vld [vmem:[#allocation13 + $0x2c] sm:$0xf]
    %v4399 = vld [vmem:[#allocation13 + $0x30] sm:$0xf]
    %v4400 = vld [vmem:[#allocation13 + $0x34] sm:$0xf]
    %v4401 = vld [vmem:[#allocation13 + $0x38] sm:$0xf]
    %v4402 = vld [vmem:[#allocation13 + $0x3c] sm:$0xf]
    %v4403 = vld [vmem:[#allocation13 + $0x40] sm:$0xf]
    %v4404 = vld [vmem:[#allocation13 + $0x44] sm:$0xf]
    %v4405 = vld [vmem:[#allocation13 + $0x48] sm:$0xf]
    %v4406 = vld [vmem:[#allocation13 + $0x4c] sm:$0xf]
    %v4407 = vld [vmem:[#allocation13 + $0x50] sm:$0xf]
    %v4408 = vld [vmem:[#allocation13 + $0x54] sm:$0xf]
    %v4409 = vld [vmem:[#allocation13 + $0x58] sm:$0xf]
    %v4410 = vld [vmem:[#allocation13 + $0x5c] sm:$0xf]
    %v4411 = vld [vmem:[#allocation13 + $0x60] sm:$0xf]
    %v4412 = vld [vmem:[#allocation13 + $0x64] sm:$0xf]
    %v4413 = vld [vmem:[#allocation13 + $0x68] sm:$0xf]
    %v4414 = vld [vmem:[#allocation13 + $0x6c] sm:$0xf]
    %v4415 = vld [vmem:[#allocation13 + $0x70] sm:$0xf]
    %v4416 = vld [vmem:[#allocation13 + $0x74] sm:$0xf]
    %v4417 = vld [vmem:[#allocation13 + $0x78] sm:$0xf]
    %v4418 = vld [vmem:[#allocation13 + $0x7c] sm:$0xf]
    %v4419 = vld [vmem:[#allocation13 + $0x80] sm:$0xf]
    %v4420 = vld [vmem:[#allocation13 + $0x84] sm:$0xf]
    %v4421 = vld [vmem:[#allocation13 + $0x88] sm:$0xf]
    %v4422 = vld [vmem:[#allocation13 + $0x8c] sm:$0xf]
    %v4423 = vld [vmem:[#allocation13 + $0x90] sm:$0xf]
    %v4424 = vld [vmem:[#allocation13 + $0x94] sm:$0xf]
    %v4425 = vld [vmem:[#allocation13 + $0x98] sm:$0xf]
    %v4426 = vld [vmem:[#allocation13 + $0x9c] sm:$0xf]
    %v4427 = vld [vmem:[#allocation13 + $0xa0] sm:$0xf]
    %v4428 = vld [vmem:[#allocation13 + $0xa4] sm:$0xf]
    %v4429 = vld [vmem:[#allocation13 + $0xa8] sm:$0xf]
    %v4430 = vld [vmem:[#allocation13 + $0xac] sm:$0xf]
    %v4431 = vld [vmem:[#allocation13 + $0xb0] sm:$0xf]
    %v4432 = vld [vmem:[#allocation13 + $0xb4] sm:$0xf]
    %v4433 = vld [vmem:[#allocation13 + $0xb8] sm:$0xf]
    %v4434 = vld [vmem:[#allocation13 + $0xbc] sm:$0xf]
    %v4435 = vld [vmem:[#allocation13 + $0xc0] sm:$0xf]
    %v4436 = vld [vmem:[#allocation13 + $0xc4] sm:$0xf]
    %v4437 = vld [vmem:[#allocation13 + $0xc8] sm:$0xf]
    %v4438 = vld [vmem:[#allocation13 + $0xcc] sm:$0xf]
    %v4439 = vld [vmem:[#allocation13 + $0xd0] sm:$0xf]
    %v4440 = vld [vmem:[#allocation13 + $0xd4] sm:$0xf]
    %v4441 = vld [vmem:[#allocation13 + $0xd8] sm:$0xf]
    %v4442 = vld [vmem:[#allocation13 + $0xdc] sm:$0xf]
    %v4443 = vld [vmem:[#allocation13 + $0xe0] sm:$0xf]
    %v4444 = vld [vmem:[#allocation13 + $0xe4] sm:$0xf]
    %v4445 = vld [vmem:[#allocation13 + $0xe8] sm:$0xf]
    %v4446 = vld [vmem:[#allocation13 + $0xec] sm:$0xf]
    %v4447 = vld [vmem:[#allocation13 + $0xf0] sm:$0xf]
    %v4448 = vld [vmem:[#allocation13 + $0xf4] sm:$0xf]
    %v4449 = vld [vmem:[#allocation13 + $0xf8] sm:$0xf]
    %v4450 = vld [vmem:[#allocation13 + $0xfc] sm:$0xf]
    %v4451 = vld [vmem:[%s12] sm:$0x1]
    %v4453 = vlaneseq
    %v4454 = vshrl.u32 %v4453, 7
    %v4455 = vsub.s32 0, %v4454
    %v4456 = vrot.slane %v4451, %v4455
    %v4522 = vunpack.c.l.b16 %v4387
    %v4523 = vunpack.c.l.b16 %v4388
    %v4524 = vunpack.c.l.b16 %v4389
    %v4525 = vunpack.c.l.b16 %v4390
    %v4526 = vunpack.c.l.b16 %v4391
    %v4527 = vunpack.c.l.b16 %v4392
    %v4528 = vunpack.c.l.b16 %v4393
    %v4529 = vunpack.c.l.b16 %v4394
    %v4530 = vunpack.c.l.b16 %v4395
    %v4531 = vunpack.c.l.b16 %v4396
    %v4532 = vunpack.c.l.b16 %v4397
    %v4533 = vunpack.c.l.b16 %v4398
    %v4534 = vunpack.c.l.b16 %v4399
    %v4535 = vunpack.c.l.b16 %v4400
    %v4536 = vunpack.c.l.b16 %v4401
    %v4537 = vunpack.c.l.b16 %v4402
    %v4538 = vunpack.c.l.b16 %v4403
    %v4539 = vunpack.c.l.b16 %v4404
    %v4540 = vunpack.c.l.b16 %v4405
    %v4541 = vunpack.c.l.b16 %v4406
    %v4542 = vunpack.c.l.b16 %v4407
    %v4543 = vunpack.c.l.b16 %v4408
    %v4544 = vunpack.c.l.b16 %v4409
    %v4545 = vunpack.c.l.b16 %v4410
    %v4546 = vunpack.c.l.b16 %v4411
    %v4547 = vunpack.c.l.b16 %v4412
    %v4548 = vunpack.c.l.b16 %v4413
    %v4549 = vunpack.c.l.b16 %v4414
    %v4550 = vunpack.c.l.b16 %v4415
    %v4551 = vunpack.c.l.b16 %v4416
    %v4552 = vunpack.c.l.b16 %v4417
    %v4553 = vunpack.c.l.b16 %v4418
    %v4554 = vunpack.c.l.b16 %v4419
    %v4555 = vunpack.c.l.b16 %v4420
    %v4556 = vunpack.c.l.b16 %v4421
    %v4557 = vunpack.c.l.b16 %v4422
    %v4558 = vunpack.c.l.b16 %v4423
    %v4559 = vunpack.c.l.b16 %v4424
    %v4560 = vunpack.c.l.b16 %v4425
    %v4561 = vunpack.c.l.b16 %v4426
    %v4562 = vunpack.c.l.b16 %v4427
    %v4563 = vunpack.c.l.b16 %v4428
    %v4564 = vunpack.c.l.b16 %v4429
    %v4565 = vunpack.c.l.b16 %v4430
    %v4566 = vunpack.c.l.b16 %v4431
    %v4567 = vunpack.c.l.b16 %v4432
    %v4568 = vunpack.c.l.b16 %v4433
    %v4569 = vunpack.c.l.b16 %v4434
    %v4570 = vunpack.c.l.b16 %v4435
    %v4571 = vunpack.c.l.b16 %v4436
    %v4572 = vunpack.c.l.b16 %v4437
    %v4573 = vunpack.c.l.b16 %v4438
    %v4574 = vunpack.c.l.b16 %v4439
    %v4575 = vunpack.c.l.b16 %v4440
    %v4576 = vunpack.c.l.b16 %v4441
    %v4577 = vunpack.c.l.b16 %v4442
    %v4578 = vunpack.c.l.b16 %v4443
    %v4579 = vunpack.c.l.b16 %v4444
    %v4580 = vunpack.c.l.b16 %v4445
    %v4581 = vunpack.c.l.b16 %v4446
    %v4582 = vunpack.c.l.b16 %v4447
    %v4583 = vunpack.c.l.b16 %v4448
    %v4584 = vunpack.c.l.b16 %v4449
    %v4585 = vunpack.c.l.b16 %v4450
    %v4586 = vpack.c.b16 %v4523, %v4522
    %v4587 = vpack.c.b16 %v4525, %v4524
    %v4588 = vpack.c.b16 %v4527, %v4526
    %v4589 = vpack.c.b16 %v4529, %v4528
    %v4590 = vpack.c.b16 %v4531, %v4530
    %v4591 = vpack.c.b16 %v4533, %v4532
    %v4592 = vpack.c.b16 %v4535, %v4534
    %v4593 = vpack.c.b16 %v4537, %v4536
    %v4594 = vpack.c.b16 %v4539, %v4538
    %v4595 = vpack.c.b16 %v4541, %v4540
    %v4596 = vpack.c.b16 %v4543, %v4542
    %v4597 = vpack.c.b16 %v4545, %v4544
    %v4598 = vpack.c.b16 %v4547, %v4546
    %v4599 = vpack.c.b16 %v4549, %v4548
    %v4600 = vpack.c.b16 %v4551, %v4550
    %v4601 = vpack.c.b16 %v4553, %v4552
    %v4602 = vpack.c.b16 %v4555, %v4554
    %v4603 = vpack.c.b16 %v4557, %v4556
    %v4604 = vpack.c.b16 %v4559, %v4558
    %v4605 = vpack.c.b16 %v4561, %v4560
    %v4606 = vpack.c.b16 %v4563, %v4562
    %v4607 = vpack.c.b16 %v4565, %v4564
    %v4608 = vpack.c.b16 %v4567, %v4566
    %v4609 = vpack.c.b16 %v4569, %v4568
    %v4610 = vpack.c.b16 %v4571, %v4570
    %v4611 = vpack.c.b16 %v4573, %v4572
    %v4612 = vpack.c.b16 %v4575, %v4574
    %v4613 = vpack.c.b16 %v4577, %v4576
    %v4614 = vpack.c.b16 %v4579, %v4578
    %v4615 = vpack.c.b16 %v4581, %v4580
    %v4616 = vpack.c.b16 %v4583, %v4582
    %v4617 = vpack.c.b16 %v4585, %v4584
    %4650 = vmatprep.subr.bf16.mxu0 0
    %4651 = vmatpush1.bf16.msra.mxu0 %v4586
    %4652 = vmatprep.subr.bf16.mxu0 0
    %4653 = vmatpush1.bf16.msra.mxu0 %v4587
    %4654 = vmatprep.subr.bf16.mxu0 0
    %4655 = vmatpush1.bf16.msra.mxu0 %v4588
    %4656 = vmatprep.subr.bf16.mxu0 0
    %4657 = vmatpush1.bf16.msra.mxu0 %v4589
    %4658 = vmatprep.subr.bf16.mxu0 0
    %4659 = vmatpush1.bf16.msra.mxu0 %v4590
    %4660 = vmatprep.subr.bf16.mxu0 0
    %4661 = vmatpush1.bf16.msra.mxu0 %v4591
    %4662 = vmatprep.subr.bf16.mxu0 0
    %4663 = vmatpush1.bf16.msra.mxu0 %v4592
    %4664 = vmatprep.subr.bf16.mxu0 0
    %4665 = vmatpush1.bf16.msra.mxu0 %v4593
    %4666 = vmatprep.subr.bf16.mxu0 0
    %4667 = vmatpush1.bf16.msra.mxu0 %v4594
    %4668 = vmatprep.subr.bf16.mxu0 0
    %4669 = vmatpush1.bf16.msra.mxu0 %v4595
    %4670 = vmatprep.subr.bf16.mxu0 0
    %4671 = vmatpush1.bf16.msra.mxu0 %v4596
    %4672 = vmatprep.subr.bf16.mxu0 0
    %4673 = vmatpush1.bf16.msra.mxu0 %v4597
    %4674 = vmatprep.subr.bf16.mxu0 0
    %4675 = vmatpush1.bf16.msra.mxu0 %v4598
    %4676 = vmatprep.subr.bf16.mxu0 0
    %4677 = vmatpush1.bf16.msra.mxu0 %v4599
    %4678 = vmatprep.subr.bf16.mxu0 0
    %4679 = vmatpush1.bf16.msra.mxu0 %v4600
    %4680 = vmatprep.subr.bf16.mxu0 0
    %4681 = vmatpush1.bf16.msra.mxu0 %v4601
    %4682 = vmatprep.mubr.bf16.mxu0 %v4380
    %4683 = vmatmul.mubr.bf16.gmra.mrb[0].mxu0 %v4379
    %v4684 = vpop.f32.mrb[0].mxu0
    %v4685 = vadd.f32 %v4456, %v4684
    %v4686 = vpop.f32.mrb[0].mxu0
    %v4687 = vpop.f32.mrb[0].mxu0
    %v4688 = vadd.f32 %v4456, %v4687
    %v4689 = vpop.f32.mrb[0].mxu0
    %4690 = vmatprep.mubr.bf16.mxu0 %v4384
    %4691 = vmatmul.mubr.bf16.gmra.mrb[0].mxu0 %v4383
    %v4692 = vpop.f32.mrb[0].mxu0
    %v4693 = vadd.f32 %v4456, %v4692
    %v4694 = vpop.f32.mrb[0].mxu0
    %v4695 = vpop.f32.mrb[0].mxu0
    %v4696 = vadd.f32 %v4456, %v4695
    %v4697 = vpop.f32.mrb[0].mxu0
    %4698 = vdwg.mxu0
    %4699 = vmatprep.subr.bf16.mxu0 0
    %4700 = vmatpush1.bf16.msra.mxu0 %v4602
    %4701 = vmatprep.subr.bf16.mxu0 0
    %4702 = vmatpush1.bf16.msra.mxu0 %v4603
    %4703 = vmatprep.subr.bf16.mxu0 0
    %4704 = vmatpush1.bf16.msra.mxu0 %v4604
    %4705 = vmatprep.subr.bf16.mxu0 0
    %4706 = vmatpush1.bf16.msra.mxu0 %v4605
    %4707 = vmatprep.subr.bf16.mxu0 0
    %4708 = vmatpush1.bf16.msra.mxu0 %v4606
    %4709 = vmatprep.subr.bf16.mxu0 0
    %4710 = vmatpush1.bf16.msra.mxu0 %v4607
    %4711 = vmatprep.subr.bf16.mxu0 0
    %4712 = vmatpush1.bf16.msra.mxu0 %v4608
    %4713 = vmatprep.subr.bf16.mxu0 0
    %4714 = vmatpush1.bf16.msra.mxu0 %v4609
    %4715 = vmatprep.subr.bf16.mxu0 0
    %4716 = vmatpush1.bf16.msra.mxu0 %v4610
    %4717 = vmatprep.subr.bf16.mxu0 0
    %4718 = vmatpush1.bf16.msra.mxu0 %v4611
    %4719 = vmatprep.subr.bf16.mxu0 0
    %4720 = vmatpush1.bf16.msra.mxu0 %v4612
    %4721 = vmatprep.subr.bf16.mxu0 0
    %4722 = vmatpush1.bf16.msra.mxu0 %v4613
    %4723 = vmatprep.subr.bf16.mxu0 0
    %4724 = vmatpush1.bf16.msra.mxu0 %v4614
    %4725 = vmatprep.subr.bf16.mxu0 0
    %4726 = vmatpush1.bf16.msra.mxu0 %v4615
    %4727 = vmatprep.subr.bf16.mxu0 0
    %4728 = vmatpush1.bf16.msra.mxu0 %v4616
    %4729 = vmatprep.subr.bf16.mxu0 0
    %4730 = vmatpush1.bf16.msra.mxu0 %v4617
    %4731 = vmatprep.mubr.bf16.mxu0 %v4382
    %4732 = vmatmul.mubr.bf16.gmra.mrb[0].mxu0 %v4381
    %v4733 = vpop.f32.mrb[0].mxu0
    %v4734 = vadd.f32 %v4685, %v4733
    %v4735 = vpop.f32.mrb[0].mxu0
    %v4736 = vpop.f32.mrb[0].mxu0
    %v4737 = vadd.f32 %v4688, %v4736
    %v4738 = vpop.f32.mrb[0].mxu0
    %4739 = vmatprep.mubr.bf16.mxu0 %v4386
    %4740 = vmatmul.mubr.bf16.gmra.mrb[0].mxu0 %v4385
    %v4741 = vpop.f32.mrb[0].mxu0
    %v4742 = vadd.f32 %v4693, %v4741
    %v4743 = vpop.f32.mrb[0].mxu0
    %v4744 = vpop.f32.mrb[0].mxu0
    %v4745 = vadd.f32 %v4696, %v4744
    %v4746 = vpop.f32.mrb[0].mxu0
    %4747 = vdwg.mxu0
    %v4748 = vadd.f32 %v3907, %v4734
    %v4749 = vadd.f32 %v3908, %v4737
    %v4750 = vadd.f32 %v3909, %v4742
    %v4751 = vadd.f32 %v3910, %v4745
    %4752 = vst [vmem:[#allocation14] sm:$0xff] %v4748
    %4753 = vst [vmem:[#allocation14 + $0x8] sm:$0xff] %v4749
    %4754 = vst [vmem:[#allocation14 + $0x10] sm:$0xff] %v4750
    %4755 = vst [vmem:[#allocation14 + $0x18] sm:$0xff] %v4751
    // Predicated region
    $region82: #{tpu_custom_call.1} parent=1 // pred_check
      _
    $region83: #{tpu_custom_call.1} parent=1 // pred_check_branch
      %4757 = sbr.rel (0) target = $region85
    $region84: #{tpu_custom_call.1} parent=1 // pred_region
      %s4759 = ssub.s32 512, 512
      %4760 = vsyncadd [#allocation4], %s4759
      %s4761 = sshll.u32 [#allocation14], 4
      %s4762 = int_to_ptr.vmem [resolvable:$true] %s4761
      %4767 = dma.vmem_to_hbm [thread:$0]  %s4762, 512, %s13, [#allocation4], 128, 128, 8
    $region85: #{tpu_custom_call.1} parent=1 // pred_fallthru
      _
    // Predicated region
    $region86: #{tpu_custom_call.1} parent=1 // pred_check
      _
    $region87: #{tpu_custom_call.1} parent=1 // pred_check_branch
      %4769 = sbr.rel (0) target = $region89
    $region88: #{tpu_custom_call.1} parent=1 // pred_region
      %4770 = dma.done [#allocation4], 512
    $region89: #{tpu_custom_call.1} parent=1 // pred_fallthru
      _
    %4771 = vsyncpa [#allocation3], 1
    %4772 = vsyncpa [#allocation6], 1
    %4773 = vsyncpa [#allocation9], 1
    %4774 = vsyncpa [#allocation12], 1
    %4775 = vsyncpa [#allocation4], 1

</llo_original>
